<compile_context>
chip_gen: v5e
topology: v5e:2x2
jax: 0.10.0
libtpu: 0.0.40
codegen_flags: <defaults>
</compile_context>

<pallas_src>
import math
import functools
import numpy as np
import jax
import jax.numpy as jnp
from jax import lax
from jax.experimental import pallas as pl
from jax.experimental.pallas import tpu as pltpu

EPS = 1e-6
NEG_INF = -1000000000.0


# ---------------------------------------------------------------------------
# in-kernel helpers
# ---------------------------------------------------------------------------
def _mm_nt(a, b):
    # a @ b.T  (MXU "NT" matmul, no explicit transpose), f32 accumulate
    return lax.dot_general(a, b, (((1,), (1,)), ((), ())),
                           preferred_element_type=jnp.float32)


def _mm_nn(a, b):
    # a @ b, f32 accumulate
    return lax.dot_general(a, b, (((1,), (0,)), ((), ())),
                           preferred_element_type=jnp.float32)


def _layer_norm(x, alpha, bias):
    # torch Norm: alpha * (x - mean) / (std + eps) + bias, std unbiased (ddof=1)
    d = x.shape[-1]
    mu = jnp.mean(x, axis=-1, keepdims=True)
    var = jnp.sum((x - mu) ** 2, axis=-1, keepdims=True) / (d - 1)
    inv = pl.reciprocal(jnp.sqrt(var) + EPS, approx=True)   # EUP slot instead of VALU divide
    return alpha * (x - mu) * inv + bias


def _softmax_last(x):
    m = jnp.max(x, axis=-1, keepdims=True)
    e = jnp.exp(x - m)
    return e * pl.reciprocal(jnp.sum(e, axis=-1, keepdims=True), approx=True)


# ---------------------------------------------------------------------------
# fused transformer kernel: grid = (batch_block, layer)
# ---------------------------------------------------------------------------
def _transformer_kernel(heads,
                        src_ref, pe_ref, tm_ref, dm_ref, mk_ref,
                        n1a_ref, n1b_ref,
                        wqkv_ref, bqkv_ref,
                        mb_ref,
                        wo_ref, bo_ref,
                        n2a_ref, n2b_ref,
                        w1_ref, b1_ref, w2_ref, b2_ref,
                        fna_ref, fnb_ref,
                        o_ref,
                        x_ref, ctx_ref, bt_ref, bd_ref):
    l = pl.program_id(1)
    n_layers = pl.num_programs(1)
    B_t, L, D = src_ref.shape
    dk = D // heads
    rows = B_t * L
    bf16 = jnp.bfloat16

    # ---- once per batch block (layer 0): PE add + hoisted spatio-temporal transcendentals
    @pl.when(l == 0)
    def _():
        x_ref[...] = (src_ref[...] * float(math.sqrt(D)) + pe_ref[...]).reshape(rows, D)
        bt_ref[...] = 1.0 / jnp.log(math.e + tm_ref[...])   # 'yancheng' branch
        bd_ref[...] = 1.0 / jnp.log(math.e + dm_ref[...])

    x = x_ref[...]                         # (rows, D) resident activation (VMEM scratch carrier)

    # layer-specific Linear(2,1) combine weights, read as SMEM scalars
    w_t = mb_ref[l, 0]
    w_d = mb_ref[l, 1]
    b_m = mb_ref[l, 2]

    # ---- sublayer 1: multi-head attention with residual ----------------------------------
    x2 = _layer_norm(x, n1a_ref[0], n1b_ref[0])
    qkv = _mm_nt(x2.astype(bf16), wqkv_ref[0]) + bqkv_ref[0]     # fused Q/K/V -> (rows, 3D) f32

    inv_sqrt_dk = 1.0 / math.sqrt(dk)
    for b in range(B_t):                                         # per batch element: scores/softmax
        all_mat = bt_ref[b] * w_t + bd_ref[b] * w_d + b_m        # (L, L)
        mk = mk_ref[b]                                           # (L, L)
        r0, r1 = b * L, (b + 1) * L
        for h in range(heads):                                   # static unroll (dk tiny)
            c0, c1 = h * dk, (h + 1) * dk
            q_h = qkv[r0:r1, c0:c1].astype(bf16)
            k_h = qkv[r0:r1, D + c0:D + c1].astype(bf16)
            v_h = qkv[r0:r1, 2 * D + c0:2 * D + c1].astype(bf16)
            s = _mm_nt(q_h, k_h) * inv_sqrt_dk + all_mat         # (L, L)
            s = jnp.where(mk == 0.0, NEG_INF, s)
            p = _softmax_last(s)                                 # attention dropout: identity (eval)
            # write head context at its lane offset; combined Wo matmul happens once below
            ctx_ref[r0:r1, c0:c1] = _mm_nn(p.astype(bf16), v_h)
    x = x + _mm_nt(ctx_ref[...].astype(bf16), wo_ref[0]) + bo_ref[0]   # dropout_1: identity

    # ---- sublayer 2: feed-forward with residual ------------------------------------------
    x2 = _layer_norm(x, n2a_ref[0], n2b_ref[0])
    h1 = jnp.maximum(_mm_nt(x2.astype(bf16), w1_ref[0]) + b1_ref[0], 0.0)   # relu, dropout: id
    x = x + _mm_nt(h1.astype(bf16), w2_ref[0]) + b2_ref[0]                  # dropout_2: identity

    x_ref[...] = x                                              # carrier for next layer

    # ---- final layer: trailing Norm + single HBM writeback --------------------------------
    @pl.when(l == n_layers - 1)
    def _():
        o_ref[...] = _layer_norm(x, fna_ref[...], fnb_ref[...]).reshape(B_t, L, D)


# ---------------------------------------------------------------------------
# wrapper: single pallas_call for the whole forward
# ---------------------------------------------------------------------------
def transformer_forward(src, temporal_mat, dis_mat, mask3d, params, heads, block_b=None):
    B, L, D = src.shape
    lp = params['layers']                 # dict of arrays stacked along a leading layer axis
    n_layers = lp['wqkv'].shape[0]
    pe = params['pe'][:L]                 # (L, D)

    if block_b is None:
        # fold batch into the block, but keep >= 2 batch blocks for the "parallel" axis (v7x TCs)
        block_b = B // 2 if (B >= 4 and B % 2 == 0) else 1
    assert B % block_b == 0

    def per_batch(d2, d3):
        return pl.BlockSpec((block_b, d2, d3), lambda b, l: (b, 0, 0))

    def per_layer(arr):
        return pl.BlockSpec((1,) + arr.shape[1:],
                            lambda b, l: (l,) + (0,) * (arr.ndim - 1))

    def broadcast(arr):
        return pl.BlockSpec(arr.shape, lambda b, l: (0,) * arr.ndim)

    in_specs = [
        per_batch(L, D),                                   # src
        broadcast(pe),                                     # positional encoding table slice
        per_batch(L, L),                                   # temporal_mat
        per_batch(L, L),                                   # dis_mat
        per_batch(L, L),                                   # mask3d
        per_layer(lp['n1_a']), per_layer(lp['n1_b']),
        per_layer(lp['wqkv']), per_layer(lp['bqkv']),
        pl.BlockSpec(memory_space=pltpu.MemorySpace.SMEM), # mat_bias [w_t, w_d, b] scalars
        per_layer(lp['wo']), per_layer(lp['bo']),
        per_layer(lp['n2_a']), per_layer(lp['n2_b']),
        per_layer(lp['w1']), per_layer(lp['b1']),
        per_layer(lp['w2']), per_layer(lp['b2']),
        broadcast(params['norm_a']), broadcast(params['norm_b']),
    ]
    # output block index constant along the layer axis; written only at the last layer
    out_spec = pl.BlockSpec((block_b, L, D), lambda b, l: (b, 0, 0))

    kernel = functools.partial(_transformer_kernel, heads)
    return pl.pallas_call(
        kernel,
        out_shape=jax.ShapeDtypeStruct((B, L, D), jnp.float32),
        grid_spec=pltpu.PrefetchScalarGridSpec(
            num_scalar_prefetch=0,
            grid=(B // block_b, n_layers),
            in_specs=in_specs,
            out_specs=out_spec,
            scratch_shapes=[
                pltpu.VMEM((block_b * L, D), jnp.float32),   # resident activation carrier
                pltpu.VMEM((block_b * L, D), jnp.float32),   # per-layer head-context slab
                pltpu.VMEM((block_b, L, L), jnp.float32),    # hoisted 1/log(e+temporal)
                pltpu.VMEM((block_b, L, L), jnp.float32),    # hoisted 1/log(e+dis)
            ]),
        compiler_params=pltpu.CompilerParams(
            dimension_semantics=("parallel", "arbitrary"),
            vmem_limit_bytes=32 * 1024 * 1024),
    )(src, pe, temporal_mat, dis_mat, mask3d,
      lp['n1_a'], lp['n1_b'], lp['wqkv'], lp['bqkv'], lp['mb'],
      lp['wo'], lp['bo'], lp['n2_a'], lp['n2_b'],
      lp['w1'], lp['b1'], lp['w2'], lp['b2'],
      params['norm_a'], params['norm_b'])


# ---------------------------------------------------------------------------
# deterministic parameter init + PE table (weights stacked per layer, matmul weights in bf16)
# ---------------------------------------------------------------------------
def make_pe(max_seq_len, d_model):
    pe = np.zeros((max_seq_len, d_model), dtype=np.float32)
    for pos in range(max_seq_len):
        for i in range(0, d_model, 2):
            pe[pos, i] = math.sin(pos / 10000 ** (2 * i / d_model))
            pe[pos, i + 1] = math.cos(pos / 10000 ** (2 * (i + 1) / d_model))
    return jnp.asarray(pe)


def init_params(key, d_model, n_layers, d_ff=512, max_seq_len=150):
    def dense(kw, kb, out_d, in_d):
        w = jax.random.normal(kw, (out_d, in_d), jnp.float32) * 0.1
        b = jax.random.normal(kb, (1, out_d), jnp.float32) * 0.05
        return w, b

    keys = jax.random.split(key, n_layers)
    per_layer = []
    for i in range(n_layers):
        ks = jax.random.split(keys[i], 16)
        wq, bq = dense(ks[0], ks[1], d_model, d_model)
        wk, bk = dense(ks[2], ks[3], d_model, d_model)
        wv, bv = dense(ks[4], ks[5], d_model, d_model)
        wo, bo = dense(ks[6], ks[7], d_model, d_model)
        w1, b1 = dense(ks[8], ks[9], d_ff, d_model)
        w2, b2 = dense(ks[10], ks[11], d_model, d_ff)
        mb_w = jax.random.normal(ks[12], (2,), jnp.float32) * 0.1
        mb_b = jax.random.normal(ks[13], (1,), jnp.float32) * 0.05
        per_layer.append(dict(
            wqkv=jnp.concatenate([wq, wk, wv], axis=0).astype(jnp.bfloat16),   # (3D, D) fused
            bqkv=jnp.concatenate([bq, bk, bv], axis=1),                        # (1, 3D) f32
            wo=wo.astype(jnp.bfloat16), bo=bo,
            w1=w1.astype(jnp.bfloat16), b1=b1,
            w2=w2.astype(jnp.bfloat16), b2=b2,
            mb=jnp.concatenate([mb_w, mb_b]),                                  # (3,) f32 -> SMEM
            n1_a=jnp.ones((1, d_model), jnp.float32),
            n1_b=jnp.zeros((1, d_model), jnp.float32),
            n2_a=jnp.ones((1, d_model), jnp.float32),
            n2_b=jnp.zeros((1, d_model), jnp.float32)))
    stacked = {k: jnp.stack([p[k] for p in per_layer], axis=0) for k in per_layer[0]}
    return {'pe': make_pe(max_seq_len, d_model),
            'layers': stacked,
            'norm_a': jnp.ones((1, d_model), jnp.float32),
            'norm_b': jnp.zeros((1, d_model), jnp.float32)}


# ---------------------------------------------------------------------------
# pure-JAX reference (eval-mode semantics of the PyTorch module)
# ---------------------------------------------------------------------------
def ref_forward(src, tmat, dmat, mask, params, heads):
    B, L, D = src.shape
    dk = D // heads
    lp = params['layers']
    n_layers = lp['wqkv'].shape[0]

    def norm(x, a, b):
        mu = x.mean(-1, keepdims=True)
        var = ((x - mu) ** 2).sum(-1, keepdims=True) / (D - 1)
        return a * (x - mu) / (jnp.sqrt(var) + EPS) + b

    x = src * math.sqrt(D) + params['pe'][:L][None]
    bt = 1.0 / jnp.log(math.e + tmat)
    bd = 1.0 / jnp.log(math.e + dmat)
    for i in range(n_layers):
        wqkv = lp['wqkv'][i].astype(jnp.float32)
        wo = lp['wo'][i].astype(jnp.float32)
        w1 = lp['w1'][i].astype(jnp.float32)
        w2 = lp['w2'][i].astype(jnp.float32)
        x2 = norm(x, lp['n1_a'][i], lp['n1_b'][i])
        qkv = x2 @ wqkv.T + lp['bqkv'][i]
        q, k, v = qkv[..., :D], qkv[..., D:2 * D], qkv[..., 2 * D:]
        q = q.reshape(B, L, heads, dk).transpose(0, 2, 1, 3)
        k = k.reshape(B, L, heads, dk).transpose(0, 2, 1, 3)
        v = v.reshape(B, L, heads, dk).transpose(0, 2, 1, 3)
        s = jnp.einsum('bhld,bhmd->bhlm', q, k) / math.sqrt(dk)
        allm = bt * lp['mb'][i, 0] + bd * lp['mb'][i, 1] + lp['mb'][i, 2]
        s = s + allm[:, None]
        s = jnp.where(mask[:, None] == 0.0, NEG_INF, s)
        attn = jax.nn.softmax(s, axis=-1)
        ctx = jnp.einsum('bhlm,bhmd->bhld', attn, v)
        ctx = ctx.transpose(0, 2, 1, 3).reshape(B, L, D)
        x = x + (ctx @ wo.T + lp['bo'][i])
        x2 = norm(x, lp['n2_a'][i], lp['n2_b'][i])
        h1 = jax.nn.relu(x2 @ w1.T + lp['b1'][i])
        x = x + (h1 @ w2.T + lp['b2'][i])
    return norm(x, params['norm_a'], params['norm_b'])


# ---------------------------------------------------------------------------
if __name__ == "__main__":
    B, L, D, HEADS, N_LAYERS = 4, 8, 32, 8, 2

    key = jax.random.PRNGKey(0)
    k1, k2, k3, kp = jax.random.split(key, 4)
    src = jax.random.normal(k1, (B, L, D), jnp.float32)
    temporal_mat = jax.random.uniform(k2, (B, L, L), jnp.float32, 0.0, 10.0)
    dis_mat = jax.random.uniform(k3, (B, L, L), jnp.float32, 0.0, 5.0)
    mask3d = jnp.tile(jnp.tril(jnp.ones((L, L), jnp.float32))[None], (B, 1, 1))

    params = init_params(kp, D, N_LAYERS)

    out = transformer_forward(src, temporal_mat, dis_mat, mask3d, params, HEADS)
    out = jax.block_until_ready(out)
    assert out.shape == (B, L, D)

    ref = ref_forward(src, temporal_mat, dis_mat, mask3d, params, HEADS)
    np.testing.assert_allclose(np.asarray(out), np.asarray(ref), rtol=5e-2, atol=5e-2)

    print("KERNEL_OK")
</pallas_src>

<mosaic_0001>
module attributes {stable_mosaic.version = 11 : i64} {
  func.func @_transformer_kernel(%arg0: i32, %arg1: i32, %arg2: memref<2x8x32xf32, #tpu.memory_space<vmem>>, %arg3: memref<8x32xf32, #tpu.memory_space<vmem>>, %arg4: memref<2x8x8xf32, #tpu.memory_space<vmem>>, %arg5: memref<2x8x8xf32, #tpu.memory_space<vmem>>, %arg6: memref<2x8x8xf32, #tpu.memory_space<vmem>>, %arg7: memref<1x1x32xf32, #tpu.memory_space<vmem>>, %arg8: memref<1x1x32xf32, #tpu.memory_space<vmem>>, %arg9: memref<1x96x32xbf16, #tpu.memory_space<vmem>>, %arg10: memref<1x1x96xf32, #tpu.memory_space<vmem>>, %arg11: memref<2x3xf32, #tpu.memory_space<smem>>, %arg12: memref<1x32x32xbf16, #tpu.memory_space<vmem>>, %arg13: memref<1x1x32xf32, #tpu.memory_space<vmem>>, %arg14: memref<1x1x32xf32, #tpu.memory_space<vmem>>, %arg15: memref<1x1x32xf32, #tpu.memory_space<vmem>>, %arg16: memref<1x512x32xbf16, #tpu.memory_space<vmem>>, %arg17: memref<1x1x512xf32, #tpu.memory_space<vmem>>, %arg18: memref<1x32x512xbf16, #tpu.memory_space<vmem>>, %arg19: memref<1x1x32xf32, #tpu.memory_space<vmem>>, %arg20: memref<1x32xf32, #tpu.memory_space<vmem>>, %arg21: memref<1x32xf32, #tpu.memory_space<vmem>>, %arg22: memref<2x8x32xf32, #tpu.memory_space<vmem>>, %arg23: memref<16x32xf32, #tpu.memory_space<vmem>>, %arg24: memref<16x32xf32, #tpu.memory_space<vmem>>, %arg25: memref<2x8x8xf32, #tpu.memory_space<vmem>>, %arg26: memref<2x8x8xf32, #tpu.memory_space<vmem>>) attributes {dimension_semantics = [#tpu.dimension_semantics<parallel>, #tpu.dimension_semantics<arbitrary>], iteration_bounds = array<i64: 2, 2>, scalar_prefetch = 0 : i64, scratch_operands = 4 : i64, tpu.core_type = #tpu.core_type<tc>, window_params = [{transform_indices = @transform_0, window_bounds = array<i64: 2, 8, 32>}, {pipeline_mode = #tpu.pipeline_mode<synchronous>, transform_indices = @transform_1, window_bounds = array<i64: 8, 32>}, {transform_indices = @transform_2, window_bounds = array<i64: 2, 8, 8>}, {transform_indices = @transform_3, window_bounds = array<i64: 2, 8, 8>}, {transform_indices = @transform_4, window_bounds = array<i64: 2, 8, 8>}, {transform_indices = @transform_5, window_bounds = array<i64: 1, 1, 32>}, {transform_indices = @transform_6, window_bounds = array<i64: 1, 1, 32>}, {transform_indices = @transform_7, window_bounds = array<i64: 1, 96, 32>}, {transform_indices = @transform_8, window_bounds = array<i64: 1, 1, 96>}, {transform_indices = @transform_9, window_bounds = array<i64: 2, 3>}, {transform_indices = @transform_10, window_bounds = array<i64: 1, 32, 32>}, {transform_indices = @transform_11, window_bounds = array<i64: 1, 1, 32>}, {transform_indices = @transform_12, window_bounds = array<i64: 1, 1, 32>}, {transform_indices = @transform_13, window_bounds = array<i64: 1, 1, 32>}, {transform_indices = @transform_14, window_bounds = array<i64: 1, 512, 32>}, {transform_indices = @transform_15, window_bounds = array<i64: 1, 1, 512>}, {transform_indices = @transform_16, window_bounds = array<i64: 1, 32, 512>}, {transform_indices = @transform_17, window_bounds = array<i64: 1, 1, 32>}, {pipeline_mode = #tpu.pipeline_mode<synchronous>, transform_indices = @transform_18, window_bounds = array<i64: 1, 32>}, {pipeline_mode = #tpu.pipeline_mode<synchronous>, transform_indices = @transform_19, window_bounds = array<i64: 1, 32>}, {transform_indices = @transform_20, window_bounds = array<i64: 2, 8, 32>}]} {
    %c0_i32 = arith.constant 0 : i32
    %0 = arith.cmpi eq, %arg1, %c0_i32 : i32
    %1 = arith.extui %0 : i1 to i32
    %c0_i32_0 = arith.constant 0 : i32
    %2 = arith.cmpi ne, %1, %c0_i32_0 : i32
    scf.if %2 {
      %c0_213 = arith.constant 0 : index
      %c0_214 = arith.constant 0 : index
      %c0_215 = arith.constant 0 : index
      %563 = vector.load %arg2[%c0_213, %c0_214, %c0_215] : memref<2x8x32xf32, #tpu.memory_space<vmem>>, vector<2x8x32xf32>
      %cst_216 = arith.constant 5.65685415 : f32
      %564 = vector.broadcast %cst_216 : f32 to vector<2x8x32xf32>
      %565 = arith.mulf %563, %564 : vector<2x8x32xf32>
      %c0_217 = arith.constant 0 : index
      %c0_218 = arith.constant 0 : index
      %566 = vector.load %arg3[%c0_217, %c0_218] : memref<8x32xf32, #tpu.memory_space<vmem>>, vector<8x32xf32>
      %567 = vector.shape_cast %566 : vector<8x32xf32> to vector<1x8x32xf32>
      %568 = vector.broadcast %567 : vector<1x8x32xf32> to vector<2x8x32xf32>
      %569 = arith.addf %565, %568 : vector<2x8x32xf32>
      %570 = vector.shape_cast %569 : vector<2x8x32xf32> to vector<16x32xf32>
      %c0_219 = arith.constant 0 : index
      %c0_220 = arith.constant 0 : index
      %571 = vector.load %arg23[%c0_219, %c0_220] : memref<16x32xf32, #tpu.memory_space<vmem>>, vector<16x32xf32>
      tpu.vector_store %arg23[%c0_219, %c0_220], %570 {strides = array<i32>} : memref<16x32xf32, #tpu.memory_space<vmem>>, vector<16x32xf32>,
      %c0_221 = arith.constant 0 : index
      %c0_222 = arith.constant 0 : index
      %c0_223 = arith.constant 0 : index
      %572 = vector.load %arg4[%c0_221, %c0_222, %c0_223] : memref<2x8x8xf32, #tpu.memory_space<vmem>>, vector<2x8x8xf32>
      %cst_224 = arith.constant 2.71828175 : f32
      %573 = vector.broadcast %cst_224 : f32 to vector<2x8x8xf32>
      %574 = arith.addf %573, %572 : vector<2x8x8xf32>
      %575 = math.log %574 : vector<2x8x8xf32>
      %cst_225 = arith.constant 1.000000e+00 : f32
      %576 = vector.broadcast %cst_225 : f32 to vector<2x8x8xf32>
      %577 = arith.divf %576, %575 : vector<2x8x8xf32>
      %c0_226 = arith.constant 0 : index
      %c0_227 = arith.constant 0 : index
      %c0_228 = arith.constant 0 : index
      %578 = vector.load %arg25[%c0_226, %c0_227, %c0_228] : memref<2x8x8xf32, #tpu.memory_space<vmem>>, vector<2x8x8xf32>
      tpu.vector_store %arg25[%c0_226, %c0_227, %c0_228], %577 {strides = array<i32>} : memref<2x8x8xf32, #tpu.memory_space<vmem>>, vector<2x8x8xf32>,
      %c0_229 = arith.constant 0 : index
      %c0_230 = arith.constant 0 : index
      %c0_231 = arith.constant 0 : index
      %579 = vector.load %arg5[%c0_229, %c0_230, %c0_231] : memref<2x8x8xf32, #tpu.memory_space<vmem>>, vector<2x8x8xf32>
      %cst_232 = arith.constant 2.71828175 : f32
      %580 = vector.broadcast %cst_232 : f32 to vector<2x8x8xf32>
      %581 = arith.addf %580, %579 : vector<2x8x8xf32>
      %582 = math.log %581 : vector<2x8x8xf32>
      %cst_233 = arith.constant 1.000000e+00 : f32
      %583 = vector.broadcast %cst_233 : f32 to vector<2x8x8xf32>
      %584 = arith.divf %583, %582 : vector<2x8x8xf32>
      %c0_234 = arith.constant 0 : index
      %c0_235 = arith.constant 0 : index
      %c0_236 = arith.constant 0 : index
      %585 = vector.load %arg26[%c0_234, %c0_235, %c0_236] : memref<2x8x8xf32, #tpu.memory_space<vmem>>, vector<2x8x8xf32>
      tpu.vector_store %arg26[%c0_234, %c0_235, %c0_236], %584 {strides = array<i32>} : memref<2x8x8xf32, #tpu.memory_space<vmem>>, vector<2x8x8xf32>,
    } else {
    }
    %c0 = arith.constant 0 : index
    %c0_1 = arith.constant 0 : index
    %3 = vector.load %arg23[%c0, %c0_1] : memref<16x32xf32, #tpu.memory_space<vmem>>, vector<16x32xf32>
    %4 = arith.index_cast %arg1 : i32 to index
    %c0_2 = arith.constant 0 : index
    %5 = memref.load %arg11[%4, %c0_2] : memref<2x3xf32, #tpu.memory_space<smem>>
    %6 = arith.index_cast %arg1 : i32 to index
    %c1 = arith.constant 1 : index
    %7 = memref.load %arg11[%6, %c1] : memref<2x3xf32, #tpu.memory_space<smem>>
    %8 = arith.index_cast %arg1 : i32 to index
    %c2 = arith.constant 2 : index
    %9 = memref.load %arg11[%8, %c2] : memref<2x3xf32, #tpu.memory_space<smem>>
    %c0_3 = arith.constant 0 : index
    %c0_4 = arith.constant 0 : index
    %c0_5 = arith.constant 0 : index
    %10 = vector.load %arg7[%c0_3, %c0_4, %c0_5] : memref<1x1x32xf32, #tpu.memory_space<vmem>>, vector<1x1x32xf32>
    %11 = vector.shape_cast %10 : vector<1x1x32xf32> to vector<1x32xf32>
    %c0_6 = arith.constant 0 : index
    %c0_7 = arith.constant 0 : index
    %c0_8 = arith.constant 0 : index
    %12 = vector.load %arg8[%c0_6, %c0_7, %c0_8] : memref<1x1x32xf32, #tpu.memory_space<vmem>>, vector<1x1x32xf32>
    %13 = vector.shape_cast %12 : vector<1x1x32xf32> to vector<1x32xf32>
    %cst = arith.constant dense<0.000000e+00> : vector<16xf32>
    %14 = vector.multi_reduction <add>, %3, %cst [1] : vector<16x32xf32> to vector<16xf32>
    %15 = vector.shape_cast %14 : vector<16xf32> to vector<16x1xf32>
    %cst_9 = arith.constant 3.200000e+01 : f32
    %16 = vector.broadcast %cst_9 : f32 to vector<16x1xf32>
    %17 = arith.divf %15, %16 : vector<16x1xf32>
    %18 = vector.broadcast %17 : vector<16x1xf32> to vector<16x32xf32>
    %19 = arith.subf %3, %18 : vector<16x32xf32>
    %20 = arith.mulf %19, %19 : vector<16x32xf32>
    %cst_10 = arith.constant dense<0.000000e+00> : vector<16xf32>
    %21 = vector.multi_reduction <add>, %20, %cst_10 [1] : vector<16x32xf32> to vector<16xf32>
    %22 = vector.shape_cast %21 : vector<16xf32> to vector<16x1xf32>
    %cst_11 = arith.constant 3.100000e+01 : f32
    %23 = vector.broadcast %cst_11 : f32 to vector<16x1xf32>
    %24 = arith.divf %22, %23 : vector<16x1xf32>
    %25 = math.sqrt %24 : vector<16x1xf32>
    %cst_12 = arith.constant 9.99999997E-7 : f32
    %26 = vector.broadcast %cst_12 : f32 to vector<16x1xf32>
    %27 = arith.addf %25, %26 : vector<16x1xf32>
    %28 = tpu.reciprocal %27 {approx = true} : vector<16x1xf32> -> vector<16x1xf32>
    %29 = vector.broadcast %17 : vector<16x1xf32> to vector<16x32xf32>
    %30 = arith.subf %3, %29 : vector<16x32xf32>
    %31 = vector.broadcast %11 : vector<1x32xf32> to vector<16x32xf32>
    %32 = arith.mulf %31, %30 : vector<16x32xf32>
    %33 = vector.broadcast %28 : vector<16x1xf32> to vector<16x32xf32>
    %34 = arith.mulf %32, %33 : vector<16x32xf32>
    %35 = vector.broadcast %13 : vector<1x32xf32> to vector<16x32xf32>
    %36 = arith.addf %34, %35 : vector<16x32xf32>
    %37 = arith.truncf %36 : vector<16x32xf32> to vector<16x32xbf16>
    %c0_13 = arith.constant 0 : index
    %c0_14 = arith.constant 0 : index
    %c0_15 = arith.constant 0 : index
    %38 = vector.load %arg9[%c0_13, %c0_14, %c0_15] : memref<1x96x32xbf16, #tpu.memory_space<vmem>>, vector<1x96x32xbf16>
    %39 = vector.shape_cast %38 : vector<1x96x32xbf16> to vector<96x32xbf16>
    %cst_16 = arith.constant dense<0.000000e+00> : vector<16x96xf32>
    %40 = tpu.matmul %37, %39, %cst_16 {dimension_numbers = #tpu.dot_dimension_numbers<[1], [1], [0], [0], [0, 0, 1, 0], [], []>} : vector<16x32xbf16>, vector<96x32xbf16>, vector<16x96xf32> -> vector<16x96xf32>
    %c0_17 = arith.constant 0 : index
    %c0_18 = arith.constant 0 : index
    %c0_19 = arith.constant 0 : index
    %41 = vector.load %arg10[%c0_17, %c0_18, %c0_19] : memref<1x1x96xf32, #tpu.memory_space<vmem>>, vector<1x1x96xf32>
    %42 = vector.shape_cast %41 : vector<1x1x96xf32> to vector<1x96xf32>
    %43 = vector.broadcast %42 : vector<1x96xf32> to vector<16x96xf32>
    %44 = arith.addf %40, %43 : vector<16x96xf32>
    %c0_20 = arith.constant 0 : index
    %c0_21 = arith.constant 0 : index
    %c0_22 = arith.constant 0 : index
    %45 = vector.load %arg25[%c0_20, %c0_21, %c0_22] : memref<2x8x8xf32, #tpu.memory_space<vmem>>, vector<1x8x8xf32>
    %46 = vector.shape_cast %45 : vector<1x8x8xf32> to vector<8x8xf32>
    %47 = vector.broadcast %5 : f32 to vector<8x8xf32>
    %48 = arith.mulf %46, %47 : vector<8x8xf32>
    %c0_23 = arith.constant 0 : index
    %c0_24 = arith.constant 0 : index
    %c0_25 = arith.constant 0 : index
    %49 = vector.load %arg26[%c0_23, %c0_24, %c0_25] : memref<2x8x8xf32, #tpu.memory_space<vmem>>, vector<1x8x8xf32>
    %50 = vector.shape_cast %49 : vector<1x8x8xf32> to vector<8x8xf32>
    %51 = vector.broadcast %7 : f32 to vector<8x8xf32>
    %52 = arith.mulf %50, %51 : vector<8x8xf32>
    %53 = arith.addf %48, %52 : vector<8x8xf32>
    %54 = vector.broadcast %9 : f32 to vector<8x8xf32>
    %55 = arith.addf %53, %54 : vector<8x8xf32>
    %c0_26 = arith.constant 0 : index
    %c0_27 = arith.constant 0 : index
    %c0_28 = arith.constant 0 : index
    %56 = vector.load %arg6[%c0_26, %c0_27, %c0_28] : memref<2x8x8xf32, #tpu.memory_space<vmem>>, vector<1x8x8xf32>
    %57 = vector.shape_cast %56 : vector<1x8x8xf32> to vector<8x8xf32>
    %58 = vector.extract_strided_slice %44 {offsets = [0, 0], sizes = [8, 4], strides = [1, 1]} : vector<16x96xf32> to vector<8x4xf32>
    %59 = arith.truncf %58 : vector<8x4xf32> to vector<8x4xbf16>
    %60 = vector.extract_strided_slice %44 {offsets = [0, 32], sizes = [8, 4], strides = [1, 1]} : vector<16x96xf32> to vector<8x4xf32>
    %61 = arith.truncf %60 : vector<8x4xf32> to vector<8x4xbf16>
    %62 = vector.extract_strided_slice %44 {offsets = [0, 64], sizes = [8, 4], strides = [1, 1]} : vector<16x96xf32> to vector<8x4xf32>
    %63 = arith.truncf %62 : vector<8x4xf32> to vector<8x4xbf16>
    %cst_29 = arith.constant dense<0.000000e+00> : vector<8x8xf32>
    %64 = tpu.matmul %59, %61, %cst_29 {dimension_numbers = #tpu.dot_dimension_numbers<[1], [1], [0], [0], [0, 0, 1, 0], [], []>} : vector<8x4xbf16>, vector<8x4xbf16>, vector<8x8xf32> -> vector<8x8xf32>
    %cst_30 = arith.constant 5.000000e-01 : f32
    %65 = vector.broadcast %cst_30 : f32 to vector<8x8xf32>
    %66 = arith.mulf %64, %65 : vector<8x8xf32>
    %67 = arith.addf %66, %55 : vector<8x8xf32>
    %cst_31 = arith.constant 0.000000e+00 : f32
    %68 = vector.broadcast %cst_31 : f32 to vector<8x8xf32>
    %69 = arith.cmpf oeq, %57, %68 : vector<8x8xf32>
    %cst_32 = arith.constant -1.000000e+09 : f32
    %70 = vector.broadcast %cst_32 : f32 to vector<8x8xf32>
    %71 = arith.select %69, %70, %67 : vector<8x8xi1>, vector<8x8xf32>
    %cst_33 = arith.constant dense<0xFF800000> : vector<8xf32>
    %72 = vector.multi_reduction <maximumf>, %71, %cst_33 [1] : vector<8x8xf32> to vector<8xf32>
    %73 = vector.shape_cast %72 : vector<8xf32> to vector<8x1xf32>
    %74 = vector.broadcast %73 : vector<8x1xf32> to vector<8x8xf32>
    %75 = arith.subf %71, %74 : vector<8x8xf32>
    %76 = math.exp %75 : vector<8x8xf32>
    %cst_34 = arith.constant dense<0.000000e+00> : vector<8xf32>
    %77 = vector.multi_reduction <add>, %76, %cst_34 [1] : vector<8x8xf32> to vector<8xf32>
    %78 = vector.shape_cast %77 : vector<8xf32> to vector<8x1xf32>
    %79 = tpu.reciprocal %78 {approx = true} : vector<8x1xf32> -> vector<8x1xf32>
    %80 = vector.broadcast %79 : vector<8x1xf32> to vector<8x8xf32>
    %81 = arith.mulf %76, %80 : vector<8x8xf32>
    %82 = arith.truncf %81 : vector<8x8xf32> to vector<8x8xbf16>
    %cst_35 = arith.constant dense<0.000000e+00> : vector<8x4xf32>
    %83 = tpu.matmul %82, %63, %cst_35 {dimension_numbers = #tpu.dot_dimension_numbers<[1], [0], [0], [1], [0, 0, 1, 1], [], []>} : vector<8x8xbf16>, vector<8x4xbf16>, vector<8x4xf32> -> vector<8x4xf32>
    %c0_36 = arith.constant 0 : index
    %c0_37 = arith.constant 0 : index
    %84 = vector.load %arg24[%c0_36, %c0_37] : memref<16x32xf32, #tpu.memory_space<vmem>>, vector<8x4xf32>
    tpu.vector_store %arg24[%c0_36, %c0_37], %83 {strides = array<i32>} : memref<16x32xf32, #tpu.memory_space<vmem>>, vector<8x4xf32>,
    %85 = vector.extract_strided_slice %44 {offsets = [0, 4], sizes = [8, 4], strides = [1, 1]} : vector<16x96xf32> to vector<8x4xf32>
    %86 = arith.truncf %85 : vector<8x4xf32> to vector<8x4xbf16>
    %87 = vector.extract_strided_slice %44 {offsets = [0, 36], sizes = [8, 4], strides = [1, 1]} : vector<16x96xf32> to vector<8x4xf32>
    %88 = arith.truncf %87 : vector<8x4xf32> to vector<8x4xbf16>
    %89 = vector.extract_strided_slice %44 {offsets = [0, 68], sizes = [8, 4], strides = [1, 1]} : vector<16x96xf32> to vector<8x4xf32>
    %90 = arith.truncf %89 : vector<8x4xf32> to vector<8x4xbf16>
    %cst_38 = arith.constant dense<0.000000e+00> : vector<8x8xf32>
    %91 = tpu.matmul %86, %88, %cst_38 {dimension_numbers = #tpu.dot_dimension_numbers<[1], [1], [0], [0], [0, 0, 1, 0], [], []>} : vector<8x4xbf16>, vector<8x4xbf16>, vector<8x8xf32> -> vector<8x8xf32>
    %cst_39 = arith.constant 5.000000e-01 : f32
    %92 = vector.broadcast %cst_39 : f32 to vector<8x8xf32>
    %93 = arith.mulf %91, %92 : vector<8x8xf32>
    %94 = arith.addf %93, %55 : vector<8x8xf32>
    %cst_40 = arith.constant 0.000000e+00 : f32
    %95 = vector.broadcast %cst_40 : f32 to vector<8x8xf32>
    %96 = arith.cmpf oeq, %57, %95 : vector<8x8xf32>
    %cst_41 = arith.constant -1.000000e+09 : f32
    %97 = vector.broadcast %cst_41 : f32 to vector<8x8xf32>
    %98 = arith.select %96, %97, %94 : vector<8x8xi1>, vector<8x8xf32>
    %cst_42 = arith.constant dense<0xFF800000> : vector<8xf32>
    %99 = vector.multi_reduction <maximumf>, %98, %cst_42 [1] : vector<8x8xf32> to vector<8xf32>
    %100 = vector.shape_cast %99 : vector<8xf32> to vector<8x1xf32>
    %101 = vector.broadcast %100 : vector<8x1xf32> to vector<8x8xf32>
    %102 = arith.subf %98, %101 : vector<8x8xf32>
    %103 = math.exp %102 : vector<8x8xf32>
    %cst_43 = arith.constant dense<0.000000e+00> : vector<8xf32>
    %104 = vector.multi_reduction <add>, %103, %cst_43 [1] : vector<8x8xf32> to vector<8xf32>
    %105 = vector.shape_cast %104 : vector<8xf32> to vector<8x1xf32>
    %106 = tpu.reciprocal %105 {approx = true} : vector<8x1xf32> -> vector<8x1xf32>
    %107 = vector.broadcast %106 : vector<8x1xf32> to vector<8x8xf32>
    %108 = arith.mulf %103, %107 : vector<8x8xf32>
    %109 = arith.truncf %108 : vector<8x8xf32> to vector<8x8xbf16>
    %cst_44 = arith.constant dense<0.000000e+00> : vector<8x4xf32>
    %110 = tpu.matmul %109, %90, %cst_44 {dimension_numbers = #tpu.dot_dimension_numbers<[1], [0], [0], [1], [0, 0, 1, 1], [], []>} : vector<8x8xbf16>, vector<8x4xbf16>, vector<8x4xf32> -> vector<8x4xf32>
    %c0_45 = arith.constant 0 : index
    %c4 = arith.constant 4 : index
    %111 = vector.load %arg24[%c0_45, %c4] : memref<16x32xf32, #tpu.memory_space<vmem>>, vector<8x4xf32>
    tpu.vector_store %arg24[%c0_45, %c4], %110 {strides = array<i32>} : memref<16x32xf32, #tpu.memory_space<vmem>>, vector<8x4xf32>,
    %112 = vector.extract_strided_slice %44 {offsets = [0, 8], sizes = [8, 4], strides = [1, 1]} : vector<16x96xf32> to vector<8x4xf32>
    %113 = arith.truncf %112 : vector<8x4xf32> to vector<8x4xbf16>
    %114 = vector.extract_strided_slice %44 {offsets = [0, 40], sizes = [8, 4], strides = [1, 1]} : vector<16x96xf32> to vector<8x4xf32>
    %115 = arith.truncf %114 : vector<8x4xf32> to vector<8x4xbf16>
    %116 = vector.extract_strided_slice %44 {offsets = [0, 72], sizes = [8, 4], strides = [1, 1]} : vector<16x96xf32> to vector<8x4xf32>
    %117 = arith.truncf %116 : vector<8x4xf32> to vector<8x4xbf16>
    %cst_46 = arith.constant dense<0.000000e+00> : vector<8x8xf32>
    %118 = tpu.matmul %113, %115, %cst_46 {dimension_numbers = #tpu.dot_dimension_numbers<[1], [1], [0], [0], [0, 0, 1, 0], [], []>} : vector<8x4xbf16>, vector<8x4xbf16>, vector<8x8xf32> -> vector<8x8xf32>
    %cst_47 = arith.constant 5.000000e-01 : f32
    %119 = vector.broadcast %cst_47 : f32 to vector<8x8xf32>
    %120 = arith.mulf %118, %119 : vector<8x8xf32>
    %121 = arith.addf %120, %55 : vector<8x8xf32>
    %cst_48 = arith.constant 0.000000e+00 : f32
    %122 = vector.broadcast %cst_48 : f32 to vector<8x8xf32>
    %123 = arith.cmpf oeq, %57, %122 : vector<8x8xf32>
    %cst_49 = arith.constant -1.000000e+09 : f32
    %124 = vector.broadcast %cst_49 : f32 to vector<8x8xf32>
    %125 = arith.select %123, %124, %121 : vector<8x8xi1>, vector<8x8xf32>
    %cst_50 = arith.constant dense<0xFF800000> : vector<8xf32>
    %126 = vector.multi_reduction <maximumf>, %125, %cst_50 [1] : vector<8x8xf32> to vector<8xf32>
    %127 = vector.shape_cast %126 : vector<8xf32> to vector<8x1xf32>
    %128 = vector.broadcast %127 : vector<8x1xf32> to vector<8x8xf32>
    %129 = arith.subf %125, %128 : vector<8x8xf32>
    %130 = math.exp %129 : vector<8x8xf32>
    %cst_51 = arith.constant dense<0.000000e+00> : vector<8xf32>
    %131 = vector.multi_reduction <add>, %130, %cst_51 [1] : vector<8x8xf32> to vector<8xf32>
    %132 = vector.shape_cast %131 : vector<8xf32> to vector<8x1xf32>
    %133 = tpu.reciprocal %132 {approx = true} : vector<8x1xf32> -> vector<8x1xf32>
    %134 = vector.broadcast %133 : vector<8x1xf32> to vector<8x8xf32>
    %135 = arith.mulf %130, %134 : vector<8x8xf32>
    %136 = arith.truncf %135 : vector<8x8xf32> to vector<8x8xbf16>
    %cst_52 = arith.constant dense<0.000000e+00> : vector<8x4xf32>
    %137 = tpu.matmul %136, %117, %cst_52 {dimension_numbers = #tpu.dot_dimension_numbers<[1], [0], [0], [1], [0, 0, 1, 1], [], []>} : vector<8x8xbf16>, vector<8x4xbf16>, vector<8x4xf32> -> vector<8x4xf32>
    %c0_53 = arith.constant 0 : index
    %c8 = arith.constant 8 : index
    %138 = vector.load %arg24[%c0_53, %c8] : memref<16x32xf32, #tpu.memory_space<vmem>>, vector<8x4xf32>
    tpu.vector_store %arg24[%c0_53, %c8], %137 {strides = array<i32>} : memref<16x32xf32, #tpu.memory_space<vmem>>, vector<8x4xf32>,
    %139 = vector.extract_strided_slice %44 {offsets = [0, 12], sizes = [8, 4], strides = [1, 1]} : vector<16x96xf32> to vector<8x4xf32>
    %140 = arith.truncf %139 : vector<8x4xf32> to vector<8x4xbf16>
    %141 = vector.extract_strided_slice %44 {offsets = [0, 44], sizes = [8, 4], strides = [1, 1]} : vector<16x96xf32> to vector<8x4xf32>
    %142 = arith.truncf %141 : vector<8x4xf32> to vector<8x4xbf16>
    %143 = vector.extract_strided_slice %44 {offsets = [0, 76], sizes = [8, 4], strides = [1, 1]} : vector<16x96xf32> to vector<8x4xf32>
    %144 = arith.truncf %143 : vector<8x4xf32> to vector<8x4xbf16>
    %cst_54 = arith.constant dense<0.000000e+00> : vector<8x8xf32>
    %145 = tpu.matmul %140, %142, %cst_54 {dimension_numbers = #tpu.dot_dimension_numbers<[1], [1], [0], [0], [0, 0, 1, 0], [], []>} : vector<8x4xbf16>, vector<8x4xbf16>, vector<8x8xf32> -> vector<8x8xf32>
    %cst_55 = arith.constant 5.000000e-01 : f32
    %146 = vector.broadcast %cst_55 : f32 to vector<8x8xf32>
    %147 = arith.mulf %145, %146 : vector<8x8xf32>
    %148 = arith.addf %147, %55 : vector<8x8xf32>
    %cst_56 = arith.constant 0.000000e+00 : f32
    %149 = vector.broadcast %cst_56 : f32 to vector<8x8xf32>
    %150 = arith.cmpf oeq, %57, %149 : vector<8x8xf32>
    %cst_57 = arith.constant -1.000000e+09 : f32
    %151 = vector.broadcast %cst_57 : f32 to vector<8x8xf32>
    %152 = arith.select %150, %151, %148 : vector<8x8xi1>, vector<8x8xf32>
    %cst_58 = arith.constant dense<0xFF800000> : vector<8xf32>
    %153 = vector.multi_reduction <maximumf>, %152, %cst_58 [1] : vector<8x8xf32> to vector<8xf32>
    %154 = vector.shape_cast %153 : vector<8xf32> to vector<8x1xf32>
    %155 = vector.broadcast %154 : vector<8x1xf32> to vector<8x8xf32>
    %156 = arith.subf %152, %155 : vector<8x8xf32>
    %157 = math.exp %156 : vector<8x8xf32>
    %cst_59 = arith.constant dense<0.000000e+00> : vector<8xf32>
    %158 = vector.multi_reduction <add>, %157, %cst_59 [1] : vector<8x8xf32> to vector<8xf32>
    %159 = vector.shape_cast %158 : vector<8xf32> to vector<8x1xf32>
    %160 = tpu.reciprocal %159 {approx = true} : vector<8x1xf32> -> vector<8x1xf32>
    %161 = vector.broadcast %160 : vector<8x1xf32> to vector<8x8xf32>
    %162 = arith.mulf %157, %161 : vector<8x8xf32>
    %163 = arith.truncf %162 : vector<8x8xf32> to vector<8x8xbf16>
    %cst_60 = arith.constant dense<0.000000e+00> : vector<8x4xf32>
    %164 = tpu.matmul %163, %144, %cst_60 {dimension_numbers = #tpu.dot_dimension_numbers<[1], [0], [0], [1], [0, 0, 1, 1], [], []>} : vector<8x8xbf16>, vector<8x4xbf16>, vector<8x4xf32> -> vector<8x4xf32>
    %c0_61 = arith.constant 0 : index
    %c12 = arith.constant 12 : index
    %165 = vector.load %arg24[%c0_61, %c12] : memref<16x32xf32, #tpu.memory_space<vmem>>, vector<8x4xf32>
    tpu.vector_store %arg24[%c0_61, %c12], %164 {strides = array<i32>} : memref<16x32xf32, #tpu.memory_space<vmem>>, vector<8x4xf32>,
    %166 = vector.extract_strided_slice %44 {offsets = [0, 16], sizes = [8, 4], strides = [1, 1]} : vector<16x96xf32> to vector<8x4xf32>
    %167 = arith.truncf %166 : vector<8x4xf32> to vector<8x4xbf16>
    %168 = vector.extract_strided_slice %44 {offsets = [0, 48], sizes = [8, 4], strides = [1, 1]} : vector<16x96xf32> to vector<8x4xf32>
    %169 = arith.truncf %168 : vector<8x4xf32> to vector<8x4xbf16>
    %170 = vector.extract_strided_slice %44 {offsets = [0, 80], sizes = [8, 4], strides = [1, 1]} : vector<16x96xf32> to vector<8x4xf32>
    %171 = arith.truncf %170 : vector<8x4xf32> to vector<8x4xbf16>
    %cst_62 = arith.constant dense<0.000000e+00> : vector<8x8xf32>
    %172 = tpu.matmul %167, %169, %cst_62 {dimension_numbers = #tpu.dot_dimension_numbers<[1], [1], [0], [0], [0, 0, 1, 0], [], []>} : vector<8x4xbf16>, vector<8x4xbf16>, vector<8x8xf32> -> vector<8x8xf32>
    %cst_63 = arith.constant 5.000000e-01 : f32
    %173 = vector.broadcast %cst_63 : f32 to vector<8x8xf32>
    %174 = arith.mulf %172, %173 : vector<8x8xf32>
    %175 = arith.addf %174, %55 : vector<8x8xf32>
    %cst_64 = arith.constant 0.000000e+00 : f32
    %176 = vector.broadcast %cst_64 : f32 to vector<8x8xf32>
    %177 = arith.cmpf oeq, %57, %176 : vector<8x8xf32>
    %cst_65 = arith.constant -1.000000e+09 : f32
    %178 = vector.broadcast %cst_65 : f32 to vector<8x8xf32>
    %179 = arith.select %177, %178, %175 : vector<8x8xi1>, vector<8x8xf32>
    %cst_66 = arith.constant dense<0xFF800000> : vector<8xf32>
    %180 = vector.multi_reduction <maximumf>, %179, %cst_66 [1] : vector<8x8xf32> to vector<8xf32>
    %181 = vector.shape_cast %180 : vector<8xf32> to vector<8x1xf32>
    %182 = vector.broadcast %181 : vector<8x1xf32> to vector<8x8xf32>
    %183 = arith.subf %179, %182 : vector<8x8xf32>
    %184 = math.exp %183 : vector<8x8xf32>
    %cst_67 = arith.constant dense<0.000000e+00> : vector<8xf32>
    %185 = vector.multi_reduction <add>, %184, %cst_67 [1] : vector<8x8xf32> to vector<8xf32>
    %186 = vector.shape_cast %185 : vector<8xf32> to vector<8x1xf32>
    %187 = tpu.reciprocal %186 {approx = true} : vector<8x1xf32> -> vector<8x1xf32>
    %188 = vector.broadcast %187 : vector<8x1xf32> to vector<8x8xf32>
    %189 = arith.mulf %184, %188 : vector<8x8xf32>
    %190 = arith.truncf %189 : vector<8x8xf32> to vector<8x8xbf16>
    %cst_68 = arith.constant dense<0.000000e+00> : vector<8x4xf32>
    %191 = tpu.matmul %190, %171, %cst_68 {dimension_numbers = #tpu.dot_dimension_numbers<[1], [0], [0], [1], [0, 0, 1, 1], [], []>} : vector<8x8xbf16>, vector<8x4xbf16>, vector<8x4xf32> -> vector<8x4xf32>
    %c0_69 = arith.constant 0 : index
    %c16 = arith.constant 16 : index
    %192 = vector.load %arg24[%c0_69, %c16] : memref<16x32xf32, #tpu.memory_space<vmem>>, vector<8x4xf32>
    tpu.vector_store %arg24[%c0_69, %c16], %191 {strides = array<i32>} : memref<16x32xf32, #tpu.memory_space<vmem>>, vector<8x4xf32>,
    %193 = vector.extract_strided_slice %44 {offsets = [0, 20], sizes = [8, 4], strides = [1, 1]} : vector<16x96xf32> to vector<8x4xf32>
    %194 = arith.truncf %193 : vector<8x4xf32> to vector<8x4xbf16>
    %195 = vector.extract_strided_slice %44 {offsets = [0, 52], sizes = [8, 4], strides = [1, 1]} : vector<16x96xf32> to vector<8x4xf32>
    %196 = arith.truncf %195 : vector<8x4xf32> to vector<8x4xbf16>
    %197 = vector.extract_strided_slice %44 {offsets = [0, 84], sizes = [8, 4], strides = [1, 1]} : vector<16x96xf32> to vector<8x4xf32>
    %198 = arith.truncf %197 : vector<8x4xf32> to vector<8x4xbf16>
    %cst_70 = arith.constant dense<0.000000e+00> : vector<8x8xf32>
    %199 = tpu.matmul %194, %196, %cst_70 {dimension_numbers = #tpu.dot_dimension_numbers<[1], [1], [0], [0], [0, 0, 1, 0], [], []>} : vector<8x4xbf16>, vector<8x4xbf16>, vector<8x8xf32> -> vector<8x8xf32>
    %cst_71 = arith.constant 5.000000e-01 : f32
    %200 = vector.broadcast %cst_71 : f32 to vector<8x8xf32>
    %201 = arith.mulf %199, %200 : vector<8x8xf32>
    %202 = arith.addf %201, %55 : vector<8x8xf32>
    %cst_72 = arith.constant 0.000000e+00 : f32
    %203 = vector.broadcast %cst_72 : f32 to vector<8x8xf32>
    %204 = arith.cmpf oeq, %57, %203 : vector<8x8xf32>
    %cst_73 = arith.constant -1.000000e+09 : f32
    %205 = vector.broadcast %cst_73 : f32 to vector<8x8xf32>
    %206 = arith.select %204, %205, %202 : vector<8x8xi1>, vector<8x8xf32>
    %cst_74 = arith.constant dense<0xFF800000> : vector<8xf32>
    %207 = vector.multi_reduction <maximumf>, %206, %cst_74 [1] : vector<8x8xf32> to vector<8xf32>
    %208 = vector.shape_cast %207 : vector<8xf32> to vector<8x1xf32>
    %209 = vector.broadcast %208 : vector<8x1xf32> to vector<8x8xf32>
    %210 = arith.subf %206, %209 : vector<8x8xf32>
    %211 = math.exp %210 : vector<8x8xf32>
    %cst_75 = arith.constant dense<0.000000e+00> : vector<8xf32>
    %212 = vector.multi_reduction <add>, %211, %cst_75 [1] : vector<8x8xf32> to vector<8xf32>
    %213 = vector.shape_cast %212 : vector<8xf32> to vector<8x1xf32>
    %214 = tpu.reciprocal %213 {approx = true} : vector<8x1xf32> -> vector<8x1xf32>
    %215 = vector.broadcast %214 : vector<8x1xf32> to vector<8x8xf32>
    %216 = arith.mulf %211, %215 : vector<8x8xf32>
    %217 = arith.truncf %216 : vector<8x8xf32> to vector<8x8xbf16>
    %cst_76 = arith.constant dense<0.000000e+00> : vector<8x4xf32>
    %218 = tpu.matmul %217, %198, %cst_76 {dimension_numbers = #tpu.dot_dimension_numbers<[1], [0], [0], [1], [0, 0, 1, 1], [], []>} : vector<8x8xbf16>, vector<8x4xbf16>, vector<8x4xf32> -> vector<8x4xf32>
    %c0_77 = arith.constant 0 : index
    %c20 = arith.constant 20 : index
    %219 = vector.load %arg24[%c0_77, %c20] : memref<16x32xf32, #tpu.memory_space<vmem>>, vector<8x4xf32>
    tpu.vector_store %arg24[%c0_77, %c20], %218 {strides = array<i32>} : memref<16x32xf32, #tpu.memory_space<vmem>>, vector<8x4xf32>,
    %220 = vector.extract_strided_slice %44 {offsets = [0, 24], sizes = [8, 4], strides = [1, 1]} : vector<16x96xf32> to vector<8x4xf32>
    %221 = arith.truncf %220 : vector<8x4xf32> to vector<8x4xbf16>
    %222 = vector.extract_strided_slice %44 {offsets = [0, 56], sizes = [8, 4], strides = [1, 1]} : vector<16x96xf32> to vector<8x4xf32>
    %223 = arith.truncf %222 : vector<8x4xf32> to vector<8x4xbf16>
    %224 = vector.extract_strided_slice %44 {offsets = [0, 88], sizes = [8, 4], strides = [1, 1]} : vector<16x96xf32> to vector<8x4xf32>
    %225 = arith.truncf %224 : vector<8x4xf32> to vector<8x4xbf16>
    %cst_78 = arith.constant dense<0.000000e+00> : vector<8x8xf32>
    %226 = tpu.matmul %221, %223, %cst_78 {dimension_numbers = #tpu.dot_dimension_numbers<[1], [1], [0], [0], [0, 0, 1, 0], [], []>} : vector<8x4xbf16>, vector<8x4xbf16>, vector<8x8xf32> -> vector<8x8xf32>
    %cst_79 = arith.constant 5.000000e-01 : f32
    %227 = vector.broadcast %cst_79 : f32 to vector<8x8xf32>
    %228 = arith.mulf %226, %227 : vector<8x8xf32>
    %229 = arith.addf %228, %55 : vector<8x8xf32>
    %cst_80 = arith.constant 0.000000e+00 : f32
    %230 = vector.broadcast %cst_80 : f32 to vector<8x8xf32>
    %231 = arith.cmpf oeq, %57, %230 : vector<8x8xf32>
    %cst_81 = arith.constant -1.000000e+09 : f32
    %232 = vector.broadcast %cst_81 : f32 to vector<8x8xf32>
    %233 = arith.select %231, %232, %229 : vector<8x8xi1>, vector<8x8xf32>
    %cst_82 = arith.constant dense<0xFF800000> : vector<8xf32>
    %234 = vector.multi_reduction <maximumf>, %233, %cst_82 [1] : vector<8x8xf32> to vector<8xf32>
    %235 = vector.shape_cast %234 : vector<8xf32> to vector<8x1xf32>
    %236 = vector.broadcast %235 : vector<8x1xf32> to vector<8x8xf32>
    %237 = arith.subf %233, %236 : vector<8x8xf32>
    %238 = math.exp %237 : vector<8x8xf32>
    %cst_83 = arith.constant dense<0.000000e+00> : vector<8xf32>
    %239 = vector.multi_reduction <add>, %238, %cst_83 [1] : vector<8x8xf32> to vector<8xf32>
    %240 = vector.shape_cast %239 : vector<8xf32> to vector<8x1xf32>
    %241 = tpu.reciprocal %240 {approx = true} : vector<8x1xf32> -> vector<8x1xf32>
    %242 = vector.broadcast %241 : vector<8x1xf32> to vector<8x8xf32>
    %243 = arith.mulf %238, %242 : vector<8x8xf32>
    %244 = arith.truncf %243 : vector<8x8xf32> to vector<8x8xbf16>
    %cst_84 = arith.constant dense<0.000000e+00> : vector<8x4xf32>
    %245 = tpu.matmul %244, %225, %cst_84 {dimension_numbers = #tpu.dot_dimension_numbers<[1], [0], [0], [1], [0, 0, 1, 1], [], []>} : vector<8x8xbf16>, vector<8x4xbf16>, vector<8x4xf32> -> vector<8x4xf32>
    %c0_85 = arith.constant 0 : index
    %c24 = arith.constant 24 : index
    %246 = vector.load %arg24[%c0_85, %c24] : memref<16x32xf32, #tpu.memory_space<vmem>>, vector<8x4xf32>
    tpu.vector_store %arg24[%c0_85, %c24], %245 {strides = array<i32>} : memref<16x32xf32, #tpu.memory_space<vmem>>, vector<8x4xf32>,
    %247 = vector.extract_strided_slice %44 {offsets = [0, 28], sizes = [8, 4], strides = [1, 1]} : vector<16x96xf32> to vector<8x4xf32>
    %248 = arith.truncf %247 : vector<8x4xf32> to vector<8x4xbf16>
    %249 = vector.extract_strided_slice %44 {offsets = [0, 60], sizes = [8, 4], strides = [1, 1]} : vector<16x96xf32> to vector<8x4xf32>
    %250 = arith.truncf %249 : vector<8x4xf32> to vector<8x4xbf16>
    %251 = vector.extract_strided_slice %44 {offsets = [0, 92], sizes = [8, 4], strides = [1, 1]} : vector<16x96xf32> to vector<8x4xf32>
    %252 = arith.truncf %251 : vector<8x4xf32> to vector<8x4xbf16>
    %cst_86 = arith.constant dense<0.000000e+00> : vector<8x8xf32>
    %253 = tpu.matmul %248, %250, %cst_86 {dimension_numbers = #tpu.dot_dimension_numbers<[1], [1], [0], [0], [0, 0, 1, 0], [], []>} : vector<8x4xbf16>, vector<8x4xbf16>, vector<8x8xf32> -> vector<8x8xf32>
    %cst_87 = arith.constant 5.000000e-01 : f32
    %254 = vector.broadcast %cst_87 : f32 to vector<8x8xf32>
    %255 = arith.mulf %253, %254 : vector<8x8xf32>
    %256 = arith.addf %255, %55 : vector<8x8xf32>
    %cst_88 = arith.constant 0.000000e+00 : f32
    %257 = vector.broadcast %cst_88 : f32 to vector<8x8xf32>
    %258 = arith.cmpf oeq, %57, %257 : vector<8x8xf32>
    %cst_89 = arith.constant -1.000000e+09 : f32
    %259 = vector.broadcast %cst_89 : f32 to vector<8x8xf32>
    %260 = arith.select %258, %259, %256 : vector<8x8xi1>, vector<8x8xf32>
    %cst_90 = arith.constant dense<0xFF800000> : vector<8xf32>
    %261 = vector.multi_reduction <maximumf>, %260, %cst_90 [1] : vector<8x8xf32> to vector<8xf32>
    %262 = vector.shape_cast %261 : vector<8xf32> to vector<8x1xf32>
    %263 = vector.broadcast %262 : vector<8x1xf32> to vector<8x8xf32>
    %264 = arith.subf %260, %263 : vector<8x8xf32>
    %265 = math.exp %264 : vector<8x8xf32>
    %cst_91 = arith.constant dense<0.000000e+00> : vector<8xf32>
    %266 = vector.multi_reduction <add>, %265, %cst_91 [1] : vector<8x8xf32> to vector<8xf32>
    %267 = vector.shape_cast %266 : vector<8xf32> to vector<8x1xf32>
    %268 = tpu.reciprocal %267 {approx = true} : vector<8x1xf32> -> vector<8x1xf32>
    %269 = vector.broadcast %268 : vector<8x1xf32> to vector<8x8xf32>
    %270 = arith.mulf %265, %269 : vector<8x8xf32>
    %271 = arith.truncf %270 : vector<8x8xf32> to vector<8x8xbf16>
    %cst_92 = arith.constant dense<0.000000e+00> : vector<8x4xf32>
    %272 = tpu.matmul %271, %252, %cst_92 {dimension_numbers = #tpu.dot_dimension_numbers<[1], [0], [0], [1], [0, 0, 1, 1], [], []>} : vector<8x8xbf16>, vector<8x4xbf16>, vector<8x4xf32> -> vector<8x4xf32>
    %c0_93 = arith.constant 0 : index
    %c28 = arith.constant 28 : index
    %273 = vector.load %arg24[%c0_93, %c28] : memref<16x32xf32, #tpu.memory_space<vmem>>, vector<8x4xf32>
    tpu.vector_store %arg24[%c0_93, %c28], %272 {strides = array<i32>} : memref<16x32xf32, #tpu.memory_space<vmem>>, vector<8x4xf32>,
    %c1_94 = arith.constant 1 : index
    %c0_95 = arith.constant 0 : index
    %c0_96 = arith.constant 0 : index
    %274 = vector.load %arg25[%c1_94, %c0_95, %c0_96] : memref<2x8x8xf32, #tpu.memory_space<vmem>>, vector<1x8x8xf32>
    %275 = vector.shape_cast %274 : vector<1x8x8xf32> to vector<8x8xf32>
    %276 = vector.broadcast %5 : f32 to vector<8x8xf32>
    %277 = arith.mulf %275, %276 : vector<8x8xf32>
    %c1_97 = arith.constant 1 : index
    %c0_98 = arith.constant 0 : index
    %c0_99 = arith.constant 0 : index
    %278 = vector.load %arg26[%c1_97, %c0_98, %c0_99] : memref<2x8x8xf32, #tpu.memory_space<vmem>>, vector<1x8x8xf32>
    %279 = vector.shape_cast %278 : vector<1x8x8xf32> to vector<8x8xf32>
    %280 = vector.broadcast %7 : f32 to vector<8x8xf32>
    %281 = arith.mulf %279, %280 : vector<8x8xf32>
    %282 = arith.addf %277, %281 : vector<8x8xf32>
    %283 = vector.broadcast %9 : f32 to vector<8x8xf32>
    %284 = arith.addf %282, %283 : vector<8x8xf32>
    %c1_100 = arith.constant 1 : index
    %c0_101 = arith.constant 0 : index
    %c0_102 = arith.constant 0 : index
    %285 = vector.load %arg6[%c1_100, %c0_101, %c0_102] : memref<2x8x8xf32, #tpu.memory_space<vmem>>, vector<1x8x8xf32>
    %286 = vector.shape_cast %285 : vector<1x8x8xf32> to vector<8x8xf32>
    %287 = vector.extract_strided_slice %44 {offsets = [8, 0], sizes = [8, 4], strides = [1, 1]} : vector<16x96xf32> to vector<8x4xf32>
    %288 = arith.truncf %287 : vector<8x4xf32> to vector<8x4xbf16>
    %289 = vector.extract_strided_slice %44 {offsets = [8, 32], sizes = [8, 4], strides = [1, 1]} : vector<16x96xf32> to vector<8x4xf32>
    %290 = arith.truncf %289 : vector<8x4xf32> to vector<8x4xbf16>
    %291 = vector.extract_strided_slice %44 {offsets = [8, 64], sizes = [8, 4], strides = [1, 1]} : vector<16x96xf32> to vector<8x4xf32>
    %292 = arith.truncf %291 : vector<8x4xf32> to vector<8x4xbf16>
    %cst_103 = arith.constant dense<0.000000e+00> : vector<8x8xf32>
    %293 = tpu.matmul %288, %290, %cst_103 {dimension_numbers = #tpu.dot_dimension_numbers<[1], [1], [0], [0], [0, 0, 1, 0], [], []>} : vector<8x4xbf16>, vector<8x4xbf16>, vector<8x8xf32> -> vector<8x8xf32>
    %cst_104 = arith.constant 5.000000e-01 : f32
    %294 = vector.broadcast %cst_104 : f32 to vector<8x8xf32>
    %295 = arith.mulf %293, %294 : vector<8x8xf32>
    %296 = arith.addf %295, %284 : vector<8x8xf32>
    %cst_105 = arith.constant 0.000000e+00 : f32
    %297 = vector.broadcast %cst_105 : f32 to vector<8x8xf32>
    %298 = arith.cmpf oeq, %286, %297 : vector<8x8xf32>
    %cst_106 = arith.constant -1.000000e+09 : f32
    %299 = vector.broadcast %cst_106 : f32 to vector<8x8xf32>
    %300 = arith.select %298, %299, %296 : vector<8x8xi1>, vector<8x8xf32>
    %cst_107 = arith.constant dense<0xFF800000> : vector<8xf32>
    %301 = vector.multi_reduction <maximumf>, %300, %cst_107 [1] : vector<8x8xf32> to vector<8xf32>
    %302 = vector.shape_cast %301 : vector<8xf32> to vector<8x1xf32>
    %303 = vector.broadcast %302 : vector<8x1xf32> to vector<8x8xf32>
    %304 = arith.subf %300, %303 : vector<8x8xf32>
    %305 = math.exp %304 : vector<8x8xf32>
    %cst_108 = arith.constant dense<0.000000e+00> : vector<8xf32>
    %306 = vector.multi_reduction <add>, %305, %cst_108 [1] : vector<8x8xf32> to vector<8xf32>
    %307 = vector.shape_cast %306 : vector<8xf32> to vector<8x1xf32>
    %308 = tpu.reciprocal %307 {approx = true} : vector<8x1xf32> -> vector<8x1xf32>
    %309 = vector.broadcast %308 : vector<8x1xf32> to vector<8x8xf32>
    %310 = arith.mulf %305, %309 : vector<8x8xf32>
    %311 = arith.truncf %310 : vector<8x8xf32> to vector<8x8xbf16>
    %cst_109 = arith.constant dense<0.000000e+00> : vector<8x4xf32>
    %312 = tpu.matmul %311, %292, %cst_109 {dimension_numbers = #tpu.dot_dimension_numbers<[1], [0], [0], [1], [0, 0, 1, 1], [], []>} : vector<8x8xbf16>, vector<8x4xbf16>, vector<8x4xf32> -> vector<8x4xf32>
    %c8_110 = arith.constant 8 : index
    %c0_111 = arith.constant 0 : index
    %313 = vector.load %arg24[%c8_110, %c0_111] : memref<16x32xf32, #tpu.memory_space<vmem>>, vector<8x4xf32>
    tpu.vector_store %arg24[%c8_110, %c0_111], %312 {strides = array<i32>} : memref<16x32xf32, #tpu.memory_space<vmem>>, vector<8x4xf32>,
    %314 = vector.extract_strided_slice %44 {offsets = [8, 4], sizes = [8, 4], strides = [1, 1]} : vector<16x96xf32> to vector<8x4xf32>
    %315 = arith.truncf %314 : vector<8x4xf32> to vector<8x4xbf16>
    %316 = vector.extract_strided_slice %44 {offsets = [8, 36], sizes = [8, 4], strides = [1, 1]} : vector<16x96xf32> to vector<8x4xf32>
    %317 = arith.truncf %316 : vector<8x4xf32> to vector<8x4xbf16>
    %318 = vector.extract_strided_slice %44 {offsets = [8, 68], sizes = [8, 4], strides = [1, 1]} : vector<16x96xf32> to vector<8x4xf32>
    %319 = arith.truncf %318 : vector<8x4xf32> to vector<8x4xbf16>
    %cst_112 = arith.constant dense<0.000000e+00> : vector<8x8xf32>
    %320 = tpu.matmul %315, %317, %cst_112 {dimension_numbers = #tpu.dot_dimension_numbers<[1], [1], [0], [0], [0, 0, 1, 0], [], []>} : vector<8x4xbf16>, vector<8x4xbf16>, vector<8x8xf32> -> vector<8x8xf32>
    %cst_113 = arith.constant 5.000000e-01 : f32
    %321 = vector.broadcast %cst_113 : f32 to vector<8x8xf32>
    %322 = arith.mulf %320, %321 : vector<8x8xf32>
    %323 = arith.addf %322, %284 : vector<8x8xf32>
    %cst_114 = arith.constant 0.000000e+00 : f32
    %324 = vector.broadcast %cst_114 : f32 to vector<8x8xf32>
    %325 = arith.cmpf oeq, %286, %324 : vector<8x8xf32>
    %cst_115 = arith.constant -1.000000e+09 : f32
    %326 = vector.broadcast %cst_115 : f32 to vector<8x8xf32>
    %327 = arith.select %325, %326, %323 : vector<8x8xi1>, vector<8x8xf32>
    %cst_116 = arith.constant dense<0xFF800000> : vector<8xf32>
    %328 = vector.multi_reduction <maximumf>, %327, %cst_116 [1] : vector<8x8xf32> to vector<8xf32>
    %329 = vector.shape_cast %328 : vector<8xf32> to vector<8x1xf32>
    %330 = vector.broadcast %329 : vector<8x1xf32> to vector<8x8xf32>
    %331 = arith.subf %327, %330 : vector<8x8xf32>
    %332 = math.exp %331 : vector<8x8xf32>
    %cst_117 = arith.constant dense<0.000000e+00> : vector<8xf32>
    %333 = vector.multi_reduction <add>, %332, %cst_117 [1] : vector<8x8xf32> to vector<8xf32>
    %334 = vector.shape_cast %333 : vector<8xf32> to vector<8x1xf32>
    %335 = tpu.reciprocal %334 {approx = true} : vector<8x1xf32> -> vector<8x1xf32>
    %336 = vector.broadcast %335 : vector<8x1xf32> to vector<8x8xf32>
    %337 = arith.mulf %332, %336 : vector<8x8xf32>
    %338 = arith.truncf %337 : vector<8x8xf32> to vector<8x8xbf16>
    %cst_118 = arith.constant dense<0.000000e+00> : vector<8x4xf32>
    %339 = tpu.matmul %338, %319, %cst_118 {dimension_numbers = #tpu.dot_dimension_numbers<[1], [0], [0], [1], [0, 0, 1, 1], [], []>} : vector<8x8xbf16>, vector<8x4xbf16>, vector<8x4xf32> -> vector<8x4xf32>
    %c8_119 = arith.constant 8 : index
    %c4_120 = arith.constant 4 : index
    %340 = vector.load %arg24[%c8_119, %c4_120] : memref<16x32xf32, #tpu.memory_space<vmem>>, vector<8x4xf32>
    tpu.vector_store %arg24[%c8_119, %c4_120], %339 {strides = array<i32>} : memref<16x32xf32, #tpu.memory_space<vmem>>, vector<8x4xf32>,
    %341 = vector.extract_strided_slice %44 {offsets = [8, 8], sizes = [8, 4], strides = [1, 1]} : vector<16x96xf32> to vector<8x4xf32>
    %342 = arith.truncf %341 : vector<8x4xf32> to vector<8x4xbf16>
    %343 = vector.extract_strided_slice %44 {offsets = [8, 40], sizes = [8, 4], strides = [1, 1]} : vector<16x96xf32> to vector<8x4xf32>
    %344 = arith.truncf %343 : vector<8x4xf32> to vector<8x4xbf16>
    %345 = vector.extract_strided_slice %44 {offsets = [8, 72], sizes = [8, 4], strides = [1, 1]} : vector<16x96xf32> to vector<8x4xf32>
    %346 = arith.truncf %345 : vector<8x4xf32> to vector<8x4xbf16>
    %cst_121 = arith.constant dense<0.000000e+00> : vector<8x8xf32>
    %347 = tpu.matmul %342, %344, %cst_121 {dimension_numbers = #tpu.dot_dimension_numbers<[1], [1], [0], [0], [0, 0, 1, 0], [], []>} : vector<8x4xbf16>, vector<8x4xbf16>, vector<8x8xf32> -> vector<8x8xf32>
    %cst_122 = arith.constant 5.000000e-01 : f32
    %348 = vector.broadcast %cst_122 : f32 to vector<8x8xf32>
    %349 = arith.mulf %347, %348 : vector<8x8xf32>
    %350 = arith.addf %349, %284 : vector<8x8xf32>
    %cst_123 = arith.constant 0.000000e+00 : f32
    %351 = vector.broadcast %cst_123 : f32 to vector<8x8xf32>
    %352 = arith.cmpf oeq, %286, %351 : vector<8x8xf32>
    %cst_124 = arith.constant -1.000000e+09 : f32
    %353 = vector.broadcast %cst_124 : f32 to vector<8x8xf32>
    %354 = arith.select %352, %353, %350 : vector<8x8xi1>, vector<8x8xf32>
    %cst_125 = arith.constant dense<0xFF800000> : vector<8xf32>
    %355 = vector.multi_reduction <maximumf>, %354, %cst_125 [1] : vector<8x8xf32> to vector<8xf32>
    %356 = vector.shape_cast %355 : vector<8xf32> to vector<8x1xf32>
    %357 = vector.broadcast %356 : vector<8x1xf32> to vector<8x8xf32>
    %358 = arith.subf %354, %357 : vector<8x8xf32>
    %359 = math.exp %358 : vector<8x8xf32>
    %cst_126 = arith.constant dense<0.000000e+00> : vector<8xf32>
    %360 = vector.multi_reduction <add>, %359, %cst_126 [1] : vector<8x8xf32> to vector<8xf32>
    %361 = vector.shape_cast %360 : vector<8xf32> to vector<8x1xf32>
    %362 = tpu.reciprocal %361 {approx = true} : vector<8x1xf32> -> vector<8x1xf32>
    %363 = vector.broadcast %362 : vector<8x1xf32> to vector<8x8xf32>
    %364 = arith.mulf %359, %363 : vector<8x8xf32>
    %365 = arith.truncf %364 : vector<8x8xf32> to vector<8x8xbf16>
    %cst_127 = arith.constant dense<0.000000e+00> : vector<8x4xf32>
    %366 = tpu.matmul %365, %346, %cst_127 {dimension_numbers = #tpu.dot_dimension_numbers<[1], [0], [0], [1], [0, 0, 1, 1], [], []>} : vector<8x8xbf16>, vector<8x4xbf16>, vector<8x4xf32> -> vector<8x4xf32>
    %c8_128 = arith.constant 8 : index
    %c8_129 = arith.constant 8 : index
    %367 = vector.load %arg24[%c8_128, %c8_129] : memref<16x32xf32, #tpu.memory_space<vmem>>, vector<8x4xf32>
    tpu.vector_store %arg24[%c8_128, %c8_129], %366 {strides = array<i32>} : memref<16x32xf32, #tpu.memory_space<vmem>>, vector<8x4xf32>,
    %368 = vector.extract_strided_slice %44 {offsets = [8, 12], sizes = [8, 4], strides = [1, 1]} : vector<16x96xf32> to vector<8x4xf32>
    %369 = arith.truncf %368 : vector<8x4xf32> to vector<8x4xbf16>
    %370 = vector.extract_strided_slice %44 {offsets = [8, 44], sizes = [8, 4], strides = [1, 1]} : vector<16x96xf32> to vector<8x4xf32>
    %371 = arith.truncf %370 : vector<8x4xf32> to vector<8x4xbf16>
    %372 = vector.extract_strided_slice %44 {offsets = [8, 76], sizes = [8, 4], strides = [1, 1]} : vector<16x96xf32> to vector<8x4xf32>
    %373 = arith.truncf %372 : vector<8x4xf32> to vector<8x4xbf16>
    %cst_130 = arith.constant dense<0.000000e+00> : vector<8x8xf32>
    %374 = tpu.matmul %369, %371, %cst_130 {dimension_numbers = #tpu.dot_dimension_numbers<[1], [1], [0], [0], [0, 0, 1, 0], [], []>} : vector<8x4xbf16>, vector<8x4xbf16>, vector<8x8xf32> -> vector<8x8xf32>
    %cst_131 = arith.constant 5.000000e-01 : f32
    %375 = vector.broadcast %cst_131 : f32 to vector<8x8xf32>
    %376 = arith.mulf %374, %375 : vector<8x8xf32>
    %377 = arith.addf %376, %284 : vector<8x8xf32>
    %cst_132 = arith.constant 0.000000e+00 : f32
    %378 = vector.broadcast %cst_132 : f32 to vector<8x8xf32>
    %379 = arith.cmpf oeq, %286, %378 : vector<8x8xf32>
    %cst_133 = arith.constant -1.000000e+09 : f32
    %380 = vector.broadcast %cst_133 : f32 to vector<8x8xf32>
    %381 = arith.select %379, %380, %377 : vector<8x8xi1>, vector<8x8xf32>
    %cst_134 = arith.constant dense<0xFF800000> : vector<8xf32>
    %382 = vector.multi_reduction <maximumf>, %381, %cst_134 [1] : vector<8x8xf32> to vector<8xf32>
    %383 = vector.shape_cast %382 : vector<8xf32> to vector<8x1xf32>
    %384 = vector.broadcast %383 : vector<8x1xf32> to vector<8x8xf32>
    %385 = arith.subf %381, %384 : vector<8x8xf32>
    %386 = math.exp %385 : vector<8x8xf32>
    %cst_135 = arith.constant dense<0.000000e+00> : vector<8xf32>
    %387 = vector.multi_reduction <add>, %386, %cst_135 [1] : vector<8x8xf32> to vector<8xf32>
    %388 = vector.shape_cast %387 : vector<8xf32> to vector<8x1xf32>
    %389 = tpu.reciprocal %388 {approx = true} : vector<8x1xf32> -> vector<8x1xf32>
    %390 = vector.broadcast %389 : vector<8x1xf32> to vector<8x8xf32>
    %391 = arith.mulf %386, %390 : vector<8x8xf32>
    %392 = arith.truncf %391 : vector<8x8xf32> to vector<8x8xbf16>
    %cst_136 = arith.constant dense<0.000000e+00> : vector<8x4xf32>
    %393 = tpu.matmul %392, %373, %cst_136 {dimension_numbers = #tpu.dot_dimension_numbers<[1], [0], [0], [1], [0, 0, 1, 1], [], []>} : vector<8x8xbf16>, vector<8x4xbf16>, vector<8x4xf32> -> vector<8x4xf32>
    %c8_137 = arith.constant 8 : index
    %c12_138 = arith.constant 12 : index
    %394 = vector.load %arg24[%c8_137, %c12_138] : memref<16x32xf32, #tpu.memory_space<vmem>>, vector<8x4xf32>
    tpu.vector_store %arg24[%c8_137, %c12_138], %393 {strides = array<i32>} : memref<16x32xf32, #tpu.memory_space<vmem>>, vector<8x4xf32>,
    %395 = vector.extract_strided_slice %44 {offsets = [8, 16], sizes = [8, 4], strides = [1, 1]} : vector<16x96xf32> to vector<8x4xf32>
    %396 = arith.truncf %395 : vector<8x4xf32> to vector<8x4xbf16>
    %397 = vector.extract_strided_slice %44 {offsets = [8, 48], sizes = [8, 4], strides = [1, 1]} : vector<16x96xf32> to vector<8x4xf32>
    %398 = arith.truncf %397 : vector<8x4xf32> to vector<8x4xbf16>
    %399 = vector.extract_strided_slice %44 {offsets = [8, 80], sizes = [8, 4], strides = [1, 1]} : vector<16x96xf32> to vector<8x4xf32>
    %400 = arith.truncf %399 : vector<8x4xf32> to vector<8x4xbf16>
    %cst_139 = arith.constant dense<0.000000e+00> : vector<8x8xf32>
    %401 = tpu.matmul %396, %398, %cst_139 {dimension_numbers = #tpu.dot_dimension_numbers<[1], [1], [0], [0], [0, 0, 1, 0], [], []>} : vector<8x4xbf16>, vector<8x4xbf16>, vector<8x8xf32> -> vector<8x8xf32>
    %cst_140 = arith.constant 5.000000e-01 : f32
    %402 = vector.broadcast %cst_140 : f32 to vector<8x8xf32>
    %403 = arith.mulf %401, %402 : vector<8x8xf32>
    %404 = arith.addf %403, %284 : vector<8x8xf32>
    %cst_141 = arith.constant 0.000000e+00 : f32
    %405 = vector.broadcast %cst_141 : f32 to vector<8x8xf32>
    %406 = arith.cmpf oeq, %286, %405 : vector<8x8xf32>
    %cst_142 = arith.constant -1.000000e+09 : f32
    %407 = vector.broadcast %cst_142 : f32 to vector<8x8xf32>
    %408 = arith.select %406, %407, %404 : vector<8x8xi1>, vector<8x8xf32>
    %cst_143 = arith.constant dense<0xFF800000> : vector<8xf32>
    %409 = vector.multi_reduction <maximumf>, %408, %cst_143 [1] : vector<8x8xf32> to vector<8xf32>
    %410 = vector.shape_cast %409 : vector<8xf32> to vector<8x1xf32>
    %411 = vector.broadcast %410 : vector<8x1xf32> to vector<8x8xf32>
    %412 = arith.subf %408, %411 : vector<8x8xf32>
    %413 = math.exp %412 : vector<8x8xf32>
    %cst_144 = arith.constant dense<0.000000e+00> : vector<8xf32>
    %414 = vector.multi_reduction <add>, %413, %cst_144 [1] : vector<8x8xf32> to vector<8xf32>
    %415 = vector.shape_cast %414 : vector<8xf32> to vector<8x1xf32>
    %416 = tpu.reciprocal %415 {approx = true} : vector<8x1xf32> -> vector<8x1xf32>
    %417 = vector.broadcast %416 : vector<8x1xf32> to vector<8x8xf32>
    %418 = arith.mulf %413, %417 : vector<8x8xf32>
    %419 = arith.truncf %418 : vector<8x8xf32> to vector<8x8xbf16>
    %cst_145 = arith.constant dense<0.000000e+00> : vector<8x4xf32>
    %420 = tpu.matmul %419, %400, %cst_145 {dimension_numbers = #tpu.dot_dimension_numbers<[1], [0], [0], [1], [0, 0, 1, 1], [], []>} : vector<8x8xbf16>, vector<8x4xbf16>, vector<8x4xf32> -> vector<8x4xf32>
    %c8_146 = arith.constant 8 : index
    %c16_147 = arith.constant 16 : index
    %421 = vector.load %arg24[%c8_146, %c16_147] : memref<16x32xf32, #tpu.memory_space<vmem>>, vector<8x4xf32>
    tpu.vector_store %arg24[%c8_146, %c16_147], %420 {strides = array<i32>} : memref<16x32xf32, #tpu.memory_space<vmem>>, vector<8x4xf32>,
    %422 = vector.extract_strided_slice %44 {offsets = [8, 20], sizes = [8, 4], strides = [1, 1]} : vector<16x96xf32> to vector<8x4xf32>
    %423 = arith.truncf %422 : vector<8x4xf32> to vector<8x4xbf16>
    %424 = vector.extract_strided_slice %44 {offsets = [8, 52], sizes = [8, 4], strides = [1, 1]} : vector<16x96xf32> to vector<8x4xf32>
    %425 = arith.truncf %424 : vector<8x4xf32> to vector<8x4xbf16>
    %426 = vector.extract_strided_slice %44 {offsets = [8, 84], sizes = [8, 4], strides = [1, 1]} : vector<16x96xf32> to vector<8x4xf32>
    %427 = arith.truncf %426 : vector<8x4xf32> to vector<8x4xbf16>
    %cst_148 = arith.constant dense<0.000000e+00> : vector<8x8xf32>
    %428 = tpu.matmul %423, %425, %cst_148 {dimension_numbers = #tpu.dot_dimension_numbers<[1], [1], [0], [0], [0, 0, 1, 0], [], []>} : vector<8x4xbf16>, vector<8x4xbf16>, vector<8x8xf32> -> vector<8x8xf32>
    %cst_149 = arith.constant 5.000000e-01 : f32
    %429 = vector.broadcast %cst_149 : f32 to vector<8x8xf32>
    %430 = arith.mulf %428, %429 : vector<8x8xf32>
    %431 = arith.addf %430, %284 : vector<8x8xf32>
    %cst_150 = arith.constant 0.000000e+00 : f32
    %432 = vector.broadcast %cst_150 : f32 to vector<8x8xf32>
    %433 = arith.cmpf oeq, %286, %432 : vector<8x8xf32>
    %cst_151 = arith.constant -1.000000e+09 : f32
    %434 = vector.broadcast %cst_151 : f32 to vector<8x8xf32>
    %435 = arith.select %433, %434, %431 : vector<8x8xi1>, vector<8x8xf32>
    %cst_152 = arith.constant dense<0xFF800000> : vector<8xf32>
    %436 = vector.multi_reduction <maximumf>, %435, %cst_152 [1] : vector<8x8xf32> to vector<8xf32>
    %437 = vector.shape_cast %436 : vector<8xf32> to vector<8x1xf32>
    %438 = vector.broadcast %437 : vector<8x1xf32> to vector<8x8xf32>
    %439 = arith.subf %435, %438 : vector<8x8xf32>
    %440 = math.exp %439 : vector<8x8xf32>
    %cst_153 = arith.constant dense<0.000000e+00> : vector<8xf32>
    %441 = vector.multi_reduction <add>, %440, %cst_153 [1] : vector<8x8xf32> to vector<8xf32>
    %442 = vector.shape_cast %441 : vector<8xf32> to vector<8x1xf32>
    %443 = tpu.reciprocal %442 {approx = true} : vector<8x1xf32> -> vector<8x1xf32>
    %444 = vector.broadcast %443 : vector<8x1xf32> to vector<8x8xf32>
    %445 = arith.mulf %440, %444 : vector<8x8xf32>
    %446 = arith.truncf %445 : vector<8x8xf32> to vector<8x8xbf16>
    %cst_154 = arith.constant dense<0.000000e+00> : vector<8x4xf32>
    %447 = tpu.matmul %446, %427, %cst_154 {dimension_numbers = #tpu.dot_dimension_numbers<[1], [0], [0], [1], [0, 0, 1, 1], [], []>} : vector<8x8xbf16>, vector<8x4xbf16>, vector<8x4xf32> -> vector<8x4xf32>
    %c8_155 = arith.constant 8 : index
    %c20_156 = arith.constant 20 : index
    %448 = vector.load %arg24[%c8_155, %c20_156] : memref<16x32xf32, #tpu.memory_space<vmem>>, vector<8x4xf32>
    tpu.vector_store %arg24[%c8_155, %c20_156], %447 {strides = array<i32>} : memref<16x32xf32, #tpu.memory_space<vmem>>, vector<8x4xf32>,
    %449 = vector.extract_strided_slice %44 {offsets = [8, 24], sizes = [8, 4], strides = [1, 1]} : vector<16x96xf32> to vector<8x4xf32>
    %450 = arith.truncf %449 : vector<8x4xf32> to vector<8x4xbf16>
    %451 = vector.extract_strided_slice %44 {offsets = [8, 56], sizes = [8, 4], strides = [1, 1]} : vector<16x96xf32> to vector<8x4xf32>
    %452 = arith.truncf %451 : vector<8x4xf32> to vector<8x4xbf16>
    %453 = vector.extract_strided_slice %44 {offsets = [8, 88], sizes = [8, 4], strides = [1, 1]} : vector<16x96xf32> to vector<8x4xf32>
    %454 = arith.truncf %453 : vector<8x4xf32> to vector<8x4xbf16>
    %cst_157 = arith.constant dense<0.000000e+00> : vector<8x8xf32>
    %455 = tpu.matmul %450, %452, %cst_157 {dimension_numbers = #tpu.dot_dimension_numbers<[1], [1], [0], [0], [0, 0, 1, 0], [], []>} : vector<8x4xbf16>, vector<8x4xbf16>, vector<8x8xf32> -> vector<8x8xf32>
    %cst_158 = arith.constant 5.000000e-01 : f32
    %456 = vector.broadcast %cst_158 : f32 to vector<8x8xf32>
    %457 = arith.mulf %455, %456 : vector<8x8xf32>
    %458 = arith.addf %457, %284 : vector<8x8xf32>
    %cst_159 = arith.constant 0.000000e+00 : f32
    %459 = vector.broadcast %cst_159 : f32 to vector<8x8xf32>
    %460 = arith.cmpf oeq, %286, %459 : vector<8x8xf32>
    %cst_160 = arith.constant -1.000000e+09 : f32
    %461 = vector.broadcast %cst_160 : f32 to vector<8x8xf32>
    %462 = arith.select %460, %461, %458 : vector<8x8xi1>, vector<8x8xf32>
    %cst_161 = arith.constant dense<0xFF800000> : vector<8xf32>
    %463 = vector.multi_reduction <maximumf>, %462, %cst_161 [1] : vector<8x8xf32> to vector<8xf32>
    %464 = vector.shape_cast %463 : vector<8xf32> to vector<8x1xf32>
    %465 = vector.broadcast %464 : vector<8x1xf32> to vector<8x8xf32>
    %466 = arith.subf %462, %465 : vector<8x8xf32>
    %467 = math.exp %466 : vector<8x8xf32>
    %cst_162 = arith.constant dense<0.000000e+00> : vector<8xf32>
    %468 = vector.multi_reduction <add>, %467, %cst_162 [1] : vector<8x8xf32> to vector<8xf32>
    %469 = vector.shape_cast %468 : vector<8xf32> to vector<8x1xf32>
    %470 = tpu.reciprocal %469 {approx = true} : vector<8x1xf32> -> vector<8x1xf32>
    %471 = vector.broadcast %470 : vector<8x1xf32> to vector<8x8xf32>
    %472 = arith.mulf %467, %471 : vector<8x8xf32>
    %473 = arith.truncf %472 : vector<8x8xf32> to vector<8x8xbf16>
    %cst_163 = arith.constant dense<0.000000e+00> : vector<8x4xf32>
    %474 = tpu.matmul %473, %454, %cst_163 {dimension_numbers = #tpu.dot_dimension_numbers<[1], [0], [0], [1], [0, 0, 1, 1], [], []>} : vector<8x8xbf16>, vector<8x4xbf16>, vector<8x4xf32> -> vector<8x4xf32>
    %c8_164 = arith.constant 8 : index
    %c24_165 = arith.constant 24 : index
    %475 = vector.load %arg24[%c8_164, %c24_165] : memref<16x32xf32, #tpu.memory_space<vmem>>, vector<8x4xf32>
    tpu.vector_store %arg24[%c8_164, %c24_165], %474 {strides = array<i32>} : memref<16x32xf32, #tpu.memory_space<vmem>>, vector<8x4xf32>,
    %476 = vector.extract_strided_slice %44 {offsets = [8, 28], sizes = [8, 4], strides = [1, 1]} : vector<16x96xf32> to vector<8x4xf32>
    %477 = arith.truncf %476 : vector<8x4xf32> to vector<8x4xbf16>
    %478 = vector.extract_strided_slice %44 {offsets = [8, 60], sizes = [8, 4], strides = [1, 1]} : vector<16x96xf32> to vector<8x4xf32>
    %479 = arith.truncf %478 : vector<8x4xf32> to vector<8x4xbf16>
    %480 = vector.extract_strided_slice %44 {offsets = [8, 92], sizes = [8, 4], strides = [1, 1]} : vector<16x96xf32> to vector<8x4xf32>
    %481 = arith.truncf %480 : vector<8x4xf32> to vector<8x4xbf16>
    %cst_166 = arith.constant dense<0.000000e+00> : vector<8x8xf32>
    %482 = tpu.matmul %477, %479, %cst_166 {dimension_numbers = #tpu.dot_dimension_numbers<[1], [1], [0], [0], [0, 0, 1, 0], [], []>} : vector<8x4xbf16>, vector<8x4xbf16>, vector<8x8xf32> -> vector<8x8xf32>
    %cst_167 = arith.constant 5.000000e-01 : f32
    %483 = vector.broadcast %cst_167 : f32 to vector<8x8xf32>
    %484 = arith.mulf %482, %483 : vector<8x8xf32>
    %485 = arith.addf %484, %284 : vector<8x8xf32>
    %cst_168 = arith.constant 0.000000e+00 : f32
    %486 = vector.broadcast %cst_168 : f32 to vector<8x8xf32>
    %487 = arith.cmpf oeq, %286, %486 : vector<8x8xf32>
    %cst_169 = arith.constant -1.000000e+09 : f32
    %488 = vector.broadcast %cst_169 : f32 to vector<8x8xf32>
    %489 = arith.select %487, %488, %485 : vector<8x8xi1>, vector<8x8xf32>
    %cst_170 = arith.constant dense<0xFF800000> : vector<8xf32>
    %490 = vector.multi_reduction <maximumf>, %489, %cst_170 [1] : vector<8x8xf32> to vector<8xf32>
    %491 = vector.shape_cast %490 : vector<8xf32> to vector<8x1xf32>
    %492 = vector.broadcast %491 : vector<8x1xf32> to vector<8x8xf32>
    %493 = arith.subf %489, %492 : vector<8x8xf32>
    %494 = math.exp %493 : vector<8x8xf32>
    %cst_171 = arith.constant dense<0.000000e+00> : vector<8xf32>
    %495 = vector.multi_reduction <add>, %494, %cst_171 [1] : vector<8x8xf32> to vector<8xf32>
    %496 = vector.shape_cast %495 : vector<8xf32> to vector<8x1xf32>
    %497 = tpu.reciprocal %496 {approx = true} : vector<8x1xf32> -> vector<8x1xf32>
    %498 = vector.broadcast %497 : vector<8x1xf32> to vector<8x8xf32>
    %499 = arith.mulf %494, %498 : vector<8x8xf32>
    %500 = arith.truncf %499 : vector<8x8xf32> to vector<8x8xbf16>
    %cst_172 = arith.constant dense<0.000000e+00> : vector<8x4xf32>
    %501 = tpu.matmul %500, %481, %cst_172 {dimension_numbers = #tpu.dot_dimension_numbers<[1], [0], [0], [1], [0, 0, 1, 1], [], []>} : vector<8x8xbf16>, vector<8x4xbf16>, vector<8x4xf32> -> vector<8x4xf32>
    %c8_173 = arith.constant 8 : index
    %c28_174 = arith.constant 28 : index
    %502 = vector.load %arg24[%c8_173, %c28_174] : memref<16x32xf32, #tpu.memory_space<vmem>>, vector<8x4xf32>
    tpu.vector_store %arg24[%c8_173, %c28_174], %501 {strides = array<i32>} : memref<16x32xf32, #tpu.memory_space<vmem>>, vector<8x4xf32>,
    %c0_175 = arith.constant 0 : index
    %c0_176 = arith.constant 0 : index
    %503 = vector.load %arg24[%c0_175, %c0_176] : memref<16x32xf32, #tpu.memory_space<vmem>>, vector<16x32xf32>
    %504 = arith.truncf %503 : vector<16x32xf32> to vector<16x32xbf16>
    %c0_177 = arith.constant 0 : index
    %c0_178 = arith.constant 0 : index
    %c0_179 = arith.constant 0 : index
    %505 = vector.load %arg12[%c0_177, %c0_178, %c0_179] : memref<1x32x32xbf16, #tpu.memory_space<vmem>>, vector<1x32x32xbf16>
    %506 = vector.shape_cast %505 : vector<1x32x32xbf16> to vector<32x32xbf16>
    %cst_180 = arith.constant dense<0.000000e+00> : vector<16x32xf32>
    %507 = tpu.matmul %504, %506, %cst_180 {dimension_numbers = #tpu.dot_dimension_numbers<[1], [1], [0], [0], [0, 0, 1, 0], [], []>} : vector<16x32xbf16>, vector<32x32xbf16>, vector<16x32xf32> -> vector<16x32xf32>
    %508 = arith.addf %3, %507 : vector<16x32xf32>
    %c0_181 = arith.constant 0 : index
    %c0_182 = arith.constant 0 : index
    %c0_183 = arith.constant 0 : index
    %509 = vector.load %arg13[%c0_181, %c0_182, %c0_183] : memref<1x1x32xf32, #tpu.memory_space<vmem>>, vector<1x1x32xf32>
    %510 = vector.shape_cast %509 : vector<1x1x32xf32> to vector<1x32xf32>
    %511 = vector.broadcast %510 : vector<1x32xf32> to vector<16x32xf32>
    %512 = arith.addf %508, %511 : vector<16x32xf32>
    %c0_184 = arith.constant 0 : index
    %c0_185 = arith.constant 0 : index
    %c0_186 = arith.constant 0 : index
    %513 = vector.load %arg14[%c0_184, %c0_185, %c0_186] : memref<1x1x32xf32, #tpu.memory_space<vmem>>, vector<1x1x32xf32>
    %514 = vector.shape_cast %513 : vector<1x1x32xf32> to vector<1x32xf32>
    %c0_187 = arith.constant 0 : index
    %c0_188 = arith.constant 0 : index
    %c0_189 = arith.constant 0 : index
    %515 = vector.load %arg15[%c0_187, %c0_188, %c0_189] : memref<1x1x32xf32, #tpu.memory_space<vmem>>, vector<1x1x32xf32>
    %516 = vector.shape_cast %515 : vector<1x1x32xf32> to vector<1x32xf32>
    %cst_190 = arith.constant dense<0.000000e+00> : vector<16xf32>
    %517 = vector.multi_reduction <add>, %512, %cst_190 [1] : vector<16x32xf32> to vector<16xf32>
    %518 = vector.shape_cast %517 : vector<16xf32> to vector<16x1xf32>
    %cst_191 = arith.constant 3.200000e+01 : f32
    %519 = vector.broadcast %cst_191 : f32 to vector<16x1xf32>
    %520 = arith.divf %518, %519 : vector<16x1xf32>
    %521 = vector.broadcast %520 : vector<16x1xf32> to vector<16x32xf32>
    %522 = arith.subf %512, %521 : vector<16x32xf32>
    %523 = arith.mulf %522, %522 : vector<16x32xf32>
    %cst_192 = arith.constant dense<0.000000e+00> : vector<16xf32>
    %524 = vector.multi_reduction <add>, %523, %cst_192 [1] : vector<16x32xf32> to vector<16xf32>
    %525 = vector.shape_cast %524 : vector<16xf32> to vector<16x1xf32>
    %cst_193 = arith.constant 3.100000e+01 : f32
    %526 = vector.broadcast %cst_193 : f32 to vector<16x1xf32>
    %527 = arith.divf %525, %526 : vector<16x1xf32>
    %528 = math.sqrt %527 : vector<16x1xf32>
    %cst_194 = arith.constant 9.99999997E-7 : f32
    %529 = vector.broadcast %cst_194 : f32 to vector<16x1xf32>
    %530 = arith.addf %528, %529 : vector<16x1xf32>
    %531 = tpu.reciprocal %530 {approx = true} : vector<16x1xf32> -> vector<16x1xf32>
    %532 = vector.broadcast %520 : vector<16x1xf32> to vector<16x32xf32>
    %533 = arith.subf %512, %532 : vector<16x32xf32>
    %534 = vector.broadcast %514 : vector<1x32xf32> to vector<16x32xf32>
    %535 = arith.mulf %534, %533 : vector<16x32xf32>
    %536 = vector.broadcast %531 : vector<16x1xf32> to vector<16x32xf32>
    %537 = arith.mulf %535, %536 : vector<16x32xf32>
    %538 = vector.broadcast %516 : vector<1x32xf32> to vector<16x32xf32>
    %539 = arith.addf %537, %538 : vector<16x32xf32>
    %540 = arith.truncf %539 : vector<16x32xf32> to vector<16x32xbf16>
    %c0_195 = arith.constant 0 : index
    %c0_196 = arith.constant 0 : index
    %c0_197 = arith.constant 0 : index
    %541 = vector.load %arg16[%c0_195, %c0_196, %c0_197] : memref<1x512x32xbf16, #tpu.memory_space<vmem>>, vector<1x512x32xbf16>
    %542 = vector.shape_cast %541 : vector<1x512x32xbf16> to vector<512x32xbf16>
    %cst_198 = arith.constant dense<0.000000e+00> : vector<16x512xf32>
    %543 = tpu.matmul %540, %542, %cst_198 {dimension_numbers = #tpu.dot_dimension_numbers<[1], [1], [0], [0], [0, 0, 1, 0], [], []>} : vector<16x32xbf16>, vector<512x32xbf16>, vector<16x512xf32> -> vector<16x512xf32>
    %c0_199 = arith.constant 0 : index
    %c0_200 = arith.constant 0 : index
    %c0_201 = arith.constant 0 : index
    %544 = vector.load %arg17[%c0_199, %c0_200, %c0_201] : memref<1x1x512xf32, #tpu.memory_space<vmem>>, vector<1x1x512xf32>
    %545 = vector.shape_cast %544 : vector<1x1x512xf32> to vector<1x512xf32>
    %546 = vector.broadcast %545 : vector<1x512xf32> to vector<16x512xf32>
    %547 = arith.addf %543, %546 : vector<16x512xf32>
    %cst_202 = arith.constant 0.000000e+00 : f32
    %548 = vector.broadcast %cst_202 : f32 to vector<16x512xf32>
    %549 = arith.maximumf %547, %548 : vector<16x512xf32>
    %550 = arith.truncf %549 : vector<16x512xf32> to vector<16x512xbf16>
    %c0_203 = arith.constant 0 : index
    %c0_204 = arith.constant 0 : index
    %c0_205 = arith.constant 0 : index
    %551 = vector.load %arg18[%c0_203, %c0_204, %c0_205] : memref<1x32x512xbf16, #tpu.memory_space<vmem>>, vector<1x32x512xbf16>
    %552 = vector.shape_cast %551 : vector<1x32x512xbf16> to vector<32x512xbf16>
    %cst_206 = arith.constant dense<0.000000e+00> : vector<16x32xf32>
    %553 = tpu.matmul %550, %552, %cst_206 {dimension_numbers = #tpu.dot_dimension_numbers<[1], [1], [0], [0], [0, 0, 1, 0], [], []>} : vector<16x512xbf16>, vector<32x512xbf16>, vector<16x32xf32> -> vector<16x32xf32>
    %554 = arith.addf %512, %553 : vector<16x32xf32>
    %c0_207 = arith.constant 0 : index
    %c0_208 = arith.constant 0 : index
    %c0_209 = arith.constant 0 : index
    %555 = vector.load %arg19[%c0_207, %c0_208, %c0_209] : memref<1x1x32xf32, #tpu.memory_space<vmem>>, vector<1x1x32xf32>
    %556 = vector.shape_cast %555 : vector<1x1x32xf32> to vector<1x32xf32>
    %557 = vector.broadcast %556 : vector<1x32xf32> to vector<16x32xf32>
    %558 = arith.addf %554, %557 : vector<16x32xf32>
    %c0_210 = arith.constant 0 : index
    %c0_211 = arith.constant 0 : index
    %559 = vector.load %arg23[%c0_210, %c0_211] : memref<16x32xf32, #tpu.memory_space<vmem>>, vector<16x32xf32>
    tpu.vector_store %arg23[%c0_210, %c0_211], %558 {strides = array<i32>} : memref<16x32xf32, #tpu.memory_space<vmem>>, vector<16x32xf32>,
    %c1_i32 = arith.constant 1 : i32
    %560 = arith.cmpi eq, %arg1, %c1_i32 : i32
    %561 = arith.extui %560 : i1 to i32
    %c0_i32_212 = arith.constant 0 : i32
    %562 = arith.cmpi ne, %561, %c0_i32_212 : i32
    scf.if %562 {
      %c0_213 = arith.constant 0 : index
      %c0_214 = arith.constant 0 : index
      %563 = vector.load %arg20[%c0_213, %c0_214] : memref<1x32xf32, #tpu.memory_space<vmem>>, vector<1x32xf32>
      %c0_215 = arith.constant 0 : index
      %c0_216 = arith.constant 0 : index
      %564 = vector.load %arg21[%c0_215, %c0_216] : memref<1x32xf32, #tpu.memory_space<vmem>>, vector<1x32xf32>
      %cst_217 = arith.constant dense<0.000000e+00> : vector<16xf32>
      %565 = vector.multi_reduction <add>, %558, %cst_217 [1] : vector<16x32xf32> to vector<16xf32>
      %566 = vector.shape_cast %565 : vector<16xf32> to vector<16x1xf32>
      %cst_218 = arith.constant 3.200000e+01 : f32
      %567 = vector.broadcast %cst_218 : f32 to vector<16x1xf32>
      %568 = arith.divf %566, %567 : vector<16x1xf32>
      %569 = vector.broadcast %568 : vector<16x1xf32> to vector<16x32xf32>
      %570 = arith.subf %558, %569 : vector<16x32xf32>
      %571 = arith.mulf %570, %570 : vector<16x32xf32>
      %cst_219 = arith.constant dense<0.000000e+00> : vector<16xf32>
      %572 = vector.multi_reduction <add>, %571, %cst_219 [1] : vector<16x32xf32> to vector<16xf32>
      %573 = vector.shape_cast %572 : vector<16xf32> to vector<16x1xf32>
      %cst_220 = arith.constant 3.100000e+01 : f32
      %574 = vector.broadcast %cst_220 : f32 to vector<16x1xf32>
      %575 = arith.divf %573, %574 : vector<16x1xf32>
      %576 = math.sqrt %575 : vector<16x1xf32>
      %cst_221 = arith.constant 9.99999997E-7 : f32
      %577 = vector.broadcast %cst_221 : f32 to vector<16x1xf32>
      %578 = arith.addf %576, %577 : vector<16x1xf32>
      %579 = tpu.reciprocal %578 {approx = true} : vector<16x1xf32> -> vector<16x1xf32>
      %580 = vector.broadcast %568 : vector<16x1xf32> to vector<16x32xf32>
      %581 = arith.subf %558, %580 : vector<16x32xf32>
      %582 = vector.broadcast %563 : vector<1x32xf32> to vector<16x32xf32>
      %583 = arith.mulf %582, %581 : vector<16x32xf32>
      %584 = vector.broadcast %579 : vector<16x1xf32> to vector<16x32xf32>
      %585 = arith.mulf %583, %584 : vector<16x32xf32>
      %586 = vector.broadcast %564 : vector<1x32xf32> to vector<16x32xf32>
      %587 = arith.addf %585, %586 : vector<16x32xf32>
      %588 = vector.shape_cast %587 : vector<16x32xf32> to vector<2x8x32xf32>
      %c0_222 = arith.constant 0 : index
      %c0_223 = arith.constant 0 : index
      %c0_224 = arith.constant 0 : index
      %589 = vector.load %arg22[%c0_222, %c0_223, %c0_224] : memref<2x8x32xf32, #tpu.memory_space<vmem>>, vector<2x8x32xf32>
      tpu.vector_store %arg22[%c0_222, %c0_223, %c0_224], %588 {strides = array<i32>} : memref<2x8x32xf32, #tpu.memory_space<vmem>>, vector<2x8x32xf32>,
    } else {
    }
    return
  }
  func.func @transform_0(%arg0: i32, %arg1: i32) -> (i32, i32, i32) {
    %c0_i32 = arith.constant 0 : i32
    %c0_i32_0 = arith.constant 0 : i32
    %c0_i32_1 = arith.constant 0 : i32
    return %arg0, %c0_i32, %c0_i32_0 : i32, i32, i32
  }
  func.func @transform_1(%arg0: i32, %arg1: i32) -> (i32, i32) {
    %c0_i32 = arith.constant 0 : i32
    %c0_i32_0 = arith.constant 0 : i32
    %c0_i32_1 = arith.constant 0 : i32
    return %c0_i32, %c0_i32_0 : i32, i32
  }
  func.func @transform_2(%arg0: i32, %arg1: i32) -> (i32, i32, i32) {
    %c0_i32 = arith.constant 0 : i32
    %c0_i32_0 = arith.constant 0 : i32
    %c0_i32_1 = arith.constant 0 : i32
    return %arg0, %c0_i32, %c0_i32_0 : i32, i32, i32
  }
  func.func @transform_3(%arg0: i32, %arg1: i32) -> (i32, i32, i32) {
    %c0_i32 = arith.constant 0 : i32
    %c0_i32_0 = arith.constant 0 : i32
    %c0_i32_1 = arith.constant 0 : i32
    return %arg0, %c0_i32, %c0_i32_0 : i32, i32, i32
  }
  func.func @transform_4(%arg0: i32, %arg1: i32) -> (i32, i32, i32) {
    %c0_i32 = arith.constant 0 : i32
    %c0_i32_0 = arith.constant 0 : i32
    %c0_i32_1 = arith.constant 0 : i32
    return %arg0, %c0_i32, %c0_i32_0 : i32, i32, i32
  }
  func.func @transform_5(%arg0: i32, %arg1: i32) -> (i32, i32, i32) {
    %c0_i32 = arith.constant 0 : i32
    %c0_i32_0 = arith.constant 0 : i32
    %c0_i32_1 = arith.constant 0 : i32
    return %arg1, %c0_i32, %c0_i32_0 : i32, i32, i32
  }
  func.func @transform_6(%arg0: i32, %arg1: i32) -> (i32, i32, i32) {
    %c0_i32 = arith.constant 0 : i32
    %c0_i32_0 = arith.constant 0 : i32
    %c0_i32_1 = arith.constant 0 : i32
    return %arg1, %c0_i32, %c0_i32_0 : i32, i32, i32
  }
  func.func @transform_7(%arg0: i32, %arg1: i32) -> (i32, i32, i32) {
    %c0_i32 = arith.constant 0 : i32
    %c0_i32_0 = arith.constant 0 : i32
    %c0_i32_1 = arith.constant 0 : i32
    return %arg1, %c0_i32, %c0_i32_0 : i32, i32, i32
  }
  func.func @transform_8(%arg0: i32, %arg1: i32) -> (i32, i32, i32) {
    %c0_i32 = arith.constant 0 : i32
    %c0_i32_0 = arith.constant 0 : i32
    %c0_i32_1 = arith.constant 0 : i32
    return %arg1, %c0_i32, %c0_i32_0 : i32, i32, i32
  }
  func.func @transform_9(%arg0: i32, %arg1: i32) -> (i32, i32) {
    %c0_i32 = arith.constant 0 : i32
    %c0_i32_0 = arith.constant 0 : i32
    %c0_i32_1 = arith.constant 0 : i32
    return %c0_i32, %c0_i32_0 : i32, i32
  }
  func.func @transform_10(%arg0: i32, %arg1: i32) -> (i32, i32, i32) {
    %c0_i32 = arith.constant 0 : i32
    %c0_i32_0 = arith.constant 0 : i32
    %c0_i32_1 = arith.constant 0 : i32
    return %arg1, %c0_i32, %c0_i32_0 : i32, i32, i32
  }
  func.func @transform_11(%arg0: i32, %arg1: i32) -> (i32, i32, i32) {
    %c0_i32 = arith.constant 0 : i32
    %c0_i32_0 = arith.constant 0 : i32
    %c0_i32_1 = arith.constant 0 : i32
    return %arg1, %c0_i32, %c0_i32_0 : i32, i32, i32
  }
  func.func @transform_12(%arg0: i32, %arg1: i32) -> (i32, i32, i32) {
    %c0_i32 = arith.constant 0 : i32
    %c0_i32_0 = arith.constant 0 : i32
    %c0_i32_1 = arith.constant 0 : i32
    return %arg1, %c0_i32, %c0_i32_0 : i32, i32, i32
  }
  func.func @transform_13(%arg0: i32, %arg1: i32) -> (i32, i32, i32) {
    %c0_i32 = arith.constant 0 : i32
    %c0_i32_0 = arith.constant 0 : i32
    %c0_i32_1 = arith.constant 0 : i32
    return %arg1, %c0_i32, %c0_i32_0 : i32, i32, i32
  }
  func.func @transform_14(%arg0: i32, %arg1: i32) -> (i32, i32, i32) {
    %c0_i32 = arith.constant 0 : i32
    %c0_i32_0 = arith.constant 0 : i32
    %c0_i32_1 = arith.constant 0 : i32
    return %arg1, %c0_i32, %c0_i32_0 : i32, i32, i32
  }
  func.func @transform_15(%arg0: i32, %arg1: i32) -> (i32, i32, i32) {
    %c0_i32 = arith.constant 0 : i32
    %c0_i32_0 = arith.constant 0 : i32
    %c0_i32_1 = arith.constant 0 : i32
    return %arg1, %c0_i32, %c0_i32_0 : i32, i32, i32
  }
  func.func @transform_16(%arg0: i32, %arg1: i32) -> (i32, i32, i32) {
    %c0_i32 = arith.constant 0 : i32
    %c0_i32_0 = arith.constant 0 : i32
    %c0_i32_1 = arith.constant 0 : i32
    return %arg1, %c0_i32, %c0_i32_0 : i32, i32, i32
  }
  func.func @transform_17(%arg0: i32, %arg1: i32) -> (i32, i32, i32) {
    %c0_i32 = arith.constant 0 : i32
    %c0_i32_0 = arith.constant 0 : i32
    %c0_i32_1 = arith.constant 0 : i32
    return %arg1, %c0_i32, %c0_i32_0 : i32, i32, i32
  }
  func.func @transform_18(%arg0: i32, %arg1: i32) -> (i32, i32) {
    %c0_i32 = arith.constant 0 : i32
    %c0_i32_0 = arith.constant 0 : i32
    %c0_i32_1 = arith.constant 0 : i32
    return %c0_i32, %c0_i32_0 : i32, i32
  }
  func.func @transform_19(%arg0: i32, %arg1: i32) -> (i32, i32) {
    %c0_i32 = arith.constant 0 : i32
    %c0_i32_0 = arith.constant 0 : i32
    %c0_i32_1 = arith.constant 0 : i32
    return %c0_i32, %c0_i32_0 : i32, i32
  }
  func.func @transform_20(%arg0: i32, %arg1: i32) -> (i32, i32, i32) {
    %c0_i32 = arith.constant 0 : i32
    %c0_i32_0 = arith.constant 0 : i32
    %c0_i32_1 = arith.constant 0 : i32
    return %arg0, %c0_i32, %c0_i32_0 : i32, i32, i32
  }
}

</mosaic_0001>

<llo_original>
// kernel: tpu_custom_call.1
$region0: #{tpu_custom_call.1}
  #allocation0 [shape = 'u32[]', space=smem, size = 0x4, offset = 0x4, fixed_abs, tag = 'smem constant byte address 0x4 - core index']
  #allocation1 [shape = 'u32[72,128]{1,0:T(1,128)}', space=vmem, size = 0x9000, scoped, tag = 'internal scratch']
  #allocation2 [shape = 'f32[16,32]{1,0:T(8,128)}', space=vmem, size = 0x2000, scoped, tag = 'scratch operand']
  #allocation3 [shape = 'f32[16,32]{1,0:T(8,128)}', space=vmem, size = 0x2000, scoped, tag = 'scratch operand']
  #allocation4 [shape = 'f32[2,8,8]{2,1,0:T(8,128)}', space=vmem, size = 0x2000, scoped, tag = 'scratch operand']
  #allocation5 [shape = 'f32[2,8,8]{2,1,0:T(8,128)}', space=vmem, size = 0x2000, scoped, tag = 'scratch operand']
  %s0 = inlined_call_operand.vmem [shape: f32[4,8,32], index: 0, kind: input, shape index: {}]
  %s1 = inlined_call_operand.vmem [shape: f32[8,32], index: 1, kind: input, shape index: {}]
  %s2 = inlined_call_operand.vmem [shape: f32[4,8,8], index: 2, kind: input, shape index: {}]
  %s3 = inlined_call_operand.vmem [shape: f32[4,8,8], index: 3, kind: input, shape index: {}]
  %s4 = inlined_call_operand.vmem [shape: f32[4,8,8], index: 4, kind: input, shape index: {}]
  %s5 = inlined_call_operand.vmem [shape: f32[2,1,32], index: 5, kind: input, shape index: {}]
  %s6 = inlined_call_operand.vmem [shape: f32[2,1,32], index: 6, kind: input, shape index: {}]
  %s7 = inlined_call_operand.vmem [shape: bf16[2,96,32], index: 7, kind: input, shape index: {}]
  %s8 = inlined_call_operand.vmem [shape: f32[2,1,96], index: 8, kind: input, shape index: {}]
  %s9 = inlined_call_operand.vmem [shape: f32[2,3], index: 9, kind: input, shape index: {}]
  %s10 = inlined_call_operand.vmem [shape: bf16[2,32,32], index: 10, kind: input, shape index: {}]
  %s11 = inlined_call_operand.vmem [shape: f32[2,1,32], index: 11, kind: input, shape index: {}]
  %s12 = inlined_call_operand.vmem [shape: f32[2,1,32], index: 12, kind: input, shape index: {}]
  %s13 = inlined_call_operand.vmem [shape: f32[2,1,32], index: 13, kind: input, shape index: {}]
  %s14 = inlined_call_operand.vmem [shape: bf16[2,512,32], index: 14, kind: input, shape index: {}]
  %s15 = inlined_call_operand.vmem [shape: f32[2,1,512], index: 15, kind: input, shape index: {}]
  %s16 = inlined_call_operand.vmem [shape: bf16[2,32,512], index: 16, kind: input, shape index: {}]
  %s17 = inlined_call_operand.vmem [shape: f32[2,1,32], index: 17, kind: input, shape index: {}]
  %s18 = inlined_call_operand.vmem [shape: f32[1,32], index: 18, kind: input, shape index: {}]
  %s19 = inlined_call_operand.vmem [shape: f32[1,32], index: 19, kind: input, shape index: {}]
  %s20 = inlined_call_operand.hbm [shape: f32[4,8,32], index: 20, kind: output, shape index: {}]
  %s21 = sld [smem:[#allocation0]]
  $region125: #{tpu_custom_call.1} parent=0
    _
  %s23 = ssub.s32 1, %s21
  %s24 = scalar_select 0, %s23, %s21
  $region1: #{tpu_custom_call.1} parent=0
    #allocation6 [shape = 'u8[1024]{0}', space=smem, size = 0x400, scoped, tag = 'input window, operand 9, single buffered']
    #allocation7 [shape = 's32[2]{0}', space=sflag, size = 0x8, scoped, tag = 'scoped memory for tpu_custom_call.1']
    #allocation8 [shape = 's32[2]{0}', space=sflag, size = 0x8, scoped, tag = 'scoped memory for tpu_custom_call.1']
    #allocation9 [shape = 'u8[16384]{0}', space=vmem, size = 0x4000, scoped, tag = 'output window, operand 0']
    %25 = vsyncpa [#allocation8], 0
    %26 = vsyncpa [#allocation7], 0
    %s27 = scalar_lea.sflag [#allocation7], 1
    %28 = vsyncpa %s27, 0
    loop: start=0, step=1, limit=6
    $region2: #{tpu_custom_call.1} parent=1 // loop_pre_header
      _
    $region3: #{tpu_custom_call.1} parent=1 // loop_header
      %s30 = sphi 0, %s34
      %p31 = scmp.ge.s32.totalorder %s30, 6
      %s37 = sphi 0, %s49
      %s38 = sphi 0, %s45
      %s39 = sphi 0, %s37
      %s40 = sphi 0, %s38
      %s41 = sphi 0, %s39
      %s42 = sphi 0, %s40
      %s52 = sphi 0, %s54
      %s55 = sphi 0, %s52
      %s56 = sphi 0, %s55
      %s72 = sphi 0, %s56
      %s76 = sphi 0, %s76
      %s78 = sphi 0, %s76
      %s79 = sphi 0, %s78
      %s93 = sphi 0, %s79
      %s99 = sphi 0, %s101
      %s102 = sphi 0, %s99
      %s103 = sphi 0, %s102
      %s119 = sphi 0, %s103
      %s125 = sphi 0, %s127
      %s128 = sphi 0, %s125
      %s129 = sphi 0, %s128
      %s145 = sphi 0, %s129
      %s151 = sphi 0, %s153
      %s154 = sphi 0, %s151
      %s155 = sphi 0, %s154
      %s171 = sphi 0, %s155
      %s177 = sphi 0, %s179
      %s180 = sphi 0, %s177
      %s181 = sphi 0, %s180
      %s197 = sphi 0, %s181
      %s203 = sphi 0, %s205
      %s206 = sphi 0, %s203
      %s207 = sphi 0, %s206
      %s223 = sphi 0, %s207
      %s229 = sphi 0, %s231
      %s232 = sphi 0, %s229
      %s233 = sphi 0, %s232
      %s249 = sphi 0, %s233
      %s255 = sphi 0, %s257
      %s258 = sphi 0, %s255
      %s259 = sphi 0, %s258
      %s275 = sphi 0, %s259
      %s279 = sphi 0, %s279
      %s281 = sphi 0, %s279
      %s282 = sphi 0, %s281
      %s296 = sphi 0, %s282
      %s302 = sphi 0, %s304
      %s305 = sphi 0, %s302
      %s306 = sphi 0, %s305
      %s322 = sphi 0, %s306
      %s328 = sphi 0, %s330
      %s331 = sphi 0, %s328
      %s332 = sphi 0, %s331
      %s348 = sphi 0, %s332
      %s354 = sphi 0, %s356
      %s357 = sphi 0, %s354
      %s358 = sphi 0, %s357
      %s374 = sphi 0, %s358
      %s380 = sphi 0, %s382
      %s383 = sphi 0, %s380
      %s384 = sphi 0, %s383
      %s400 = sphi 0, %s384
      %s406 = sphi 0, %s408
      %s409 = sphi 0, %s406
      %s410 = sphi 0, %s409
      %s426 = sphi 0, %s410
      %s432 = sphi 0, %s434
      %s435 = sphi 0, %s432
      %s436 = sphi 0, %s435
      %s452 = sphi 0, %s436
      %s458 = sphi 0, %s460
      %s461 = sphi 0, %s458
      %s462 = sphi 0, %s461
      %s478 = sphi 0, %s462
      %s484 = sphi 0, %s486
      %s487 = sphi 0, %s484
      %s488 = sphi 0, %s487
      %s504 = sphi 0, %s488
      %s508 = sphi 0, %s508
      %s510 = sphi 0, %s508
      %s511 = sphi 0, %s510
      %s525 = sphi 0, %s511
      %s529 = sphi 0, %s529
      %s531 = sphi 0, %s529
      %s532 = sphi 0, %s531
      %s546 = sphi 0, %s532
      %s552 = sphi 0, %s554
      %s555 = sphi 0, %s552
      %s556 = sphi 0, %s555
      %s572 = sphi 0, %s556
    $region4: #{tpu_custom_call.1} parent=1 // loop_header_branch
      %33 = sbr.rel (%p31) target = $region8
    $region5: #{tpu_custom_call.1} parent=1 // loop_body
      %s35 = ssub.s32 %s30, 1
      %s36 = ssub.s32 %s30, 2
      %s43 = sadd.s32 1, %s38
      %p44 = scmp.ge.s32.totalorder %s43, 2
      %s45 = scalar_select %p44, 0, %s43
      %s46 = sadd.s32 1, %s37
      %s47 = scalar_select %p44, %s46, %s37
      %p48 = scmp.ge.s32.totalorder %s47, 2
      %s49 = scalar_select %p48, 0, %s47
      %s50 = ssub.s32 %s37, %s49
      %p51 = scmp.eq.s32.totalorder %s50, 0
      %s53 = sadd.s32 %s52, 1
      %s54 = scalar_select %p51, %s52, %s53
      %p57 = pneg %p51
      %p58 = scmp.eq.s32.totalorder %s30, 3
      %p59 = por %p57, %p58
      %p60 = scmp.ne.s32.totalorder %s52, %s55
      %p61 = scmp.eq.s32.totalorder %s30, 0
      %p62 = por %p60, %p61
      %p63 = scmp.ne.s32.totalorder %s52, %s55
      %p64 = scmp.eq.s32.totalorder %s35, 3
      %p65 = por %p63, %p64
      %p66 = scmp.ne.s32.totalorder %s55, %s56
      %p67 = scmp.eq.s32.totalorder %s35, 0
      %p68 = por %p66, %p67
      %p69 = scmp.ne.s32.totalorder %s55, %s56
      %p70 = scmp.eq.s32.totalorder %s36, 3
      %p71 = por %p69, %p70
      %p73 = scmp.ne.s32.totalorder %s56, %s72
      %p74 = scmp.eq.s32.totalorder %s36, 0
      %p75 = por %p73, %p74
      %s77 = sadd.s32 %s76, 1
      %p80 = scmp.eq.s32.totalorder %s30, 3
      %p81 = scmp.ne.s32.totalorder %s76, %s78
      %p82 = scmp.eq.s32.totalorder %s30, 0
      %p83 = por %p81, %p82
      %p84 = scmp.ne.s32.totalorder %s76, %s78
      %p85 = scmp.eq.s32.totalorder %s35, 3
      %p86 = por %p84, %p85
      %p87 = scmp.ne.s32.totalorder %s78, %s79
      %p88 = scmp.eq.s32.totalorder %s35, 0
      %p89 = por %p87, %p88
      %p90 = scmp.ne.s32.totalorder %s78, %s79
      %p91 = scmp.eq.s32.totalorder %s36, 3
      %p92 = por %p90, %p91
      %p94 = scmp.ne.s32.totalorder %s79, %s93
      %p95 = scmp.eq.s32.totalorder %s36, 0
      %p96 = por %p94, %p95
      %s97 = ssub.s32 %s37, %s49
      %p98 = scmp.eq.s32.totalorder %s97, 0
      %s100 = sadd.s32 %s99, 1
      %s101 = scalar_select %p98, %s99, %s100
      %p104 = pneg %p98
      %p105 = scmp.eq.s32.totalorder %s30, 3
      %p106 = por %p104, %p105
      %p107 = scmp.ne.s32.totalorder %s99, %s102
      %p108 = scmp.eq.s32.totalorder %s30, 0
      %p109 = por %p107, %p108
      %p110 = scmp.ne.s32.totalorder %s99, %s102
      %p111 = scmp.eq.s32.totalorder %s35, 3
      %p112 = por %p110, %p111
      %p113 = scmp.ne.s32.totalorder %s102, %s103
      %p114 = scmp.eq.s32.totalorder %s35, 0
      %p115 = por %p113, %p114
      %p116 = scmp.ne.s32.totalorder %s102, %s103
      %p117 = scmp.eq.s32.totalorder %s36, 3
      %p118 = por %p116, %p117
      %p120 = scmp.ne.s32.totalorder %s103, %s119
      %p121 = scmp.eq.s32.totalorder %s36, 0
      %p122 = por %p120, %p121
      %s123 = ssub.s32 %s37, %s49
      %p124 = scmp.eq.s32.totalorder %s123, 0
      %s126 = sadd.s32 %s125, 1
      %s127 = scalar_select %p124, %s125, %s126
      %p130 = pneg %p124
      %p131 = scmp.eq.s32.totalorder %s30, 3
      %p132 = por %p130, %p131
      %p133 = scmp.ne.s32.totalorder %s125, %s128
      %p134 = scmp.eq.s32.totalorder %s30, 0
      %p135 = por %p133, %p134
      %p136 = scmp.ne.s32.totalorder %s125, %s128
      %p137 = scmp.eq.s32.totalorder %s35, 3
      %p138 = por %p136, %p137
      %p139 = scmp.ne.s32.totalorder %s128, %s129
      %p140 = scmp.eq.s32.totalorder %s35, 0
      %p141 = por %p139, %p140
      %p142 = scmp.ne.s32.totalorder %s128, %s129
      %p143 = scmp.eq.s32.totalorder %s36, 3
      %p144 = por %p142, %p143
      %p146 = scmp.ne.s32.totalorder %s129, %s145
      %p147 = scmp.eq.s32.totalorder %s36, 0
      %p148 = por %p146, %p147
      %s149 = ssub.s32 %s37, %s49
      %p150 = scmp.eq.s32.totalorder %s149, 0
      %s152 = sadd.s32 %s151, 1
      %s153 = scalar_select %p150, %s151, %s152
      %p156 = pneg %p150
      %p157 = scmp.eq.s32.totalorder %s30, 3
      %p158 = por %p156, %p157
      %p159 = scmp.ne.s32.totalorder %s151, %s154
      %p160 = scmp.eq.s32.totalorder %s30, 0
      %p161 = por %p159, %p160
      %p162 = scmp.ne.s32.totalorder %s151, %s154
      %p163 = scmp.eq.s32.totalorder %s35, 3
      %p164 = por %p162, %p163
      %p165 = scmp.ne.s32.totalorder %s154, %s155
      %p166 = scmp.eq.s32.totalorder %s35, 0
      %p167 = por %p165, %p166
      %p168 = scmp.ne.s32.totalorder %s154, %s155
      %p169 = scmp.eq.s32.totalorder %s36, 3
      %p170 = por %p168, %p169
      %p172 = scmp.ne.s32.totalorder %s155, %s171
      %p173 = scmp.eq.s32.totalorder %s36, 0
      %p174 = por %p172, %p173
      %s175 = ssub.s32 %s38, %s45
      %p176 = scmp.eq.s32.totalorder %s175, 0
      %s178 = sadd.s32 %s177, 1
      %s179 = scalar_select %p176, %s177, %s178
      %p182 = pneg %p176
      %p183 = scmp.eq.s32.totalorder %s30, 3
      %p184 = por %p182, %p183
      %p185 = scmp.ne.s32.totalorder %s177, %s180
      %p186 = scmp.eq.s32.totalorder %s30, 0
      %p187 = por %p185, %p186
      %p188 = scmp.ne.s32.totalorder %s177, %s180
      %p189 = scmp.eq.s32.totalorder %s35, 3
      %p190 = por %p188, %p189
      %p191 = scmp.ne.s32.totalorder %s180, %s181
      %p192 = scmp.eq.s32.totalorder %s35, 0
      %p193 = por %p191, %p192
      %p194 = scmp.ne.s32.totalorder %s180, %s181
      %p195 = scmp.eq.s32.totalorder %s36, 3
      %p196 = por %p194, %p195
      %p198 = scmp.ne.s32.totalorder %s181, %s197
      %p199 = scmp.eq.s32.totalorder %s36, 0
      %p200 = por %p198, %p199
      %s201 = ssub.s32 %s38, %s45
      %p202 = scmp.eq.s32.totalorder %s201, 0
      %s204 = sadd.s32 %s203, 1
      %s205 = scalar_select %p202, %s203, %s204
      %p208 = pneg %p202
      %p209 = scmp.eq.s32.totalorder %s30, 3
      %p210 = por %p208, %p209
      %p211 = scmp.ne.s32.totalorder %s203, %s206
      %p212 = scmp.eq.s32.totalorder %s30, 0
      %p213 = por %p211, %p212
      %p214 = scmp.ne.s32.totalorder %s203, %s206
      %p215 = scmp.eq.s32.totalorder %s35, 3
      %p216 = por %p214, %p215
      %p217 = scmp.ne.s32.totalorder %s206, %s207
      %p218 = scmp.eq.s32.totalorder %s35, 0
      %p219 = por %p217, %p218
      %p220 = scmp.ne.s32.totalorder %s206, %s207
      %p221 = scmp.eq.s32.totalorder %s36, 3
      %p222 = por %p220, %p221
      %p224 = scmp.ne.s32.totalorder %s207, %s223
      %p225 = scmp.eq.s32.totalorder %s36, 0
      %p226 = por %p224, %p225
      %s227 = ssub.s32 %s38, %s45
      %p228 = scmp.eq.s32.totalorder %s227, 0
      %s230 = sadd.s32 %s229, 1
      %s231 = scalar_select %p228, %s229, %s230
      %p234 = pneg %p228
      %p235 = scmp.eq.s32.totalorder %s30, 3
      %p236 = por %p234, %p235
      %p237 = scmp.ne.s32.totalorder %s229, %s232
      %p238 = scmp.eq.s32.totalorder %s30, 0
      %p239 = por %p237, %p238
      %p240 = scmp.ne.s32.totalorder %s229, %s232
      %p241 = scmp.eq.s32.totalorder %s35, 3
      %p242 = por %p240, %p241
      %p243 = scmp.ne.s32.totalorder %s232, %s233
      %p244 = scmp.eq.s32.totalorder %s35, 0
      %p245 = por %p243, %p244
      %p246 = scmp.ne.s32.totalorder %s232, %s233
      %p247 = scmp.eq.s32.totalorder %s36, 3
      %p248 = por %p246, %p247
      %p250 = scmp.ne.s32.totalorder %s233, %s249
      %p251 = scmp.eq.s32.totalorder %s36, 0
      %p252 = por %p250, %p251
      %s253 = ssub.s32 %s38, %s45
      %p254 = scmp.eq.s32.totalorder %s253, 0
      %s256 = sadd.s32 %s255, 1
      %s257 = scalar_select %p254, %s255, %s256
      %p260 = pneg %p254
      %p261 = scmp.eq.s32.totalorder %s30, 3
      %p262 = por %p260, %p261
      %p263 = scmp.ne.s32.totalorder %s255, %s258
      %p264 = scmp.eq.s32.totalorder %s30, 0
      %p265 = por %p263, %p264
      %p266 = scmp.ne.s32.totalorder %s255, %s258
      %p267 = scmp.eq.s32.totalorder %s35, 3
      %p268 = por %p266, %p267
      %p269 = scmp.ne.s32.totalorder %s258, %s259
      %p270 = scmp.eq.s32.totalorder %s35, 0
      %p271 = por %p269, %p270
      %p272 = scmp.ne.s32.totalorder %s258, %s259
      %p273 = scmp.eq.s32.totalorder %s36, 3
      %p274 = por %p272, %p273
      %p276 = scmp.ne.s32.totalorder %s259, %s275
      %p277 = scmp.eq.s32.totalorder %s36, 0
      %p278 = por %p276, %p277
      %s280 = sadd.s32 %s279, 1
      %p283 = scmp.eq.s32.totalorder %s30, 3
      %p284 = scmp.ne.s32.totalorder %s279, %s281
      %p285 = scmp.eq.s32.totalorder %s30, 0
      %p286 = por %p284, %p285
      %p287 = scmp.ne.s32.totalorder %s279, %s281
      %p288 = scmp.eq.s32.totalorder %s35, 3
      %p289 = por %p287, %p288
      %p290 = scmp.ne.s32.totalorder %s281, %s282
      %p291 = scmp.eq.s32.totalorder %s35, 0
      %p292 = por %p290, %p291
      %p293 = scmp.ne.s32.totalorder %s281, %s282
      %p294 = scmp.eq.s32.totalorder %s36, 3
      %p295 = por %p293, %p294
      %p297 = scmp.ne.s32.totalorder %s282, %s296
      %p298 = scmp.eq.s32.totalorder %s36, 0
      %p299 = por %p297, %p298
      %s300 = ssub.s32 %s38, %s45
      %p301 = scmp.eq.s32.totalorder %s300, 0
      %s303 = sadd.s32 %s302, 1
      %s304 = scalar_select %p301, %s302, %s303
      %p307 = pneg %p301
      %p308 = scmp.eq.s32.totalorder %s30, 3
      %p309 = por %p307, %p308
      %p310 = scmp.ne.s32.totalorder %s302, %s305
      %p311 = scmp.eq.s32.totalorder %s30, 0
      %p312 = por %p310, %p311
      %p313 = scmp.ne.s32.totalorder %s302, %s305
      %p314 = scmp.eq.s32.totalorder %s35, 3
      %p315 = por %p313, %p314
      %p316 = scmp.ne.s32.totalorder %s305, %s306
      %p317 = scmp.eq.s32.totalorder %s35, 0
      %p318 = por %p316, %p317
      %p319 = scmp.ne.s32.totalorder %s305, %s306
      %p320 = scmp.eq.s32.totalorder %s36, 3
      %p321 = por %p319, %p320
      %p323 = scmp.ne.s32.totalorder %s306, %s322
      %p324 = scmp.eq.s32.totalorder %s36, 0
      %p325 = por %p323, %p324
      %s326 = ssub.s32 %s38, %s45
      %p327 = scmp.eq.s32.totalorder %s326, 0
      %s329 = sadd.s32 %s328, 1
      %s330 = scalar_select %p327, %s328, %s329
      %p333 = pneg %p327
      %p334 = scmp.eq.s32.totalorder %s30, 3
      %p335 = por %p333, %p334
      %p336 = scmp.ne.s32.totalorder %s328, %s331
      %p337 = scmp.eq.s32.totalorder %s30, 0
      %p338 = por %p336, %p337
      %p339 = scmp.ne.s32.totalorder %s328, %s331
      %p340 = scmp.eq.s32.totalorder %s35, 3
      %p341 = por %p339, %p340
      %p342 = scmp.ne.s32.totalorder %s331, %s332
      %p343 = scmp.eq.s32.totalorder %s35, 0
      %p344 = por %p342, %p343
      %p345 = scmp.ne.s32.totalorder %s331, %s332
      %p346 = scmp.eq.s32.totalorder %s36, 3
      %p347 = por %p345, %p346
      %p349 = scmp.ne.s32.totalorder %s332, %s348
      %p350 = scmp.eq.s32.totalorder %s36, 0
      %p351 = por %p349, %p350
      %s352 = ssub.s32 %s38, %s45
      %p353 = scmp.eq.s32.totalorder %s352, 0
      %s355 = sadd.s32 %s354, 1
      %s356 = scalar_select %p353, %s354, %s355
      %p359 = pneg %p353
      %p360 = scmp.eq.s32.totalorder %s30, 3
      %p361 = por %p359, %p360
      %p362 = scmp.ne.s32.totalorder %s354, %s357
      %p363 = scmp.eq.s32.totalorder %s30, 0
      %p364 = por %p362, %p363
      %p365 = scmp.ne.s32.totalorder %s354, %s357
      %p366 = scmp.eq.s32.totalorder %s35, 3
      %p367 = por %p365, %p366
      %p368 = scmp.ne.s32.totalorder %s357, %s358
      %p369 = scmp.eq.s32.totalorder %s35, 0
      %p370 = por %p368, %p369
      %p371 = scmp.ne.s32.totalorder %s357, %s358
      %p372 = scmp.eq.s32.totalorder %s36, 3
      %p373 = por %p371, %p372
      %p375 = scmp.ne.s32.totalorder %s358, %s374
      %p376 = scmp.eq.s32.totalorder %s36, 0
      %p377 = por %p375, %p376
      %s378 = ssub.s32 %s38, %s45
      %p379 = scmp.eq.s32.totalorder %s378, 0
      %s381 = sadd.s32 %s380, 1
      %s382 = scalar_select %p379, %s380, %s381
      %p385 = pneg %p379
      %p386 = scmp.eq.s32.totalorder %s30, 3
      %p387 = por %p385, %p386
      %p388 = scmp.ne.s32.totalorder %s380, %s383
      %p389 = scmp.eq.s32.totalorder %s30, 0
      %p390 = por %p388, %p389
      %p391 = scmp.ne.s32.totalorder %s380, %s383
      %p392 = scmp.eq.s32.totalorder %s35, 3
      %p393 = por %p391, %p392
      %p394 = scmp.ne.s32.totalorder %s383, %s384
      %p395 = scmp.eq.s32.totalorder %s35, 0
      %p396 = por %p394, %p395
      %p397 = scmp.ne.s32.totalorder %s383, %s384
      %p398 = scmp.eq.s32.totalorder %s36, 3
      %p399 = por %p397, %p398
      %p401 = scmp.ne.s32.totalorder %s384, %s400
      %p402 = scmp.eq.s32.totalorder %s36, 0
      %p403 = por %p401, %p402
      %s404 = ssub.s32 %s38, %s45
      %p405 = scmp.eq.s32.totalorder %s404, 0
      %s407 = sadd.s32 %s406, 1
      %s408 = scalar_select %p405, %s406, %s407
      %p411 = pneg %p405
      %p412 = scmp.eq.s32.totalorder %s30, 3
      %p413 = por %p411, %p412
      %p414 = scmp.ne.s32.totalorder %s406, %s409
      %p415 = scmp.eq.s32.totalorder %s30, 0
      %p416 = por %p414, %p415
      %p417 = scmp.ne.s32.totalorder %s406, %s409
      %p418 = scmp.eq.s32.totalorder %s35, 3
      %p419 = por %p417, %p418
      %p420 = scmp.ne.s32.totalorder %s409, %s410
      %p421 = scmp.eq.s32.totalorder %s35, 0
      %p422 = por %p420, %p421
      %p423 = scmp.ne.s32.totalorder %s409, %s410
      %p424 = scmp.eq.s32.totalorder %s36, 3
      %p425 = por %p423, %p424
      %p427 = scmp.ne.s32.totalorder %s410, %s426
      %p428 = scmp.eq.s32.totalorder %s36, 0
      %p429 = por %p427, %p428
      %s430 = ssub.s32 %s38, %s45
      %p431 = scmp.eq.s32.totalorder %s430, 0
      %s433 = sadd.s32 %s432, 1
      %s434 = scalar_select %p431, %s432, %s433
      %p437 = pneg %p431
      %p438 = scmp.eq.s32.totalorder %s30, 3
      %p439 = por %p437, %p438
      %p440 = scmp.ne.s32.totalorder %s432, %s435
      %p441 = scmp.eq.s32.totalorder %s30, 0
      %p442 = por %p440, %p441
      %p443 = scmp.ne.s32.totalorder %s432, %s435
      %p444 = scmp.eq.s32.totalorder %s35, 3
      %p445 = por %p443, %p444
      %p446 = scmp.ne.s32.totalorder %s435, %s436
      %p447 = scmp.eq.s32.totalorder %s35, 0
      %p448 = por %p446, %p447
      %p449 = scmp.ne.s32.totalorder %s435, %s436
      %p450 = scmp.eq.s32.totalorder %s36, 3
      %p451 = por %p449, %p450
      %p453 = scmp.ne.s32.totalorder %s436, %s452
      %p454 = scmp.eq.s32.totalorder %s36, 0
      %p455 = por %p453, %p454
      %s456 = ssub.s32 %s38, %s45
      %p457 = scmp.eq.s32.totalorder %s456, 0
      %s459 = sadd.s32 %s458, 1
      %s460 = scalar_select %p457, %s458, %s459
      %p463 = pneg %p457
      %p464 = scmp.eq.s32.totalorder %s30, 3
      %p465 = por %p463, %p464
      %p466 = scmp.ne.s32.totalorder %s458, %s461
      %p467 = scmp.eq.s32.totalorder %s30, 0
      %p468 = por %p466, %p467
      %p469 = scmp.ne.s32.totalorder %s458, %s461
      %p470 = scmp.eq.s32.totalorder %s35, 3
      %p471 = por %p469, %p470
      %p472 = scmp.ne.s32.totalorder %s461, %s462
      %p473 = scmp.eq.s32.totalorder %s35, 0
      %p474 = por %p472, %p473
      %p475 = scmp.ne.s32.totalorder %s461, %s462
      %p476 = scmp.eq.s32.totalorder %s36, 3
      %p477 = por %p475, %p476
      %p479 = scmp.ne.s32.totalorder %s462, %s478
      %p480 = scmp.eq.s32.totalorder %s36, 0
      %p481 = por %p479, %p480
      %s482 = ssub.s32 %s38, %s45
      %p483 = scmp.eq.s32.totalorder %s482, 0
      %s485 = sadd.s32 %s484, 1
      %s486 = scalar_select %p483, %s484, %s485
      %p489 = pneg %p483
      %p490 = scmp.eq.s32.totalorder %s30, 3
      %p491 = por %p489, %p490
      %p492 = scmp.ne.s32.totalorder %s484, %s487
      %p493 = scmp.eq.s32.totalorder %s30, 0
      %p494 = por %p492, %p493
      %p495 = scmp.ne.s32.totalorder %s484, %s487
      %p496 = scmp.eq.s32.totalorder %s35, 3
      %p497 = por %p495, %p496
      %p498 = scmp.ne.s32.totalorder %s487, %s488
      %p499 = scmp.eq.s32.totalorder %s35, 0
      %p500 = por %p498, %p499
      %p501 = scmp.ne.s32.totalorder %s487, %s488
      %p502 = scmp.eq.s32.totalorder %s36, 3
      %p503 = por %p501, %p502
      %p505 = scmp.ne.s32.totalorder %s488, %s504
      %p506 = scmp.eq.s32.totalorder %s36, 0
      %p507 = por %p505, %p506
      %s509 = sadd.s32 %s508, 1
      %p512 = scmp.eq.s32.totalorder %s30, 3
      %p513 = scmp.ne.s32.totalorder %s508, %s510
      %p514 = scmp.eq.s32.totalorder %s30, 0
      %p515 = por %p513, %p514
      %p516 = scmp.ne.s32.totalorder %s508, %s510
      %p517 = scmp.eq.s32.totalorder %s35, 3
      %p518 = por %p516, %p517
      %p519 = scmp.ne.s32.totalorder %s510, %s511
      %p520 = scmp.eq.s32.totalorder %s35, 0
      %p521 = por %p519, %p520
      %p522 = scmp.ne.s32.totalorder %s510, %s511
      %p523 = scmp.eq.s32.totalorder %s36, 3
      %p524 = por %p522, %p523
      %p526 = scmp.ne.s32.totalorder %s511, %s525
      %p527 = scmp.eq.s32.totalorder %s36, 0
      %p528 = por %p526, %p527
      %s530 = sadd.s32 %s529, 1
      %p533 = scmp.eq.s32.totalorder %s30, 3
      %p534 = scmp.ne.s32.totalorder %s529, %s531
      %p535 = scmp.eq.s32.totalorder %s30, 0
      %p536 = por %p534, %p535
      %p537 = scmp.ne.s32.totalorder %s529, %s531
      %p538 = scmp.eq.s32.totalorder %s35, 3
      %p539 = por %p537, %p538
      %p540 = scmp.ne.s32.totalorder %s531, %s532
      %p541 = scmp.eq.s32.totalorder %s35, 0
      %p542 = por %p540, %p541
      %p543 = scmp.ne.s32.totalorder %s531, %s532
      %p544 = scmp.eq.s32.totalorder %s36, 3
      %p545 = por %p543, %p544
      %p547 = scmp.ne.s32.totalorder %s532, %s546
      %p548 = scmp.eq.s32.totalorder %s36, 0
      %p549 = por %p547, %p548
      %s550 = ssub.s32 %s37, %s49
      %p551 = scmp.eq.s32.totalorder %s550, 0
      %s553 = sadd.s32 %s552, 1
      %s554 = scalar_select %p551, %s552, %s553
      %p557 = pneg %p551
      %p558 = scmp.eq.s32.totalorder %s30, 3
      %p559 = por %p557, %p558
      %p560 = scmp.ne.s32.totalorder %s552, %s555
      %p561 = scmp.eq.s32.totalorder %s30, 0
      %p562 = por %p560, %p561
      %p563 = scmp.ne.s32.totalorder %s552, %s555
      %p564 = scmp.eq.s32.totalorder %s35, 3
      %p565 = por %p563, %p564
      %p566 = scmp.ne.s32.totalorder %s555, %s556
      %p567 = scmp.eq.s32.totalorder %s35, 0
      %p568 = por %p566, %p567
      %p569 = scmp.ne.s32.totalorder %s555, %s556
      %p570 = scmp.eq.s32.totalorder %s36, 3
      %p571 = por %p569, %p570
      %p573 = scmp.ne.s32.totalorder %s556, %s572
      %p574 = scmp.eq.s32.totalorder %s36, 0
      %p575 = por %p573, %p574
      %p576 = scmp.le.s32.totalorder 1, %s30
      %p577 = scmp.lt.s32.totalorder %s30, 5
      %p578 = pnand %p576, %p577
      %p579 = pneg %p578
      // Predicated region
      $region9: #{tpu_custom_call.1} parent=5 // pred_check
        _
      $region10: #{tpu_custom_call.1} parent=5 // pred_check_branch
        %581 = sbr.rel (%p578) target = $region12
      $region11: #{tpu_custom_call.1} parent=5 // pred_region
        %s582 = ssub.s32 %s30, 1
        // Predicated region
        $region13: #{tpu_custom_call.1} parent=11 // pred_check
          %p583 = pneg %p89
        $region14: #{tpu_custom_call.1} parent=11 // pred_check_branch
          %585 = sbr.rel (%p583) target = $region16
        $region15: #{tpu_custom_call.1} parent=11 // pred_region
          _
        $region16: #{tpu_custom_call.1} parent=11 // pred_fallthru
          _
        // Predicated region
        $region17: #{tpu_custom_call.1} parent=11 // pred_check
          %p586 = pneg %p292
        $region18: #{tpu_custom_call.1} parent=11 // pred_check_branch
          %588 = sbr.rel (%p586) target = $region20
        $region19: #{tpu_custom_call.1} parent=11 // pred_region
          %590 = vsyncadd [#allocation8], 0
          %s592 = sshll.u32 %s9, 4
          %s593 = int_to_ptr.vmem [resolvable:$true] %s592
          %595 = dma.vmem_to_smem %s593, 32, [#allocation6], [#allocation8]
        $region20: #{tpu_custom_call.1} parent=11 // pred_fallthru
          _
        // Predicated region
        $region21: #{tpu_custom_call.1} parent=11 // pred_check
          %p596 = pneg %p521
        $region22: #{tpu_custom_call.1} parent=11 // pred_check_branch
          %598 = sbr.rel (%p596) target = $region24
        $region23: #{tpu_custom_call.1} parent=11 // pred_region
          _
        $region24: #{tpu_custom_call.1} parent=11 // pred_fallthru
          _
        // Predicated region
        $region25: #{tpu_custom_call.1} parent=11 // pred_check
          %p599 = pneg %p542
        $region26: #{tpu_custom_call.1} parent=11 // pred_check_branch
          %601 = sbr.rel (%p599) target = $region28
        $region27: #{tpu_custom_call.1} parent=11 // pred_region
          _
        $region28: #{tpu_custom_call.1} parent=11 // pred_fallthru
          _
      $region12: #{tpu_custom_call.1} parent=5 // pred_fallthru
        _
      %p602 = scmp.lt.s32.totalorder %s30, 4
      // Predicated region
      $region29: #{tpu_custom_call.1} parent=5 // pred_check
        %p603 = pneg %p602
      $region30: #{tpu_custom_call.1} parent=5 // pred_check_branch
        %605 = sbr.rel (%p603) target = $region32
      $region31: #{tpu_custom_call.1} parent=5 // pred_region
        // Predicated region
        $region33: #{tpu_custom_call.1} parent=31 // pred_check
          %p606 = pneg %p62
        $region34: #{tpu_custom_call.1} parent=31 // pred_check_branch
          %608 = sbr.rel (%p606) target = $region36
        $region35: #{tpu_custom_call.1} parent=31 // pred_region
          %s609 = smul.u32 2, %s37
          %p610 = scmp.lt.s32.totalorder %s609, 3
          %s611 = scalar_select %p610, %s609, 3
          %s612 = smul.addr %s611, 8
          %s613 = scalar_lea.vmem %s0, %s612
          %s614 = smul.u32 2, %s37
        $region36: #{tpu_custom_call.1} parent=31 // pred_fallthru
          _
        // Predicated region
        $region37: #{tpu_custom_call.1} parent=31 // pred_check
          %p615 = pneg %p109
        $region38: #{tpu_custom_call.1} parent=31 // pred_check_branch
          %617 = sbr.rel (%p615) target = $region40
        $region39: #{tpu_custom_call.1} parent=31 // pred_region
          %s618 = smul.u32 2, %s37
          %p619 = scmp.lt.s32.totalorder %s618, 3
          %s620 = scalar_select %p619, %s618, 3
          %s621 = smul.addr %s620, 8
          %s622 = scalar_lea.vmem %s2, %s621
          %s623 = smul.u32 2, %s37
        $region40: #{tpu_custom_call.1} parent=31 // pred_fallthru
          _
        // Predicated region
        $region41: #{tpu_custom_call.1} parent=31 // pred_check
          %p624 = pneg %p135
        $region42: #{tpu_custom_call.1} parent=31 // pred_check_branch
          %626 = sbr.rel (%p624) target = $region44
        $region43: #{tpu_custom_call.1} parent=31 // pred_region
          %s627 = smul.u32 2, %s37
          %p628 = scmp.lt.s32.totalorder %s627, 3
          %s629 = scalar_select %p628, %s627, 3
          %s630 = smul.addr %s629, 8
          %s631 = scalar_lea.vmem %s3, %s630
          %s632 = smul.u32 2, %s37
        $region44: #{tpu_custom_call.1} parent=31 // pred_fallthru
          _
        // Predicated region
        $region45: #{tpu_custom_call.1} parent=31 // pred_check
          %p633 = pneg %p161
        $region46: #{tpu_custom_call.1} parent=31 // pred_check_branch
          %635 = sbr.rel (%p633) target = $region48
        $region47: #{tpu_custom_call.1} parent=31 // pred_region
          %s636 = smul.u32 2, %s37
          %p637 = scmp.lt.s32.totalorder %s636, 3
          %s638 = scalar_select %p637, %s636, 3
          %s639 = smul.addr %s638, 8
          %s640 = scalar_lea.vmem %s4, %s639
          %s641 = smul.u32 2, %s37
        $region48: #{tpu_custom_call.1} parent=31 // pred_fallthru
          _
        // Predicated region
        $region49: #{tpu_custom_call.1} parent=31 // pred_check
          %p642 = pneg %p187
        $region50: #{tpu_custom_call.1} parent=31 // pred_check_branch
          %644 = sbr.rel (%p642) target = $region52
        $region51: #{tpu_custom_call.1} parent=31 // pred_region
          %p645 = scmp.lt.s32.totalorder %s38, 1
          %s646 = scalar_select %p645, %s38, 1
          %s647 = scalar_lea.vmem %s5, %s646
        $region52: #{tpu_custom_call.1} parent=31 // pred_fallthru
          _
        // Predicated region
        $region53: #{tpu_custom_call.1} parent=31 // pred_check
          %p648 = pneg %p213
        $region54: #{tpu_custom_call.1} parent=31 // pred_check_branch
          %650 = sbr.rel (%p648) target = $region56
        $region55: #{tpu_custom_call.1} parent=31 // pred_region
          %p651 = scmp.lt.s32.totalorder %s38, 1
          %s652 = scalar_select %p651, %s38, 1
          %s653 = scalar_lea.vmem %s6, %s652
        $region56: #{tpu_custom_call.1} parent=31 // pred_fallthru
          _
        // Predicated region
        $region57: #{tpu_custom_call.1} parent=31 // pred_check
          %p654 = pneg %p239
        $region58: #{tpu_custom_call.1} parent=31 // pred_check_branch
          %656 = sbr.rel (%p654) target = $region60
        $region59: #{tpu_custom_call.1} parent=31 // pred_region
          %p657 = scmp.lt.s32.totalorder %s38, 1
          %s658 = scalar_select %p657, %s38, 1
          %s659 = smul.addr %s658, 12
          %s660 = smul.addr %s659, 4
          %s661 = scalar_lea.vmem %s7, %s660
        $region60: #{tpu_custom_call.1} parent=31 // pred_fallthru
          _
        // Predicated region
        $region61: #{tpu_custom_call.1} parent=31 // pred_check
          %p662 = pneg %p265
        $region62: #{tpu_custom_call.1} parent=31 // pred_check_branch
          %664 = sbr.rel (%p662) target = $region64
        $region63: #{tpu_custom_call.1} parent=31 // pred_region
          %p665 = scmp.lt.s32.totalorder %s38, 1
          %s666 = scalar_select %p665, %s38, 1
          %s667 = scalar_lea.vmem %s8, %s666
        $region64: #{tpu_custom_call.1} parent=31 // pred_fallthru
          _
        // Predicated region
        $region65: #{tpu_custom_call.1} parent=31 // pred_check
          %p668 = pneg %p312
        $region66: #{tpu_custom_call.1} parent=31 // pred_check_branch
          %670 = sbr.rel (%p668) target = $region68
        $region67: #{tpu_custom_call.1} parent=31 // pred_region
          %p671 = scmp.lt.s32.totalorder %s38, 1
          %s672 = scalar_select %p671, %s38, 1
          %s673 = smul.addr %s672, 4
          %s674 = smul.addr %s673, 4
          %s675 = scalar_lea.vmem %s10, %s674
        $region68: #{tpu_custom_call.1} parent=31 // pred_fallthru
          _
        // Predicated region
        $region69: #{tpu_custom_call.1} parent=31 // pred_check
          %p676 = pneg %p338
        $region70: #{tpu_custom_call.1} parent=31 // pred_check_branch
          %678 = sbr.rel (%p676) target = $region72
        $region71: #{tpu_custom_call.1} parent=31 // pred_region
          %p679 = scmp.lt.s32.totalorder %s38, 1
          %s680 = scalar_select %p679, %s38, 1
          %s681 = scalar_lea.vmem %s11, %s680
        $region72: #{tpu_custom_call.1} parent=31 // pred_fallthru
          _
        // Predicated region
        $region73: #{tpu_custom_call.1} parent=31 // pred_check
          %p682 = pneg %p364
        $region74: #{tpu_custom_call.1} parent=31 // pred_check_branch
          %684 = sbr.rel (%p682) target = $region76
        $region75: #{tpu_custom_call.1} parent=31 // pred_region
          %p685 = scmp.lt.s32.totalorder %s38, 1
          %s686 = scalar_select %p685, %s38, 1
          %s687 = scalar_lea.vmem %s12, %s686
        $region76: #{tpu_custom_call.1} parent=31 // pred_fallthru
          _
        // Predicated region
        $region77: #{tpu_custom_call.1} parent=31 // pred_check
          %p688 = pneg %p390
        $region78: #{tpu_custom_call.1} parent=31 // pred_check_branch
          %690 = sbr.rel (%p688) target = $region80
        $region79: #{tpu_custom_call.1} parent=31 // pred_region
          %p691 = scmp.lt.s32.totalorder %s38, 1
          %s692 = scalar_select %p691, %s38, 1
          %s693 = scalar_lea.vmem %s13, %s692
        $region80: #{tpu_custom_call.1} parent=31 // pred_fallthru
          _
        // Predicated region
        $region81: #{tpu_custom_call.1} parent=31 // pred_check
          %p694 = pneg %p416
        $region82: #{tpu_custom_call.1} parent=31 // pred_check_branch
          %696 = sbr.rel (%p694) target = $region84
        $region83: #{tpu_custom_call.1} parent=31 // pred_region
          %p697 = scmp.lt.s32.totalorder %s38, 1
          %s698 = scalar_select %p697, %s38, 1
          %s699 = smul.addr %s698, 64
          %s700 = smul.addr %s699, 4
          %s701 = scalar_lea.vmem %s14, %s700
        $region84: #{tpu_custom_call.1} parent=31 // pred_fallthru
          _
        // Predicated region
        $region85: #{tpu_custom_call.1} parent=31 // pred_check
          %p702 = pneg %p442
        $region86: #{tpu_custom_call.1} parent=31 // pred_check_branch
          %704 = sbr.rel (%p702) target = $region88
        $region87: #{tpu_custom_call.1} parent=31 // pred_region
          %p705 = scmp.lt.s32.totalorder %s38, 1
          %s706 = scalar_select %p705, %s38, 1
          %s707 = smul.addr %s706, 4
          %s708 = scalar_lea.vmem %s15, %s707
        $region88: #{tpu_custom_call.1} parent=31 // pred_fallthru
          _
        // Predicated region
        $region89: #{tpu_custom_call.1} parent=31 // pred_check
          %p709 = pneg %p468
        $region90: #{tpu_custom_call.1} parent=31 // pred_check_branch
          %711 = sbr.rel (%p709) target = $region92
        $region91: #{tpu_custom_call.1} parent=31 // pred_region
          %p712 = scmp.lt.s32.totalorder %s38, 1
          %s713 = scalar_select %p712, %s38, 1
          %s714 = smul.addr %s713, 16
          %s715 = smul.addr %s714, 4
          %s716 = scalar_lea.vmem %s16, %s715
        $region92: #{tpu_custom_call.1} parent=31 // pred_fallthru
          _
        // Predicated region
        $region93: #{tpu_custom_call.1} parent=31 // pred_check
          %p717 = pneg %p494
        $region94: #{tpu_custom_call.1} parent=31 // pred_check_branch
          %719 = sbr.rel (%p717) target = $region96
        $region95: #{tpu_custom_call.1} parent=31 // pred_region
          %p720 = scmp.lt.s32.totalorder %s38, 1
          %s721 = scalar_select %p720, %s38, 1
          %s722 = scalar_lea.vmem %s17, %s721
        $region96: #{tpu_custom_call.1} parent=31 // pred_fallthru
          _
      $region32: #{tpu_custom_call.1} parent=5 // pred_fallthru
        _
      %p723 = scmp.le.s32.totalorder 1, %s30
      %p724 = scmp.lt.s32.totalorder %s30, 5
      %p725 = pnand %p723, %p724
      %p726 = pneg %p725
      // Predicated region
      $region97: #{tpu_custom_call.1} parent=5 // pred_check
        _
      $region98: #{tpu_custom_call.1} parent=5 // pred_check_branch
        %728 = sbr.rel (%p725) target = $region100
      $region99: #{tpu_custom_call.1} parent=5 // pred_region
        %s729 = ssub.s32 %s30, 1
        // Predicated region
        $region101: #{tpu_custom_call.1} parent=99 // pred_check
          %p730 = pneg %p292
        $region102: #{tpu_custom_call.1} parent=99 // pred_check_branch
          %732 = sbr.rel (%p730) target = $region104
        $region103: #{tpu_custom_call.1} parent=99 // pred_region
          %734 = dma.done [#allocation8], 32
        $region104: #{tpu_custom_call.1} parent=99 // pred_fallthru
          _
        %735 = sfence
        %s736 = smul.u32 2, %s39
        %p737 = scmp.lt.s32.totalorder %s736, 3
        %s738 = scalar_select %p737, %s736, 3
        %s739 = smul.addr %s738, 8
        %s740 = scalar_lea.vmem %s0, %s739
        %p741 = pneg %p68
        %p742 = pneg %p65
        %p743 = pneg %p89
        %p744 = pneg %p86
        %s745 = smul.u32 2, %s39
        %p746 = scmp.lt.s32.totalorder %s745, 3
        %s747 = scalar_select %p746, %s745, 3
        %s748 = smul.addr %s747, 8
        %s749 = scalar_lea.vmem %s2, %s748
        %p750 = pneg %p115
        %p751 = pneg %p112
        %s752 = smul.u32 2, %s39
        %p753 = scmp.lt.s32.totalorder %s752, 3
        %s754 = scalar_select %p753, %s752, 3
        %s755 = smul.addr %s754, 8
        %s756 = scalar_lea.vmem %s3, %s755
        %p757 = pneg %p141
        %p758 = pneg %p138
        %s759 = smul.u32 2, %s39
        %p760 = scmp.lt.s32.totalorder %s759, 3
        %s761 = scalar_select %p760, %s759, 3
        %s762 = smul.addr %s761, 8
        %s763 = scalar_lea.vmem %s4, %s762
        %p764 = pneg %p167
        %p765 = pneg %p164
        %p766 = scmp.lt.s32.totalorder %s40, 1
        %s767 = scalar_select %p766, %s40, 1
        %s768 = scalar_lea.vmem %s5, %s767
        %p769 = pneg %p193
        %p770 = pneg %p190
        %p771 = scmp.lt.s32.totalorder %s40, 1
        %s772 = scalar_select %p771, %s40, 1
        %s773 = scalar_lea.vmem %s6, %s772
        %p774 = pneg %p219
        %p775 = pneg %p216
        %p776 = scmp.lt.s32.totalorder %s40, 1
        %s777 = scalar_select %p776, %s40, 1
        %s778 = smul.addr %s777, 12
        %s779 = smul.addr %s778, 4
        %s780 = scalar_lea.vmem %s7, %s779
        %p781 = pneg %p245
        %p782 = pneg %p242
        %p783 = scmp.lt.s32.totalorder %s40, 1
        %s784 = scalar_select %p783, %s40, 1
        %s785 = scalar_lea.vmem %s8, %s784
        %p786 = pneg %p271
        %p787 = pneg %p268
        %p788 = pneg %p292
        %p789 = pneg %p289
        %p790 = scmp.lt.s32.totalorder %s40, 1
        %s791 = scalar_select %p790, %s40, 1
        %s792 = smul.addr %s791, 4
        %s793 = smul.addr %s792, 4
        %s794 = scalar_lea.vmem %s10, %s793
        %p795 = pneg %p318
        %p796 = pneg %p315
        %p797 = scmp.lt.s32.totalorder %s40, 1
        %s798 = scalar_select %p797, %s40, 1
        %s799 = scalar_lea.vmem %s11, %s798
        %p800 = pneg %p344
        %p801 = pneg %p341
        %p802 = scmp.lt.s32.totalorder %s40, 1
        %s803 = scalar_select %p802, %s40, 1
        %s804 = scalar_lea.vmem %s12, %s803
        %p805 = pneg %p370
        %p806 = pneg %p367
        %p807 = scmp.lt.s32.totalorder %s40, 1
        %s808 = scalar_select %p807, %s40, 1
        %s809 = scalar_lea.vmem %s13, %s808
        %p810 = pneg %p396
        %p811 = pneg %p393
        %p812 = scmp.lt.s32.totalorder %s40, 1
        %s813 = scalar_select %p812, %s40, 1
        %s814 = smul.addr %s813, 64
        %s815 = smul.addr %s814, 4
        %s816 = scalar_lea.vmem %s14, %s815
        %p817 = pneg %p422
        %p818 = pneg %p419
        %p819 = scmp.lt.s32.totalorder %s40, 1
        %s820 = scalar_select %p819, %s40, 1
        %s821 = smul.addr %s820, 4
        %s822 = scalar_lea.vmem %s15, %s821
        %p823 = pneg %p448
        %p824 = pneg %p445
        %p825 = scmp.lt.s32.totalorder %s40, 1
        %s826 = scalar_select %p825, %s40, 1
        %s827 = smul.addr %s826, 16
        %s828 = smul.addr %s827, 4
        %s829 = scalar_lea.vmem %s16, %s828
        %p830 = pneg %p474
        %p831 = pneg %p471
        %p832 = scmp.lt.s32.totalorder %s40, 1
        %s833 = scalar_select %p832, %s40, 1
        %s834 = scalar_lea.vmem %s17, %s833
        %p835 = pneg %p500
        %p836 = pneg %p497
        %p837 = pneg %p521
        %p838 = pneg %p518
        %p839 = pneg %p542
        %p840 = pneg %p539
        %p841 = pneg %p568
        %p842 = pneg %p565
        %s843 = sand.u32 %s555, 1
        %s844 = scalar_lea.sflag [#allocation7], %s843
        %s845 = sand.u32 %s555, 1
        %s846 = smul.addr %s845, 16
        %s847 = scalar_lea.vmem [#allocation9], %s846
        %s848 = smul.u32 2, %s39
        %p849 = scmp.lt.s32.totalorder %s848, 3
        %s850 = scalar_select %p849, %s848, 3
        %s851 = smul.addr %s850, 8
        %s852 = scalar_lea.vmem %s0, %s851
        %s853 = smul.u32 2, %s39
        %s854 = smul.u32 2, %s39
        %p855 = scmp.lt.s32.totalorder %s854, 3
        %s856 = scalar_select %p855, %s854, 3
        %s857 = smul.addr %s856, 8
        %s858 = scalar_lea.vmem %s2, %s857
        %s859 = smul.u32 2, %s39
        %s860 = smul.u32 2, %s39
        %p861 = scmp.lt.s32.totalorder %s860, 3
        %s862 = scalar_select %p861, %s860, 3
        %s863 = smul.addr %s862, 8
        %s864 = scalar_lea.vmem %s3, %s863
        %s865 = smul.u32 2, %s39
        %s866 = smul.u32 2, %s39
        %p867 = scmp.lt.s32.totalorder %s866, 3
        %s868 = scalar_select %p867, %s866, 3
        %s869 = smul.addr %s868, 8
        %s870 = scalar_lea.vmem %s4, %s869
        %s871 = smul.u32 2, %s39
        %p872 = scmp.lt.s32.totalorder %s40, 1
        %s873 = scalar_select %p872, %s40, 1
        %s874 = scalar_lea.vmem %s5, %s873
        %p875 = scmp.lt.s32.totalorder %s40, 1
        %s876 = scalar_select %p875, %s40, 1
        %s877 = scalar_lea.vmem %s6, %s876
        %p878 = scmp.lt.s32.totalorder %s40, 1
        %s879 = scalar_select %p878, %s40, 1
        %s880 = smul.addr %s879, 12
        %s881 = smul.addr %s880, 4
        %s882 = scalar_lea.vmem %s7, %s881
        %p883 = scmp.lt.s32.totalorder %s40, 1
        %s884 = scalar_select %p883, %s40, 1
        %s885 = scalar_lea.vmem %s8, %s884
        %p886 = scmp.lt.s32.totalorder %s40, 1
        %s887 = scalar_select %p886, %s40, 1
        %s888 = smul.addr %s887, 4
        %s889 = smul.addr %s888, 4
        %s890 = scalar_lea.vmem %s10, %s889
        %p891 = scmp.lt.s32.totalorder %s40, 1
        %s892 = scalar_select %p891, %s40, 1
        %s893 = scalar_lea.vmem %s11, %s892
        %p894 = scmp.lt.s32.totalorder %s40, 1
        %s895 = scalar_select %p894, %s40, 1
        %s896 = scalar_lea.vmem %s12, %s895
        %p897 = scmp.lt.s32.totalorder %s40, 1
        %s898 = scalar_select %p897, %s40, 1
        %s899 = scalar_lea.vmem %s13, %s898
        %p900 = scmp.lt.s32.totalorder %s40, 1
        %s901 = scalar_select %p900, %s40, 1
        %s902 = smul.addr %s901, 64
        %s903 = smul.addr %s902, 4
        %s904 = scalar_lea.vmem %s14, %s903
        %p905 = scmp.lt.s32.totalorder %s40, 1
        %s906 = scalar_select %p905, %s40, 1
        %s907 = smul.addr %s906, 4
        %s908 = scalar_lea.vmem %s15, %s907
        %p909 = scmp.lt.s32.totalorder %s40, 1
        %s910 = scalar_select %p909, %s40, 1
        %s911 = smul.addr %s910, 16
        %s912 = smul.addr %s911, 4
        %s913 = scalar_lea.vmem %s16, %s912
        %p914 = scmp.lt.s32.totalorder %s40, 1
        %s915 = scalar_select %p914, %s40, 1
        %s916 = scalar_lea.vmem %s17, %s915
        %s917 = smul.u32 2, %s39
        %p919 = scmp.eq.s32.totalorder %s40, 0
        // Predicated region
        $region105: #{tpu_custom_call.1} parent=99 // pred_check
          %p920 = pneg %p919
        $region106: #{tpu_custom_call.1} parent=99 // pred_check_branch
          %922 = sbr.rel (%p920) target = $region108
        $region107: #{tpu_custom_call.1} parent=99 // pred_region
          %v923 = vld [vmem:[%s852] sm:$0xff]
          %v924 = vld [vmem:[%s852 + $0x8] sm:$0xff]
          %v925 = vmul.f32 %v923, 5.656854
          %v926 = vmul.f32 %v924, 5.656854
          %v927 = vld [vmem:[%s1] sm:$0xff]
          %v928 = vadd.f32 %v925, %v927
          %v929 = vadd.f32 %v926, %v927
          %vm930 = vcmask 261120
          %931 = vst.msk [vmem:[#allocation2] sm:$0xff] %vm930, %v928
          %932 = vst.msk [vmem:[#allocation2 + $0x8] sm:$0xff] %vm930, %v929
          %v933 = vld [vmem:[%s858] sm:$0xff]
          %v934 = vld [vmem:[%s858 + $0x8] sm:$0xff]
          %v935 = vadd.f32 %v933, 2.7182817
          %v936 = vadd.f32 %v934, 2.7182817
          %v937 = vlog2.pop %v935
          %v938 = vmul.f32 %v937, 0.6931472
          %v939 = vlog2.pop %v936
          %v940 = vmul.f32 %v939, 0.6931472
          %v941 = vrcp.pop %v938
          %v942 = vmul.f32 %v938, %v941
          %v943 = vsub.f32 1.0, %v942
          %v944 = vmul.f32 %v941, %v943
          %v945 = vadd.f32 %v941, %v944
          %vm946 = vweird.f32 %v938
          %vm947 = vweird.f32 %v941
          %vm948 = vmor %vm946, %vm947
          %v949 = vsel %vm948, %v941, %v945
          %v950 = vand.u32 2147483647, %v938
          %vm951 = vcmp.eq.f32.partialorder %v950, 8.507059e+37
          %v952 = vand.u32 %v938, 2147483648
          %v953 = vor.u32 1.1754944e-38, %v952
          %v954 = vsel %vm951, %v953, %v949
          %v955 = vmul.f32 1.0, %v954
          %v956 = vrcp.pop %v940
          %v957 = vmul.f32 %v940, %v956
          %v958 = vsub.f32 1.0, %v957
          %v959 = vmul.f32 %v956, %v958
          %v960 = vadd.f32 %v956, %v959
          %vm961 = vweird.f32 %v940
          %vm962 = vweird.f32 %v956
          %vm963 = vmor %vm961, %vm962
          %v964 = vsel %vm963, %v956, %v960
          %v965 = vand.u32 2147483647, %v940
          %vm966 = vcmp.eq.f32.partialorder %v965, 8.507059e+37
          %v967 = vand.u32 %v940, 2147483648
          %v968 = vor.u32 1.1754944e-38, %v967
          %v969 = vsel %vm966, %v968, %v964
          %v970 = vmul.f32 1.0, %v969
          %vm971 = vcmask 64512
          %972 = vst.msk [vmem:[#allocation4] sm:$0xff] %vm971, %v955
          %973 = vst.msk [vmem:[#allocation4 + $0x8] sm:$0xff] %vm971, %v970
          %v974 = vld [vmem:[%s864] sm:$0xff]
          %v975 = vld [vmem:[%s864 + $0x8] sm:$0xff]
          %v976 = vadd.f32 %v974, 2.7182817
          %v977 = vadd.f32 %v975, 2.7182817
          %v978 = vlog2.pop %v976
          %v979 = vmul.f32 %v978, 0.6931472
          %v980 = vlog2.pop %v977
          %v981 = vmul.f32 %v980, 0.6931472
          %v982 = vrcp.pop %v979
          %v983 = vmul.f32 %v979, %v982
          %v984 = vsub.f32 1.0, %v983
          %v985 = vmul.f32 %v982, %v984
          %v986 = vadd.f32 %v982, %v985
          %vm987 = vweird.f32 %v979
          %vm988 = vweird.f32 %v982
          %vm989 = vmor %vm987, %vm988
          %v990 = vsel %vm989, %v982, %v986
          %v991 = vand.u32 2147483647, %v979
          %vm992 = vcmp.eq.f32.partialorder %v991, 8.507059e+37
          %v993 = vand.u32 %v979, 2147483648
          %v994 = vor.u32 1.1754944e-38, %v993
          %v995 = vsel %vm992, %v994, %v990
          %v996 = vmul.f32 1.0, %v995
          %v997 = vrcp.pop %v981
          %v998 = vmul.f32 %v981, %v997
          %v999 = vsub.f32 1.0, %v998
          %v1000 = vmul.f32 %v997, %v999
          %v1001 = vadd.f32 %v997, %v1000
          %vm1002 = vweird.f32 %v981
          %vm1003 = vweird.f32 %v997
          %vm1004 = vmor %vm1002, %vm1003
          %v1005 = vsel %vm1004, %v997, %v1001
          %v1006 = vand.u32 2147483647, %v981
          %vm1007 = vcmp.eq.f32.partialorder %v1006, 8.507059e+37
          %v1008 = vand.u32 %v981, 2147483648
          %v1009 = vor.u32 1.1754944e-38, %v1008
          %v1010 = vsel %vm1007, %v1009, %v1005
          %v1011 = vmul.f32 1.0, %v1010
          %1012 = vst.msk [vmem:[#allocation5] sm:$0xff] %vm971, %v996
          %1013 = vst.msk [vmem:[#allocation5 + $0x8] sm:$0xff] %vm971, %v1011
        $region108: #{tpu_custom_call.1} parent=99 // pred_fallthru
          _
        %v1014 = vld [vmem:[#allocation2] sm:$0xff]
        %v1015 = vld [vmem:[#allocation2 + $0x8] sm:$0xff]
        %s1016 = smul.u32 %s40, 128
        %s1017 = sld [smem:[#allocation6 + %s1016]]
        %s1018 = sadd.s32 %s1016, 1
        %s1019 = sld [smem:[#allocation6 + %s1018]]
        %s1020 = sadd.s32 %s1016, 2
        %s1021 = sld [smem:[#allocation6 + %s1020]]
        %v1022 = vld [vmem:[%s874] sm:$0x1]
        %v1023 = vld [vmem:[%s877] sm:$0x1]
        %vm1024 = vcmask 261120
        %v1025 = vsel %vm1024, %v1014, 0.0
        %1026 = vadd.xlane.f32.xlu0 %v1025
        %v1027 = vpop.xlane.xlu0 %1026
        %v1028 = vsel %vm1024, %v1015, 0.0
        %1029 = vadd.xlane.f32.xlu0 %v1028
        %v1030 = vpop.xlane.xlu0 %1029
        %v1031 = vrcp.pop 32.0
        %v1032 = vmul.f32 32.0, %v1031
        %v1033 = vsub.f32 1.0, %v1032
        %v1034 = vmul.f32 %v1031, %v1033
        %v1035 = vadd.f32 %v1031, %v1034
        %vm1036 = vweird.f32 %v1031
        %v1037 = vsel %vm1036, %v1031, %v1035
        %v1038 = vmul.f32 %v1027, %v1037
        %v1039 = vmul.f32 %v1030, %v1037
        %v1040 = vsub.f32 %v1014, %v1038
        %v1041 = vsub.f32 %v1015, %v1039
        %v1042 = vmul.f32 %v1040, %v1040
        %v1043 = vmul.f32 %v1041, %v1041
        %v1044 = vsel %vm1024, %v1042, 0.0
        %1045 = vadd.xlane.f32.xlu0 %v1044
        %v1046 = vpop.xlane.xlu0 %1045
        %v1047 = vsel %vm1024, %v1043, 0.0
        %1048 = vadd.xlane.f32.xlu0 %v1047
        %v1049 = vpop.xlane.xlu0 %1048
        %v1050 = vrcp.pop 31.0
        %v1051 = vmul.f32 31.0, %v1050
        %v1052 = vsub.f32 1.0, %v1051
        %v1053 = vmul.f32 %v1050, %v1052
        %v1054 = vadd.f32 %v1050, %v1053
        %vm1055 = vweird.f32 %v1050
        %v1056 = vsel %vm1055, %v1050, %v1054
        %v1057 = vmul.f32 %v1046, %v1056
        %v1058 = vmul.f32 %v1049, %v1056
        %v1059 = vrsqrt.pop %v1057
        %v1060 = vmul.f32 %v1059, %v1057
        %v1061 = vmul.f32 %v1060, %v1059
        %v1062 = vmul.f32 0.5, %v1061
        %v1063 = vsub.f32 1.5, %v1062
        %v1064 = vmul.f32 %v1059, %v1063
        %v1065 = vmul.f32 %v1057, %v1064
        %vm1066 = vcmp.eq.f32.partialorder %v1057, inf
        %v1067 = vsel %vm1066, %v1057, %v1065
        %vm1068 = vcmp.eq.f32.partialorder %v1057, 0.0
        %v1069 = vand.u32 %v1057, 2147483648
        %v1070 = vsel %vm1068, %v1069, %v1067
        %v1071 = vrsqrt.pop %v1058
        %v1072 = vmul.f32 %v1071, %v1058
        %v1073 = vmul.f32 %v1072, %v1071
        %v1074 = vmul.f32 0.5, %v1073
        %v1075 = vsub.f32 1.5, %v1074
        %v1076 = vmul.f32 %v1071, %v1075
        %v1077 = vmul.f32 %v1058, %v1076
        %vm1078 = vcmp.eq.f32.partialorder %v1058, inf
        %v1079 = vsel %vm1078, %v1058, %v1077
        %vm1080 = vcmp.eq.f32.partialorder %v1058, 0.0
        %v1081 = vand.u32 %v1058, 2147483648
        %v1082 = vsel %vm1080, %v1081, %v1079
        %v1083 = vadd.f32 %v1070, 1e-06
        %v1084 = vadd.f32 %v1082, 1e-06
        %v1085 = vrcp.pop %v1083
        %v1086 = vrcp.pop %v1084
        %v1088 = vperm.slane %v1022, 0
        %v1090 = vmul.f32 %v1088, %v1040
        %v1091 = vmul.f32 %v1088, %v1041
        %v1092 = vmul.f32 %v1090, %v1085
        %v1093 = vmul.f32 %v1091, %v1086
        %v1095 = vperm.slane %v1023, 0
        %v1097 = vadd.f32 %v1092, %v1095
        %v1098 = vadd.f32 %v1093, %v1095
        %v1099 = vpack.c.bf16 %v1098, %v1097
        %v1100 = vld [vmem:[%s882] sm:$0xf]
        %v1101 = vld [vmem:[%s882 + $0x4] sm:$0xf]
        %v1102 = vld [vmem:[%s882 + $0x8] sm:$0xf]
        %v1103 = vld [vmem:[%s882 + $0xc] sm:$0xf]
        %v1104 = vld [vmem:[%s882 + $0x10] sm:$0xf]
        %v1105 = vld [vmem:[%s882 + $0x14] sm:$0xf]
        %v1106 = vld [vmem:[%s882 + $0x18] sm:$0xf]
        %v1107 = vld [vmem:[%s882 + $0x1c] sm:$0xf]
        %v1108 = vld [vmem:[%s882 + $0x20] sm:$0xf]
        %v1109 = vld [vmem:[%s882 + $0x24] sm:$0xf]
        %v1110 = vld [vmem:[%s882 + $0x28] sm:$0xf]
        %v1111 = vld [vmem:[%s882 + $0x2c] sm:$0xf]
        %v1112 = vld [vmem:[%s885] sm:$0x1]
        %v1114 = vperm.slane %v1112, 0
        %v1128 = vunpack.c.l.b16 %v1100
        %v1129 = vunpack.c.l.b16 %v1101
        %v1130 = vunpack.c.l.b16 %v1102
        %v1131 = vunpack.c.l.b16 %v1103
        %v1132 = vunpack.c.l.b16 %v1104
        %v1133 = vunpack.c.l.b16 %v1105
        %v1134 = vunpack.c.l.b16 %v1106
        %v1135 = vunpack.c.l.b16 %v1107
        %v1136 = vunpack.c.l.b16 %v1108
        %v1137 = vunpack.c.l.b16 %v1109
        %v1138 = vunpack.c.l.b16 %v1110
        %v1139 = vunpack.c.l.b16 %v1111
        %v1140 = vpack.c.b16 %v1129, %v1128
        %v1141 = vpack.c.b16 %v1131, %v1130
        %v1142 = vpack.c.b16 %v1133, %v1132
        %v1143 = vpack.c.b16 %v1135, %v1134
        %v1144 = vpack.c.b16 %v1137, %v1136
        %v1145 = vpack.c.b16 %v1139, %v1138
        %v1147 = vsel %vm1024, %v1099, 0
        %v1150 = vsel %vm1024, %v1140, 0
        %v1153 = vsel %vm1024, %v1141, 0
        %v1156 = vsel %vm1024, %v1142, 0
        %v1159 = vsel %vm1024, %v1143, 0
        %v1162 = vsel %vm1024, %v1144, 0
        %v1165 = vsel %vm1024, %v1145, 0
        %1167 = vmatpush.bf16.xpose.msra.mxu0 0
        %1168 = vmatpush.bf16.xpose.msra.mxu0 0
        %1169 = vmatpush.bf16.xpose.msra.mxu0 %v1165
        %1170 = vmatpush.bf16.xpose.msra.mxu0 %v1162
        %1171 = vmatpush.bf16.xpose.msra.mxu0 %v1159
        %1172 = vmatpush.bf16.xpose.msra.mxu0 %v1156
        %1173 = vmatpush.bf16.xpose.msra.mxu0 %v1153
        %1174 = vmatpush.bf16.xpose.msra.mxu0 %v1150
        %1175 = vmatmul.bf16.gmra.mxu0 %v1147
        %v1176 = vpop.f32.mrf.mxu0
        %v1177 = vadd.f32 %v1114, %v1176
        %v1178 = vpop.f32.mrf.mxu0
        %v1179 = vadd.f32 %v1114, %v1178
        %1180 = vdwg.mxu0
        %v1181 = vld [vmem:[#allocation4] sm:$0xff]
        %v1182 = vstv %s1017
        %v1183 = vmul.f32 %v1181, %v1182
        %v1184 = vld [vmem:[#allocation5] sm:$0xff]
        %v1185 = vstv %s1019
        %v1186 = vmul.f32 %v1184, %v1185
        %v1187 = vadd.f32 %v1183, %v1186
        %v1188 = vstv %s1021
        %v1189 = vadd.f32 %v1187, %v1188
        %v1190 = vld [vmem:[%s870] sm:$0xff]
        %v1191 = vpack.c.bf16 %v1177, %v1177
        %1193 = vrot.lane.b32.xlu0 %v1191, 96
        %v1194 = vpop.permute.xlu0 %1193
        %vm1195 = vcmask 31744
        %v1197 = vsel %vm1195, %v1191, 0
        %v1200 = vsel %vm1195, %v1194, 0
        %1202 = vmatpush.bf16.xpose.msra.mxu0 0
        %1203 = vmatpush.bf16.xpose.msra.mxu0 0
        %1204 = vmatpush.bf16.xpose.msra.mxu0 0
        %1205 = vmatpush.bf16.xpose.msra.mxu0 0
        %1206 = vmatpush.bf16.xpose.msra.mxu0 0
        %1207 = vmatpush.bf16.xpose.msra.mxu0 0
        %1208 = vmatpush.bf16.xpose.msra.mxu0 0
        %1209 = vmatpush.bf16.xpose.msra.mxu0 %v1200
        %1210 = vmatmul.bf16.gmra.mxu0 %v1197
        %v1211 = vpop.f32.mrf.mxu0
        %v1212 = vadd.f32 0.0, %v1211
        %v1213 = vpop.f32.mrf.mxu0
        %1214 = vdwg.mxu0
        %v1215 = vmul.f32 %v1212, 0.5
        %v1216 = vadd.f32 %v1215, %v1189
        %vm1217 = vcmp.eq.f32.partialorder %v1190, 0.0
        %v1218 = vsel %vm1217, -1e+09, %v1216
        %vm1219 = vcmask 64512
        %v1220 = vsel %vm1219, %v1218, -inf
        %1221 = vmax.xlane.f32.xlu0 %v1220
        %v1222 = vpop.xlane.xlu0 %1221
        %v1223 = vsub.f32 %v1218, %v1222
        %v1224 = vmul.f32 %v1223, 1.442695
        %v1225 = vpow.pop %v1224
        %v1226 = vsel %vm1219, %v1225, 0.0
        %1227 = vadd.xlane.f32.xlu0 %v1226
        %v1228 = vpop.xlane.xlu0 %1227
        %v1229 = vrcp.pop %v1228
        %v1230 = vmul.f32 %v1225, %v1229
        %v1231 = vpack.c.bf16 %v1230, %v1230
        %1232 = vrot.lane.b32.xlu0 %v1191, 64
        %v1233 = vpop.permute.xlu0 %1232
        %v1235 = vsel %vm1219, %v1231, 0
        %vm1237 = vcmask 1043456
        %v1239 = vsel %vm1237, %v1233, 0
        %1241 = vmatpush.bf16.msra.mxu0 0
        %1242 = vmatpush.bf16.msra.mxu0 0
        %1243 = vmatpush.bf16.msra.mxu0 0
        %1244 = vmatpush.bf16.msra.mxu0 0
        %1245 = vmatpush.bf16.msra.mxu0 0
        %1246 = vmatpush.bf16.msra.mxu0 0
        %1247 = vmatpush.bf16.msra.mxu0 0
        %1248 = vmatpush.bf16.msra.mxu0 %v1239
        %1249 = vmatmul.bf16.gmra.mxu0 %v1235
        %v1250 = vpop.f32.mrf.mxu0
        %v1251 = vadd.f32 0.0, %v1250
        %v1252 = vpop.f32.mrf.mxu0
        %1253 = vdwg.mxu0
        %1254 = vst.msk [vmem:[#allocation3] sm:$0xff] %vm1195, %v1251
        %1255 = vrot.lane.b32.xlu0 %v1191, 124
        %v1256 = vpop.permute.xlu0 %1255
        %1257 = vrot.lane.b32.xlu0 %v1191, 92
        %v1258 = vpop.permute.xlu0 %1257
        %v1260 = vsel %vm1195, %v1256, 0
        %v1263 = vsel %vm1195, %v1258, 0
        %1265 = vmatpush.bf16.xpose.msra.mxu0 0
        %1266 = vmatpush.bf16.xpose.msra.mxu0 0
        %1267 = vmatpush.bf16.xpose.msra.mxu0 0
        %1268 = vmatpush.bf16.xpose.msra.mxu0 0
        %1269 = vmatpush.bf16.xpose.msra.mxu0 0
        %1270 = vmatpush.bf16.xpose.msra.mxu0 0
        %1271 = vmatpush.bf16.xpose.msra.mxu0 0
        %1272 = vmatpush.bf16.xpose.msra.mxu0 %v1263
        %1273 = vmatmul.bf16.gmra.mxu0 %v1260
        %v1274 = vpop.f32.mrf.mxu0
        %v1275 = vadd.f32 0.0, %v1274
        %v1276 = vpop.f32.mrf.mxu0
        %1277 = vdwg.mxu0
        %v1278 = vmul.f32 %v1275, 0.5
        %v1279 = vadd.f32 %v1278, %v1189
        %v1280 = vsel %vm1217, -1e+09, %v1279
        %v1281 = vsel %vm1219, %v1280, -inf
        %1282 = vmax.xlane.f32.xlu0 %v1281
        %v1283 = vpop.xlane.xlu0 %1282
        %v1284 = vsub.f32 %v1280, %v1283
        %v1285 = vmul.f32 %v1284, 1.442695
        %v1286 = vpow.pop %v1285
        %v1287 = vsel %vm1219, %v1286, 0.0
        %1288 = vadd.xlane.f32.xlu0 %v1287
        %v1289 = vpop.xlane.xlu0 %1288
        %v1290 = vrcp.pop %v1289
        %v1291 = vmul.f32 %v1286, %v1290
        %v1292 = vpack.c.bf16 %v1291, %v1291
        %1293 = vrot.lane.b32.xlu0 %v1191, 60
        %v1294 = vpop.permute.xlu0 %1293
        %v1296 = vsel %vm1219, %v1292, 0
        %v1299 = vsel %vm1237, %v1294, 0
        %1301 = vmatpush.bf16.msra.mxu0 0
        %1302 = vmatpush.bf16.msra.mxu0 0
        %1303 = vmatpush.bf16.msra.mxu0 0
        %1304 = vmatpush.bf16.msra.mxu0 0
        %1305 = vmatpush.bf16.msra.mxu0 0
        %1306 = vmatpush.bf16.msra.mxu0 0
        %1307 = vmatpush.bf16.msra.mxu0 0
        %1308 = vmatpush.bf16.msra.mxu0 %v1299
        %1309 = vmatmul.bf16.gmra.mxu0 %v1296
        %v1310 = vpop.f32.mrf.mxu0
        %v1311 = vadd.f32 0.0, %v1310
        %v1312 = vpop.f32.mrf.mxu0
        %1313 = vdwg.mxu0
        %1315 = vrot.lane.b32.xlu0 %v1311, 4
        %v1316 = vpop.permute.xlu0 %1315
        %vm1318 = vcmask 64544
        %1319 = vst.msk [vmem:[#allocation3] sm:$0xff] %vm1318, %v1316
        %1320 = vrot.lane.b32.xlu0 %v1191, 120
        %v1321 = vpop.permute.xlu0 %1320
        %1322 = vrot.lane.b32.xlu0 %v1191, 88
        %v1323 = vpop.permute.xlu0 %1322
        %v1325 = vsel %vm1195, %v1321, 0
        %v1328 = vsel %vm1195, %v1323, 0
        %1330 = vmatpush.bf16.xpose.msra.mxu0 0
        %1331 = vmatpush.bf16.xpose.msra.mxu0 0
        %1332 = vmatpush.bf16.xpose.msra.mxu0 0
        %1333 = vmatpush.bf16.xpose.msra.mxu0 0
        %1334 = vmatpush.bf16.xpose.msra.mxu0 0
        %1335 = vmatpush.bf16.xpose.msra.mxu0 0
        %1336 = vmatpush.bf16.xpose.msra.mxu0 0
        %1337 = vmatpush.bf16.xpose.msra.mxu0 %v1328
        %1338 = vmatmul.bf16.gmra.mxu0 %v1325
        %v1339 = vpop.f32.mrf.mxu0
        %v1340 = vadd.f32 0.0, %v1339
        %v1341 = vpop.f32.mrf.mxu0
        %1342 = vdwg.mxu0
        %v1343 = vmul.f32 %v1340, 0.5
        %v1344 = vadd.f32 %v1343, %v1189
        %v1345 = vsel %vm1217, -1e+09, %v1344
        %v1346 = vsel %vm1219, %v1345, -inf
        %1347 = vmax.xlane.f32.xlu0 %v1346
        %v1348 = vpop.xlane.xlu0 %1347
        %v1349 = vsub.f32 %v1345, %v1348
        %v1350 = vmul.f32 %v1349, 1.442695
        %v1351 = vpow.pop %v1350
        %v1352 = vsel %vm1219, %v1351, 0.0
        %1353 = vadd.xlane.f32.xlu0 %v1352
        %v1354 = vpop.xlane.xlu0 %1353
        %v1355 = vrcp.pop %v1354
        %v1356 = vmul.f32 %v1351, %v1355
        %v1357 = vpack.c.bf16 %v1356, %v1356
        %1358 = vrot.lane.b32.xlu0 %v1191, 56
        %v1359 = vpop.permute.xlu0 %1358
        %v1361 = vsel %vm1219, %v1357, 0
        %v1364 = vsel %vm1237, %v1359, 0
        %1366 = vmatpush.bf16.msra.mxu0 0
        %1367 = vmatpush.bf16.msra.mxu0 0
        %1368 = vmatpush.bf16.msra.mxu0 0
        %1369 = vmatpush.bf16.msra.mxu0 0
        %1370 = vmatpush.bf16.msra.mxu0 0
        %1371 = vmatpush.bf16.msra.mxu0 0
        %1372 = vmatpush.bf16.msra.mxu0 0
        %1373 = vmatpush.bf16.msra.mxu0 %v1364
        %1374 = vmatmul.bf16.gmra.mxu0 %v1361
        %v1375 = vpop.f32.mrf.mxu0
        %v1376 = vadd.f32 0.0, %v1375
        %v1377 = vpop.f32.mrf.mxu0
        %1378 = vdwg.mxu0
        %1380 = vrot.lane.b32.xlu0 %v1376, 8
        %v1381 = vpop.permute.xlu0 %1380
        %vm1383 = vcmask 97344
        %1384 = vst.msk [vmem:[#allocation3] sm:$0xff] %vm1383, %v1381
        %1385 = vrot.lane.b32.xlu0 %v1191, 116
        %v1386 = vpop.permute.xlu0 %1385
        %1387 = vrot.lane.b32.xlu0 %v1191, 84
        %v1388 = vpop.permute.xlu0 %1387
        %v1390 = vsel %vm1195, %v1386, 0
        %v1393 = vsel %vm1195, %v1388, 0
        %1395 = vmatpush.bf16.xpose.msra.mxu0 0
        %1396 = vmatpush.bf16.xpose.msra.mxu0 0
        %1397 = vmatpush.bf16.xpose.msra.mxu0 0
        %1398 = vmatpush.bf16.xpose.msra.mxu0 0
        %1399 = vmatpush.bf16.xpose.msra.mxu0 0
        %1400 = vmatpush.bf16.xpose.msra.mxu0 0
        %1401 = vmatpush.bf16.xpose.msra.mxu0 0
        %1402 = vmatpush.bf16.xpose.msra.mxu0 %v1393
        %1403 = vmatmul.bf16.gmra.mxu0 %v1390
        %v1404 = vpop.f32.mrf.mxu0
        %v1405 = vadd.f32 0.0, %v1404
        %v1406 = vpop.f32.mrf.mxu0
        %1407 = vdwg.mxu0
        %v1408 = vmul.f32 %v1405, 0.5
        %v1409 = vadd.f32 %v1408, %v1189
        %v1410 = vsel %vm1217, -1e+09, %v1409
        %v1411 = vsel %vm1219, %v1410, -inf
        %1412 = vmax.xlane.f32.xlu0 %v1411
        %v1413 = vpop.xlane.xlu0 %1412
        %v1414 = vsub.f32 %v1410, %v1413
        %v1415 = vmul.f32 %v1414, 1.442695
        %v1416 = vpow.pop %v1415
        %v1417 = vsel %vm1219, %v1416, 0.0
        %1418 = vadd.xlane.f32.xlu0 %v1417
        %v1419 = vpop.xlane.xlu0 %1418
        %v1420 = vrcp.pop %v1419
        %v1421 = vmul.f32 %v1416, %v1420
        %v1422 = vpack.c.bf16 %v1421, %v1421
        %1423 = vrot.lane.b32.xlu0 %v1191, 52
        %v1424 = vpop.permute.xlu0 %1423
        %v1426 = vsel %vm1219, %v1422, 0
        %v1429 = vsel %vm1237, %v1424, 0
        %1431 = vmatpush.bf16.msra.mxu0 0
        %1432 = vmatpush.bf16.msra.mxu0 0
        %1433 = vmatpush.bf16.msra.mxu0 0
        %1434 = vmatpush.bf16.msra.mxu0 0
        %1435 = vmatpush.bf16.msra.mxu0 0
        %1436 = vmatpush.bf16.msra.mxu0 0
        %1437 = vmatpush.bf16.msra.mxu0 0
        %1438 = vmatpush.bf16.msra.mxu0 %v1429
        %1439 = vmatmul.bf16.gmra.mxu0 %v1426
        %v1440 = vpop.f32.mrf.mxu0
        %v1441 = vadd.f32 0.0, %v1440
        %v1442 = vpop.f32.mrf.mxu0
        %1443 = vdwg.mxu0
        %1445 = vrot.lane.b32.xlu0 %v1441, 12
        %v1446 = vpop.permute.xlu0 %1445
        %vm1448 = vcmask 130144
        %1449 = vst.msk [vmem:[#allocation3] sm:$0xff] %vm1448, %v1446
        %1450 = vrot.lane.b32.xlu0 %v1191, 112
        %v1451 = vpop.permute.xlu0 %1450
        %1452 = vrot.lane.b32.xlu0 %v1191, 80
        %v1453 = vpop.permute.xlu0 %1452
        %v1455 = vsel %vm1195, %v1451, 0
        %v1458 = vsel %vm1195, %v1453, 0
        %1460 = vmatpush.bf16.xpose.msra.mxu0 0
        %1461 = vmatpush.bf16.xpose.msra.mxu0 0
        %1462 = vmatpush.bf16.xpose.msra.mxu0 0
        %1463 = vmatpush.bf16.xpose.msra.mxu0 0
        %1464 = vmatpush.bf16.xpose.msra.mxu0 0
        %1465 = vmatpush.bf16.xpose.msra.mxu0 0
        %1466 = vmatpush.bf16.xpose.msra.mxu0 0
        %1467 = vmatpush.bf16.xpose.msra.mxu0 %v1458
        %1468 = vmatmul.bf16.gmra.mxu0 %v1455
        %v1469 = vpop.f32.mrf.mxu0
        %v1470 = vadd.f32 0.0, %v1469
        %v1471 = vpop.f32.mrf.mxu0
        %1472 = vdwg.mxu0
        %v1473 = vmul.f32 %v1470, 0.5
        %v1474 = vadd.f32 %v1473, %v1189
        %v1475 = vsel %vm1217, -1e+09, %v1474
        %v1476 = vsel %vm1219, %v1475, -inf
        %1477 = vmax.xlane.f32.xlu0 %v1476
        %v1478 = vpop.xlane.xlu0 %1477
        %v1479 = vsub.f32 %v1475, %v1478
        %v1480 = vmul.f32 %v1479, 1.442695
        %v1481 = vpow.pop %v1480
        %v1482 = vsel %vm1219, %v1481, 0.0
        %1483 = vadd.xlane.f32.xlu0 %v1482
        %v1484 = vpop.xlane.xlu0 %1483
        %v1485 = vrcp.pop %v1484
        %v1486 = vmul.f32 %v1481, %v1485
        %v1487 = vpack.c.bf16 %v1486, %v1486
        %1488 = vrot.lane.b32.xlu0 %v1191, 48
        %v1489 = vpop.permute.xlu0 %1488
        %v1491 = vsel %vm1219, %v1487, 0
        %v1494 = vsel %vm1237, %v1489, 0
        %1496 = vmatpush.bf16.msra.mxu0 0
        %1497 = vmatpush.bf16.msra.mxu0 0
        %1498 = vmatpush.bf16.msra.mxu0 0
        %1499 = vmatpush.bf16.msra.mxu0 0
        %1500 = vmatpush.bf16.msra.mxu0 0
        %1501 = vmatpush.bf16.msra.mxu0 0
        %1502 = vmatpush.bf16.msra.mxu0 0
        %1503 = vmatpush.bf16.msra.mxu0 %v1494
        %1504 = vmatmul.bf16.gmra.mxu0 %v1491
        %v1505 = vpop.f32.mrf.mxu0
        %v1506 = vadd.f32 0.0, %v1505
        %v1507 = vpop.f32.mrf.mxu0
        %1508 = vdwg.mxu0
        %1510 = vrot.lane.b32.xlu0 %v1506, 16
        %v1511 = vpop.permute.xlu0 %1510
        %vm1513 = vcmask 162944
        %1514 = vst.msk [vmem:[#allocation3] sm:$0xff] %vm1513, %v1511
        %1515 = vrot.lane.b32.xlu0 %v1191, 108
        %v1516 = vpop.permute.xlu0 %1515
        %1517 = vrot.lane.b32.xlu0 %v1191, 76
        %v1518 = vpop.permute.xlu0 %1517
        %v1520 = vsel %vm1195, %v1516, 0
        %v1523 = vsel %vm1195, %v1518, 0
        %1525 = vmatpush.bf16.xpose.msra.mxu0 0
        %1526 = vmatpush.bf16.xpose.msra.mxu0 0
        %1527 = vmatpush.bf16.xpose.msra.mxu0 0
        %1528 = vmatpush.bf16.xpose.msra.mxu0 0
        %1529 = vmatpush.bf16.xpose.msra.mxu0 0
        %1530 = vmatpush.bf16.xpose.msra.mxu0 0
        %1531 = vmatpush.bf16.xpose.msra.mxu0 0
        %1532 = vmatpush.bf16.xpose.msra.mxu0 %v1523
        %1533 = vmatmul.bf16.gmra.mxu0 %v1520
        %v1534 = vpop.f32.mrf.mxu0
        %v1535 = vadd.f32 0.0, %v1534
        %v1536 = vpop.f32.mrf.mxu0
        %1537 = vdwg.mxu0
        %v1538 = vmul.f32 %v1535, 0.5
        %v1539 = vadd.f32 %v1538, %v1189
        %v1540 = vsel %vm1217, -1e+09, %v1539
        %v1541 = vsel %vm1219, %v1540, -inf
        %1542 = vmax.xlane.f32.xlu0 %v1541
        %v1543 = vpop.xlane.xlu0 %1542
        %v1544 = vsub.f32 %v1540, %v1543
        %v1545 = vmul.f32 %v1544, 1.442695
        %v1546 = vpow.pop %v1545
        %v1547 = vsel %vm1219, %v1546, 0.0
        %1548 = vadd.xlane.f32.xlu0 %v1547
        %v1549 = vpop.xlane.xlu0 %1548
        %v1550 = vrcp.pop %v1549
        %v1551 = vmul.f32 %v1546, %v1550
        %v1552 = vpack.c.bf16 %v1551, %v1551
        %1553 = vrot.lane.b32.xlu0 %v1191, 44
        %v1554 = vpop.permute.xlu0 %1553
        %v1556 = vsel %vm1219, %v1552, 0
        %v1559 = vsel %vm1237, %v1554, 0
        %1561 = vmatpush.bf16.msra.mxu0 0
        %1562 = vmatpush.bf16.msra.mxu0 0
        %1563 = vmatpush.bf16.msra.mxu0 0
        %1564 = vmatpush.bf16.msra.mxu0 0
        %1565 = vmatpush.bf16.msra.mxu0 0
        %1566 = vmatpush.bf16.msra.mxu0 0
        %1567 = vmatpush.bf16.msra.mxu0 0
        %1568 = vmatpush.bf16.msra.mxu0 %v1559
        %1569 = vmatmul.bf16.gmra.mxu0 %v1556
        %v1570 = vpop.f32.mrf.mxu0
        %v1571 = vadd.f32 0.0, %v1570
        %v1572 = vpop.f32.mrf.mxu0
        %1573 = vdwg.mxu0
        %1575 = vrot.lane.b32.xlu0 %v1571, 20
        %v1576 = vpop.permute.xlu0 %1575
        %vm1578 = vcmask 195744
        %1579 = vst.msk [vmem:[#allocation3] sm:$0xff] %vm1578, %v1576
        %1580 = vrot.lane.b32.xlu0 %v1191, 104
        %v1581 = vpop.permute.xlu0 %1580
        %1582 = vrot.lane.b32.xlu0 %v1191, 72
        %v1583 = vpop.permute.xlu0 %1582
        %v1585 = vsel %vm1195, %v1581, 0
        %v1588 = vsel %vm1195, %v1583, 0
        %1590 = vmatpush.bf16.xpose.msra.mxu0 0
        %1591 = vmatpush.bf16.xpose.msra.mxu0 0
        %1592 = vmatpush.bf16.xpose.msra.mxu0 0
        %1593 = vmatpush.bf16.xpose.msra.mxu0 0
        %1594 = vmatpush.bf16.xpose.msra.mxu0 0
        %1595 = vmatpush.bf16.xpose.msra.mxu0 0
        %1596 = vmatpush.bf16.xpose.msra.mxu0 0
        %1597 = vmatpush.bf16.xpose.msra.mxu0 %v1588
        %1598 = vmatmul.bf16.gmra.mxu0 %v1585
        %v1599 = vpop.f32.mrf.mxu0
        %v1600 = vadd.f32 0.0, %v1599
        %v1601 = vpop.f32.mrf.mxu0
        %1602 = vdwg.mxu0
        %v1603 = vmul.f32 %v1600, 0.5
        %v1604 = vadd.f32 %v1603, %v1189
        %v1605 = vsel %vm1217, -1e+09, %v1604
        %v1606 = vsel %vm1219, %v1605, -inf
        %1607 = vmax.xlane.f32.xlu0 %v1606
        %v1608 = vpop.xlane.xlu0 %1607
        %v1609 = vsub.f32 %v1605, %v1608
        %v1610 = vmul.f32 %v1609, 1.442695
        %v1611 = vpow.pop %v1610
        %v1612 = vsel %vm1219, %v1611, 0.0
        %1613 = vadd.xlane.f32.xlu0 %v1612
        %v1614 = vpop.xlane.xlu0 %1613
        %v1615 = vrcp.pop %v1614
        %v1616 = vmul.f32 %v1611, %v1615
        %v1617 = vpack.c.bf16 %v1616, %v1616
        %1618 = vrot.lane.b32.xlu0 %v1191, 40
        %v1619 = vpop.permute.xlu0 %1618
        %v1621 = vsel %vm1219, %v1617, 0
        %v1624 = vsel %vm1237, %v1619, 0
        %1626 = vmatpush.bf16.msra.mxu0 0
        %1627 = vmatpush.bf16.msra.mxu0 0
        %1628 = vmatpush.bf16.msra.mxu0 0
        %1629 = vmatpush.bf16.msra.mxu0 0
        %1630 = vmatpush.bf16.msra.mxu0 0
        %1631 = vmatpush.bf16.msra.mxu0 0
        %1632 = vmatpush.bf16.msra.mxu0 0
        %1633 = vmatpush.bf16.msra.mxu0 %v1624
        %1634 = vmatmul.bf16.gmra.mxu0 %v1621
        %v1635 = vpop.f32.mrf.mxu0
        %v1636 = vadd.f32 0.0, %v1635
        %v1637 = vpop.f32.mrf.mxu0
        %1638 = vdwg.mxu0
        %1640 = vrot.lane.b32.xlu0 %v1636, 24
        %v1641 = vpop.permute.xlu0 %1640
        %vm1643 = vcmask 228544
        %1644 = vst.msk [vmem:[#allocation3] sm:$0xff] %vm1643, %v1641
        %1645 = vrot.lane.b32.xlu0 %v1191, 100
        %v1646 = vpop.permute.xlu0 %1645
        %1647 = vrot.lane.b32.xlu0 %v1191, 68
        %v1648 = vpop.permute.xlu0 %1647
        %v1650 = vsel %vm1195, %v1646, 0
        %v1653 = vsel %vm1195, %v1648, 0
        %1655 = vmatpush.bf16.xpose.msra.mxu0 0
        %1656 = vmatpush.bf16.xpose.msra.mxu0 0
        %1657 = vmatpush.bf16.xpose.msra.mxu0 0
        %1658 = vmatpush.bf16.xpose.msra.mxu0 0
        %1659 = vmatpush.bf16.xpose.msra.mxu0 0
        %1660 = vmatpush.bf16.xpose.msra.mxu0 0
        %1661 = vmatpush.bf16.xpose.msra.mxu0 0
        %1662 = vmatpush.bf16.xpose.msra.mxu0 %v1653
        %1663 = vmatmul.bf16.gmra.mxu0 %v1650
        %v1664 = vpop.f32.mrf.mxu0
        %v1665 = vadd.f32 0.0, %v1664
        %v1666 = vpop.f32.mrf.mxu0
        %1667 = vdwg.mxu0
        %v1668 = vmul.f32 %v1665, 0.5
        %v1669 = vadd.f32 %v1668, %v1189
        %v1670 = vsel %vm1217, -1e+09, %v1669
        %v1671 = vsel %vm1219, %v1670, -inf
        %1672 = vmax.xlane.f32.xlu0 %v1671
        %v1673 = vpop.xlane.xlu0 %1672
        %v1674 = vsub.f32 %v1670, %v1673
        %v1675 = vmul.f32 %v1674, 1.442695
        %v1676 = vpow.pop %v1675
        %v1677 = vsel %vm1219, %v1676, 0.0
        %1678 = vadd.xlane.f32.xlu0 %v1677
        %v1679 = vpop.xlane.xlu0 %1678
        %v1680 = vrcp.pop %v1679
        %v1681 = vmul.f32 %v1676, %v1680
        %v1682 = vpack.c.bf16 %v1681, %v1681
        %1683 = vrot.lane.b32.xlu0 %v1191, 36
        %v1684 = vpop.permute.xlu0 %1683
        %v1686 = vsel %vm1219, %v1682, 0
        %v1689 = vsel %vm1237, %v1684, 0
        %1691 = vmatpush.bf16.msra.mxu0 0
        %1692 = vmatpush.bf16.msra.mxu0 0
        %1693 = vmatpush.bf16.msra.mxu0 0
        %1694 = vmatpush.bf16.msra.mxu0 0
        %1695 = vmatpush.bf16.msra.mxu0 0
        %1696 = vmatpush.bf16.msra.mxu0 0
        %1697 = vmatpush.bf16.msra.mxu0 0
        %1698 = vmatpush.bf16.msra.mxu0 %v1689
        %1699 = vmatmul.bf16.gmra.mxu0 %v1686
        %v1700 = vpop.f32.mrf.mxu0
        %v1701 = vadd.f32 0.0, %v1700
        %v1702 = vpop.f32.mrf.mxu0
        %1703 = vdwg.mxu0
        %1705 = vrot.lane.b32.xlu0 %v1701, 28
        %v1706 = vpop.permute.xlu0 %1705
        %vm1708 = vcmask 261344
        %1709 = vst.msk [vmem:[#allocation3] sm:$0xff] %vm1708, %v1706
        %s1710 = scalar_lea.vmem [#allocation4], 8
        %v1711 = vld [vmem:[%s1710] sm:$0xff]
        %v1712 = vmul.f32 %v1711, %v1182
        %s1713 = scalar_lea.vmem [#allocation5], 8
        %v1714 = vld [vmem:[%s1713] sm:$0xff]
        %v1715 = vmul.f32 %v1714, %v1185
        %v1716 = vadd.f32 %v1712, %v1715
        %v1717 = vadd.f32 %v1716, %v1188
        %s1718 = scalar_lea.vmem %s870, 8
        %v1719 = vld [vmem:[%s1718] sm:$0xff]
        %v1720 = vpack.c.bf16 %v1179, %v1179
        %1722 = vrot.lane.b32.xlu0 %v1720, 96
        %v1723 = vpop.permute.xlu0 %1722
        %v1725 = vsel %vm1195, %v1720, 0
        %v1728 = vsel %vm1195, %v1723, 0
        %1730 = vmatpush.bf16.xpose.msra.mxu0 0
        %1731 = vmatpush.bf16.xpose.msra.mxu0 0
        %1732 = vmatpush.bf16.xpose.msra.mxu0 0
        %1733 = vmatpush.bf16.xpose.msra.mxu0 0
        %1734 = vmatpush.bf16.xpose.msra.mxu0 0
        %1735 = vmatpush.bf16.xpose.msra.mxu0 0
        %1736 = vmatpush.bf16.xpose.msra.mxu0 0
        %1737 = vmatpush.bf16.xpose.msra.mxu0 %v1728
        %1738 = vmatmul.bf16.gmra.mxu0 %v1725
        %v1739 = vpop.f32.mrf.mxu0
        %v1740 = vadd.f32 0.0, %v1739
        %v1741 = vpop.f32.mrf.mxu0
        %1742 = vdwg.mxu0
        %v1743 = vmul.f32 %v1740, 0.5
        %v1744 = vadd.f32 %v1743, %v1717
        %vm1745 = vcmp.eq.f32.partialorder %v1719, 0.0
        %v1746 = vsel %vm1745, -1e+09, %v1744
        %v1747 = vsel %vm1219, %v1746, -inf
        %1748 = vmax.xlane.f32.xlu0 %v1747
        %v1749 = vpop.xlane.xlu0 %1748
        %v1750 = vsub.f32 %v1746, %v1749
        %v1751 = vmul.f32 %v1750, 1.442695
        %v1752 = vpow.pop %v1751
        %v1753 = vsel %vm1219, %v1752, 0.0
        %1754 = vadd.xlane.f32.xlu0 %v1753
        %v1755 = vpop.xlane.xlu0 %1754
        %v1756 = vrcp.pop %v1755
        %v1757 = vmul.f32 %v1752, %v1756
        %v1758 = vpack.c.bf16 %v1757, %v1757
        %1759 = vrot.lane.b32.xlu0 %v1720, 64
        %v1760 = vpop.permute.xlu0 %1759
        %v1762 = vsel %vm1219, %v1758, 0
        %v1765 = vsel %vm1237, %v1760, 0
        %1767 = vmatpush.bf16.msra.mxu0 0
        %1768 = vmatpush.bf16.msra.mxu0 0
        %1769 = vmatpush.bf16.msra.mxu0 0
        %1770 = vmatpush.bf16.msra.mxu0 0
        %1771 = vmatpush.bf16.msra.mxu0 0
        %1772 = vmatpush.bf16.msra.mxu0 0
        %1773 = vmatpush.bf16.msra.mxu0 0
        %1774 = vmatpush.bf16.msra.mxu0 %v1765
        %1775 = vmatmul.bf16.gmra.mxu0 %v1762
        %v1776 = vpop.f32.mrf.mxu0
        %v1777 = vadd.f32 0.0, %v1776
        %v1778 = vpop.f32.mrf.mxu0
        %1779 = vdwg.mxu0
        %1780 = vst.msk [vmem:[#allocation3 + $0x8] sm:$0xff] %vm1195, %v1777
        %1781 = vrot.lane.b32.xlu0 %v1720, 124
        %v1782 = vpop.permute.xlu0 %1781
        %1783 = vrot.lane.b32.xlu0 %v1720, 92
        %v1784 = vpop.permute.xlu0 %1783
        %v1786 = vsel %vm1195, %v1782, 0
        %v1789 = vsel %vm1195, %v1784, 0
        %1791 = vmatpush.bf16.xpose.msra.mxu0 0
        %1792 = vmatpush.bf16.xpose.msra.mxu0 0
        %1793 = vmatpush.bf16.xpose.msra.mxu0 0
        %1794 = vmatpush.bf16.xpose.msra.mxu0 0
        %1795 = vmatpush.bf16.xpose.msra.mxu0 0
        %1796 = vmatpush.bf16.xpose.msra.mxu0 0
        %1797 = vmatpush.bf16.xpose.msra.mxu0 0
        %1798 = vmatpush.bf16.xpose.msra.mxu0 %v1789
        %1799 = vmatmul.bf16.gmra.mxu0 %v1786
        %v1800 = vpop.f32.mrf.mxu0
        %v1801 = vadd.f32 0.0, %v1800
        %v1802 = vpop.f32.mrf.mxu0
        %1803 = vdwg.mxu0
        %v1804 = vmul.f32 %v1801, 0.5
        %v1805 = vadd.f32 %v1804, %v1717
        %v1806 = vsel %vm1745, -1e+09, %v1805
        %v1807 = vsel %vm1219, %v1806, -inf
        %1808 = vmax.xlane.f32.xlu0 %v1807
        %v1809 = vpop.xlane.xlu0 %1808
        %v1810 = vsub.f32 %v1806, %v1809
        %v1811 = vmul.f32 %v1810, 1.442695
        %v1812 = vpow.pop %v1811
        %v1813 = vsel %vm1219, %v1812, 0.0
        %1814 = vadd.xlane.f32.xlu0 %v1813
        %v1815 = vpop.xlane.xlu0 %1814
        %v1816 = vrcp.pop %v1815
        %v1817 = vmul.f32 %v1812, %v1816
        %v1818 = vpack.c.bf16 %v1817, %v1817
        %1819 = vrot.lane.b32.xlu0 %v1720, 60
        %v1820 = vpop.permute.xlu0 %1819
        %v1822 = vsel %vm1219, %v1818, 0
        %v1825 = vsel %vm1237, %v1820, 0
        %1827 = vmatpush.bf16.msra.mxu0 0
        %1828 = vmatpush.bf16.msra.mxu0 0
        %1829 = vmatpush.bf16.msra.mxu0 0
        %1830 = vmatpush.bf16.msra.mxu0 0
        %1831 = vmatpush.bf16.msra.mxu0 0
        %1832 = vmatpush.bf16.msra.mxu0 0
        %1833 = vmatpush.bf16.msra.mxu0 0
        %1834 = vmatpush.bf16.msra.mxu0 %v1825
        %1835 = vmatmul.bf16.gmra.mxu0 %v1822
        %v1836 = vpop.f32.mrf.mxu0
        %v1837 = vadd.f32 0.0, %v1836
        %v1838 = vpop.f32.mrf.mxu0
        %1839 = vdwg.mxu0
        %1841 = vrot.lane.b32.xlu0 %v1837, 4
        %v1842 = vpop.permute.xlu0 %1841
        %1844 = vst.msk [vmem:[#allocation3 + $0x8] sm:$0xff] %vm1318, %v1842
        %1845 = vrot.lane.b32.xlu0 %v1720, 120
        %v1846 = vpop.permute.xlu0 %1845
        %1847 = vrot.lane.b32.xlu0 %v1720, 88
        %v1848 = vpop.permute.xlu0 %1847
        %v1850 = vsel %vm1195, %v1846, 0
        %v1853 = vsel %vm1195, %v1848, 0
        %1855 = vmatpush.bf16.xpose.msra.mxu0 0
        %1856 = vmatpush.bf16.xpose.msra.mxu0 0
        %1857 = vmatpush.bf16.xpose.msra.mxu0 0
        %1858 = vmatpush.bf16.xpose.msra.mxu0 0
        %1859 = vmatpush.bf16.xpose.msra.mxu0 0
        %1860 = vmatpush.bf16.xpose.msra.mxu0 0
        %1861 = vmatpush.bf16.xpose.msra.mxu0 0
        %1862 = vmatpush.bf16.xpose.msra.mxu0 %v1853
        %1863 = vmatmul.bf16.gmra.mxu0 %v1850
        %v1864 = vpop.f32.mrf.mxu0
        %v1865 = vadd.f32 0.0, %v1864
        %v1866 = vpop.f32.mrf.mxu0
        %1867 = vdwg.mxu0
        %v1868 = vmul.f32 %v1865, 0.5
        %v1869 = vadd.f32 %v1868, %v1717
        %v1870 = vsel %vm1745, -1e+09, %v1869
        %v1871 = vsel %vm1219, %v1870, -inf
        %1872 = vmax.xlane.f32.xlu0 %v1871
        %v1873 = vpop.xlane.xlu0 %1872
        %v1874 = vsub.f32 %v1870, %v1873
        %v1875 = vmul.f32 %v1874, 1.442695
        %v1876 = vpow.pop %v1875
        %v1877 = vsel %vm1219, %v1876, 0.0
        %1878 = vadd.xlane.f32.xlu0 %v1877
        %v1879 = vpop.xlane.xlu0 %1878
        %v1880 = vrcp.pop %v1879
        %v1881 = vmul.f32 %v1876, %v1880
        %v1882 = vpack.c.bf16 %v1881, %v1881
        %1883 = vrot.lane.b32.xlu0 %v1720, 56
        %v1884 = vpop.permute.xlu0 %1883
        %v1886 = vsel %vm1219, %v1882, 0
        %v1889 = vsel %vm1237, %v1884, 0
        %1891 = vmatpush.bf16.msra.mxu0 0
        %1892 = vmatpush.bf16.msra.mxu0 0
        %1893 = vmatpush.bf16.msra.mxu0 0
        %1894 = vmatpush.bf16.msra.mxu0 0
        %1895 = vmatpush.bf16.msra.mxu0 0
        %1896 = vmatpush.bf16.msra.mxu0 0
        %1897 = vmatpush.bf16.msra.mxu0 0
        %1898 = vmatpush.bf16.msra.mxu0 %v1889
        %1899 = vmatmul.bf16.gmra.mxu0 %v1886
        %v1900 = vpop.f32.mrf.mxu0
        %v1901 = vadd.f32 0.0, %v1900
        %v1902 = vpop.f32.mrf.mxu0
        %1903 = vdwg.mxu0
        %1905 = vrot.lane.b32.xlu0 %v1901, 8
        %v1906 = vpop.permute.xlu0 %1905
        %1908 = vst.msk [vmem:[#allocation3 + $0x8] sm:$0xff] %vm1383, %v1906
        %1909 = vrot.lane.b32.xlu0 %v1720, 116
        %v1910 = vpop.permute.xlu0 %1909
        %1911 = vrot.lane.b32.xlu0 %v1720, 84
        %v1912 = vpop.permute.xlu0 %1911
        %v1914 = vsel %vm1195, %v1910, 0
        %v1917 = vsel %vm1195, %v1912, 0
        %1919 = vmatpush.bf16.xpose.msra.mxu0 0
        %1920 = vmatpush.bf16.xpose.msra.mxu0 0
        %1921 = vmatpush.bf16.xpose.msra.mxu0 0
        %1922 = vmatpush.bf16.xpose.msra.mxu0 0
        %1923 = vmatpush.bf16.xpose.msra.mxu0 0
        %1924 = vmatpush.bf16.xpose.msra.mxu0 0
        %1925 = vmatpush.bf16.xpose.msra.mxu0 0
        %1926 = vmatpush.bf16.xpose.msra.mxu0 %v1917
        %1927 = vmatmul.bf16.gmra.mxu0 %v1914
        %v1928 = vpop.f32.mrf.mxu0
        %v1929 = vadd.f32 0.0, %v1928
        %v1930 = vpop.f32.mrf.mxu0
        %1931 = vdwg.mxu0
        %v1932 = vmul.f32 %v1929, 0.5
        %v1933 = vadd.f32 %v1932, %v1717
        %v1934 = vsel %vm1745, -1e+09, %v1933
        %v1935 = vsel %vm1219, %v1934, -inf
        %1936 = vmax.xlane.f32.xlu0 %v1935
        %v1937 = vpop.xlane.xlu0 %1936
        %v1938 = vsub.f32 %v1934, %v1937
        %v1939 = vmul.f32 %v1938, 1.442695
        %v1940 = vpow.pop %v1939
        %v1941 = vsel %vm1219, %v1940, 0.0
        %1942 = vadd.xlane.f32.xlu0 %v1941
        %v1943 = vpop.xlane.xlu0 %1942
        %v1944 = vrcp.pop %v1943
        %v1945 = vmul.f32 %v1940, %v1944
        %v1946 = vpack.c.bf16 %v1945, %v1945
        %1947 = vrot.lane.b32.xlu0 %v1720, 52
        %v1948 = vpop.permute.xlu0 %1947
        %v1950 = vsel %vm1219, %v1946, 0
        %v1953 = vsel %vm1237, %v1948, 0
        %1955 = vmatpush.bf16.msra.mxu0 0
        %1956 = vmatpush.bf16.msra.mxu0 0
        %1957 = vmatpush.bf16.msra.mxu0 0
        %1958 = vmatpush.bf16.msra.mxu0 0
        %1959 = vmatpush.bf16.msra.mxu0 0
        %1960 = vmatpush.bf16.msra.mxu0 0
        %1961 = vmatpush.bf16.msra.mxu0 0
        %1962 = vmatpush.bf16.msra.mxu0 %v1953
        %1963 = vmatmul.bf16.gmra.mxu0 %v1950
        %v1964 = vpop.f32.mrf.mxu0
        %v1965 = vadd.f32 0.0, %v1964
        %v1966 = vpop.f32.mrf.mxu0
        %1967 = vdwg.mxu0
        %1969 = vrot.lane.b32.xlu0 %v1965, 12
        %v1970 = vpop.permute.xlu0 %1969
        %1972 = vst.msk [vmem:[#allocation3 + $0x8] sm:$0xff] %vm1448, %v1970
        %1973 = vrot.lane.b32.xlu0 %v1720, 112
        %v1974 = vpop.permute.xlu0 %1973
        %1975 = vrot.lane.b32.xlu0 %v1720, 80
        %v1976 = vpop.permute.xlu0 %1975
        %v1978 = vsel %vm1195, %v1974, 0
        %v1981 = vsel %vm1195, %v1976, 0
        %1983 = vmatpush.bf16.xpose.msra.mxu0 0
        %1984 = vmatpush.bf16.xpose.msra.mxu0 0
        %1985 = vmatpush.bf16.xpose.msra.mxu0 0
        %1986 = vmatpush.bf16.xpose.msra.mxu0 0
        %1987 = vmatpush.bf16.xpose.msra.mxu0 0
        %1988 = vmatpush.bf16.xpose.msra.mxu0 0
        %1989 = vmatpush.bf16.xpose.msra.mxu0 0
        %1990 = vmatpush.bf16.xpose.msra.mxu0 %v1981
        %1991 = vmatmul.bf16.gmra.mxu0 %v1978
        %v1992 = vpop.f32.mrf.mxu0
        %v1993 = vadd.f32 0.0, %v1992
        %v1994 = vpop.f32.mrf.mxu0
        %1995 = vdwg.mxu0
        %v1996 = vmul.f32 %v1993, 0.5
        %v1997 = vadd.f32 %v1996, %v1717
        %v1998 = vsel %vm1745, -1e+09, %v1997
        %v1999 = vsel %vm1219, %v1998, -inf
        %2000 = vmax.xlane.f32.xlu0 %v1999
        %v2001 = vpop.xlane.xlu0 %2000
        %v2002 = vsub.f32 %v1998, %v2001
        %v2003 = vmul.f32 %v2002, 1.442695
        %v2004 = vpow.pop %v2003
        %v2005 = vsel %vm1219, %v2004, 0.0
        %2006 = vadd.xlane.f32.xlu0 %v2005
        %v2007 = vpop.xlane.xlu0 %2006
        %v2008 = vrcp.pop %v2007
        %v2009 = vmul.f32 %v2004, %v2008
        %v2010 = vpack.c.bf16 %v2009, %v2009
        %2011 = vrot.lane.b32.xlu0 %v1720, 48
        %v2012 = vpop.permute.xlu0 %2011
        %v2014 = vsel %vm1219, %v2010, 0
        %v2017 = vsel %vm1237, %v2012, 0
        %2019 = vmatpush.bf16.msra.mxu0 0
        %2020 = vmatpush.bf16.msra.mxu0 0
        %2021 = vmatpush.bf16.msra.mxu0 0
        %2022 = vmatpush.bf16.msra.mxu0 0
        %2023 = vmatpush.bf16.msra.mxu0 0
        %2024 = vmatpush.bf16.msra.mxu0 0
        %2025 = vmatpush.bf16.msra.mxu0 0
        %2026 = vmatpush.bf16.msra.mxu0 %v2017
        %2027 = vmatmul.bf16.gmra.mxu0 %v2014
        %v2028 = vpop.f32.mrf.mxu0
        %v2029 = vadd.f32 0.0, %v2028
        %v2030 = vpop.f32.mrf.mxu0
        %2031 = vdwg.mxu0
        %2033 = vrot.lane.b32.xlu0 %v2029, 16
        %v2034 = vpop.permute.xlu0 %2033
        %2036 = vst.msk [vmem:[#allocation3 + $0x8] sm:$0xff] %vm1513, %v2034
        %2037 = vrot.lane.b32.xlu0 %v1720, 108
        %v2038 = vpop.permute.xlu0 %2037
        %2039 = vrot.lane.b32.xlu0 %v1720, 76
        %v2040 = vpop.permute.xlu0 %2039
        %v2042 = vsel %vm1195, %v2038, 0
        %v2045 = vsel %vm1195, %v2040, 0
        %2047 = vmatpush.bf16.xpose.msra.mxu0 0
        %2048 = vmatpush.bf16.xpose.msra.mxu0 0
        %2049 = vmatpush.bf16.xpose.msra.mxu0 0
        %2050 = vmatpush.bf16.xpose.msra.mxu0 0
        %2051 = vmatpush.bf16.xpose.msra.mxu0 0
        %2052 = vmatpush.bf16.xpose.msra.mxu0 0
        %2053 = vmatpush.bf16.xpose.msra.mxu0 0
        %2054 = vmatpush.bf16.xpose.msra.mxu0 %v2045
        %2055 = vmatmul.bf16.gmra.mxu0 %v2042
        %v2056 = vpop.f32.mrf.mxu0
        %v2057 = vadd.f32 0.0, %v2056
        %v2058 = vpop.f32.mrf.mxu0
        %2059 = vdwg.mxu0
        %v2060 = vmul.f32 %v2057, 0.5
        %v2061 = vadd.f32 %v2060, %v1717
        %v2062 = vsel %vm1745, -1e+09, %v2061
        %v2063 = vsel %vm1219, %v2062, -inf
        %2064 = vmax.xlane.f32.xlu0 %v2063
        %v2065 = vpop.xlane.xlu0 %2064
        %v2066 = vsub.f32 %v2062, %v2065
        %v2067 = vmul.f32 %v2066, 1.442695
        %v2068 = vpow.pop %v2067
        %v2069 = vsel %vm1219, %v2068, 0.0
        %2070 = vadd.xlane.f32.xlu0 %v2069
        %v2071 = vpop.xlane.xlu0 %2070
        %v2072 = vrcp.pop %v2071
        %v2073 = vmul.f32 %v2068, %v2072
        %v2074 = vpack.c.bf16 %v2073, %v2073
        %2075 = vrot.lane.b32.xlu0 %v1720, 44
        %v2076 = vpop.permute.xlu0 %2075
        %v2078 = vsel %vm1219, %v2074, 0
        %v2081 = vsel %vm1237, %v2076, 0
        %2083 = vmatpush.bf16.msra.mxu0 0
        %2084 = vmatpush.bf16.msra.mxu0 0
        %2085 = vmatpush.bf16.msra.mxu0 0
        %2086 = vmatpush.bf16.msra.mxu0 0
        %2087 = vmatpush.bf16.msra.mxu0 0
        %2088 = vmatpush.bf16.msra.mxu0 0
        %2089 = vmatpush.bf16.msra.mxu0 0
        %2090 = vmatpush.bf16.msra.mxu0 %v2081
        %2091 = vmatmul.bf16.gmra.mxu0 %v2078
        %v2092 = vpop.f32.mrf.mxu0
        %v2093 = vadd.f32 0.0, %v2092
        %v2094 = vpop.f32.mrf.mxu0
        %2095 = vdwg.mxu0
        %2097 = vrot.lane.b32.xlu0 %v2093, 20
        %v2098 = vpop.permute.xlu0 %2097
        %2100 = vst.msk [vmem:[#allocation3 + $0x8] sm:$0xff] %vm1578, %v2098
        %2101 = vrot.lane.b32.xlu0 %v1720, 104
        %v2102 = vpop.permute.xlu0 %2101
        %2103 = vrot.lane.b32.xlu0 %v1720, 72
        %v2104 = vpop.permute.xlu0 %2103
        %v2106 = vsel %vm1195, %v2102, 0
        %v2109 = vsel %vm1195, %v2104, 0
        %2111 = vmatpush.bf16.xpose.msra.mxu0 0
        %2112 = vmatpush.bf16.xpose.msra.mxu0 0
        %2113 = vmatpush.bf16.xpose.msra.mxu0 0
        %2114 = vmatpush.bf16.xpose.msra.mxu0 0
        %2115 = vmatpush.bf16.xpose.msra.mxu0 0
        %2116 = vmatpush.bf16.xpose.msra.mxu0 0
        %2117 = vmatpush.bf16.xpose.msra.mxu0 0
        %2118 = vmatpush.bf16.xpose.msra.mxu0 %v2109
        %2119 = vmatmul.bf16.gmra.mxu0 %v2106
        %v2120 = vpop.f32.mrf.mxu0
        %v2121 = vadd.f32 0.0, %v2120
        %v2122 = vpop.f32.mrf.mxu0
        %2123 = vdwg.mxu0
        %v2124 = vmul.f32 %v2121, 0.5
        %v2125 = vadd.f32 %v2124, %v1717
        %v2126 = vsel %vm1745, -1e+09, %v2125
        %v2127 = vsel %vm1219, %v2126, -inf
        %2128 = vmax.xlane.f32.xlu0 %v2127
        %v2129 = vpop.xlane.xlu0 %2128
        %v2130 = vsub.f32 %v2126, %v2129
        %v2131 = vmul.f32 %v2130, 1.442695
        %v2132 = vpow.pop %v2131
        %v2133 = vsel %vm1219, %v2132, 0.0
        %2134 = vadd.xlane.f32.xlu0 %v2133
        %v2135 = vpop.xlane.xlu0 %2134
        %v2136 = vrcp.pop %v2135
        %v2137 = vmul.f32 %v2132, %v2136
        %v2138 = vpack.c.bf16 %v2137, %v2137
        %2139 = vrot.lane.b32.xlu0 %v1720, 40
        %v2140 = vpop.permute.xlu0 %2139
        %v2142 = vsel %vm1219, %v2138, 0
        %v2145 = vsel %vm1237, %v2140, 0
        %2147 = vmatpush.bf16.msra.mxu0 0
        %2148 = vmatpush.bf16.msra.mxu0 0
        %2149 = vmatpush.bf16.msra.mxu0 0
        %2150 = vmatpush.bf16.msra.mxu0 0
        %2151 = vmatpush.bf16.msra.mxu0 0
        %2152 = vmatpush.bf16.msra.mxu0 0
        %2153 = vmatpush.bf16.msra.mxu0 0
        %2154 = vmatpush.bf16.msra.mxu0 %v2145
        %2155 = vmatmul.bf16.gmra.mxu0 %v2142
        %v2156 = vpop.f32.mrf.mxu0
        %v2157 = vadd.f32 0.0, %v2156
        %v2158 = vpop.f32.mrf.mxu0
        %2159 = vdwg.mxu0
        %2161 = vrot.lane.b32.xlu0 %v2157, 24
        %v2162 = vpop.permute.xlu0 %2161
        %2164 = vst.msk [vmem:[#allocation3 + $0x8] sm:$0xff] %vm1643, %v2162
        %2165 = vrot.lane.b32.xlu0 %v1720, 100
        %v2166 = vpop.permute.xlu0 %2165
        %2167 = vrot.lane.b32.xlu0 %v1720, 68
        %v2168 = vpop.permute.xlu0 %2167
        %v2170 = vsel %vm1195, %v2166, 0
        %v2173 = vsel %vm1195, %v2168, 0
        %2175 = vmatpush.bf16.xpose.msra.mxu0 0
        %2176 = vmatpush.bf16.xpose.msra.mxu0 0
        %2177 = vmatpush.bf16.xpose.msra.mxu0 0
        %2178 = vmatpush.bf16.xpose.msra.mxu0 0
        %2179 = vmatpush.bf16.xpose.msra.mxu0 0
        %2180 = vmatpush.bf16.xpose.msra.mxu0 0
        %2181 = vmatpush.bf16.xpose.msra.mxu0 0
        %2182 = vmatpush.bf16.xpose.msra.mxu0 %v2173
        %2183 = vmatmul.bf16.gmra.mxu0 %v2170
        %v2184 = vpop.f32.mrf.mxu0
        %v2185 = vadd.f32 0.0, %v2184
        %v2186 = vpop.f32.mrf.mxu0
        %2187 = vdwg.mxu0
        %v2188 = vmul.f32 %v2185, 0.5
        %v2189 = vadd.f32 %v2188, %v1717
        %v2190 = vsel %vm1745, -1e+09, %v2189
        %v2191 = vsel %vm1219, %v2190, -inf
        %2192 = vmax.xlane.f32.xlu0 %v2191
        %v2193 = vpop.xlane.xlu0 %2192
        %v2194 = vsub.f32 %v2190, %v2193
        %v2195 = vmul.f32 %v2194, 1.442695
        %v2196 = vpow.pop %v2195
        %v2197 = vsel %vm1219, %v2196, 0.0
        %2198 = vadd.xlane.f32.xlu0 %v2197
        %v2199 = vpop.xlane.xlu0 %2198
        %v2200 = vrcp.pop %v2199
        %v2201 = vmul.f32 %v2196, %v2200
        %v2202 = vpack.c.bf16 %v2201, %v2201
        %2203 = vrot.lane.b32.xlu0 %v1720, 36
        %v2204 = vpop.permute.xlu0 %2203
        %v2206 = vsel %vm1219, %v2202, 0
        %v2209 = vsel %vm1237, %v2204, 0
        %2211 = vmatpush.bf16.msra.mxu0 0
        %2212 = vmatpush.bf16.msra.mxu0 0
        %2213 = vmatpush.bf16.msra.mxu0 0
        %2214 = vmatpush.bf16.msra.mxu0 0
        %2215 = vmatpush.bf16.msra.mxu0 0
        %2216 = vmatpush.bf16.msra.mxu0 0
        %2217 = vmatpush.bf16.msra.mxu0 0
        %2218 = vmatpush.bf16.msra.mxu0 %v2209
        %2219 = vmatmul.bf16.gmra.mxu0 %v2206
        %v2220 = vpop.f32.mrf.mxu0
        %v2221 = vadd.f32 0.0, %v2220
        %v2222 = vpop.f32.mrf.mxu0
        %2223 = vdwg.mxu0
        %2225 = vrot.lane.b32.xlu0 %v2221, 28
        %v2226 = vpop.permute.xlu0 %2225
        %2228 = vst.msk [vmem:[#allocation3 + $0x8] sm:$0xff] %vm1708, %v2226
        %v2229 = vld [vmem:[#allocation3] sm:$0xff]
        %v2230 = vld [vmem:[#allocation3 + $0x8] sm:$0xff]
        %v2231 = vpack.c.bf16 %v2230, %v2229
        %v2232 = vld [vmem:[%s890] sm:$0xf]
        %v2233 = vld [vmem:[%s890 + $0x4] sm:$0xf]
        %v2234 = vld [vmem:[%s890 + $0x8] sm:$0xf]
        %v2235 = vld [vmem:[%s890 + $0xc] sm:$0xf]
        %v2240 = vunpack.c.l.b16 %v2232
        %v2241 = vunpack.c.l.b16 %v2233
        %v2242 = vunpack.c.l.b16 %v2234
        %v2243 = vunpack.c.l.b16 %v2235
        %v2244 = vpack.c.b16 %v2241, %v2240
        %v2245 = vpack.c.b16 %v2243, %v2242
        %v2247 = vsel %vm1024, %v2231, 0
        %v2250 = vsel %vm1024, %v2244, 0
        %v2253 = vsel %vm1024, %v2245, 0
        %2255 = vmatpush.bf16.xpose.msra.mxu0 0
        %2256 = vmatpush.bf16.xpose.msra.mxu0 0
        %2257 = vmatpush.bf16.xpose.msra.mxu0 0
        %2258 = vmatpush.bf16.xpose.msra.mxu0 0
        %2259 = vmatpush.bf16.xpose.msra.mxu0 0
        %2260 = vmatpush.bf16.xpose.msra.mxu0 0
        %2261 = vmatpush.bf16.xpose.msra.mxu0 %v2253
        %2262 = vmatpush.bf16.xpose.msra.mxu0 %v2250
        %2263 = vmatmul.bf16.gmra.mxu0 %v2247
        %v2264 = vpop.f32.mrf.mxu0
        %v2265 = vadd.f32 0.0, %v2264
        %v2266 = vpop.f32.mrf.mxu0
        %v2267 = vadd.f32 0.0, %v2266
        %2268 = vdwg.mxu0
        %v2269 = vadd.f32 %v1014, %v2265
        %v2270 = vadd.f32 %v1015, %v2267
        %v2271 = vld [vmem:[%s893] sm:$0x1]
        %v2273 = vperm.slane %v2271, 0
        %v2275 = vadd.f32 %v2269, %v2273
        %v2276 = vadd.f32 %v2270, %v2273
        %v2277 = vld [vmem:[%s896] sm:$0x1]
        %v2278 = vld [vmem:[%s899] sm:$0x1]
        %v2279 = vsel %vm1024, %v2275, 0.0
        %2280 = vadd.xlane.f32.xlu0 %v2279
        %v2281 = vpop.xlane.xlu0 %2280
        %v2282 = vsel %vm1024, %v2276, 0.0
        %2283 = vadd.xlane.f32.xlu0 %v2282
        %v2284 = vpop.xlane.xlu0 %2283
        %v2285 = vmul.f32 %v2281, %v1037
        %v2286 = vmul.f32 %v2284, %v1037
        %v2287 = vsub.f32 %v2275, %v2285
        %v2288 = vsub.f32 %v2276, %v2286
        %v2289 = vmul.f32 %v2287, %v2287
        %v2290 = vmul.f32 %v2288, %v2288
        %v2291 = vsel %vm1024, %v2289, 0.0
        %2292 = vadd.xlane.f32.xlu0 %v2291
        %v2293 = vpop.xlane.xlu0 %2292
        %v2294 = vsel %vm1024, %v2290, 0.0
        %2295 = vadd.xlane.f32.xlu0 %v2294
        %v2296 = vpop.xlane.xlu0 %2295
        %v2297 = vmul.f32 %v2293, %v1056
        %v2298 = vmul.f32 %v2296, %v1056
        %v2299 = vrsqrt.pop %v2297
        %v2300 = vmul.f32 %v2299, %v2297
        %v2301 = vmul.f32 %v2300, %v2299
        %v2302 = vmul.f32 0.5, %v2301
        %v2303 = vsub.f32 1.5, %v2302
        %v2304 = vmul.f32 %v2299, %v2303
        %v2305 = vmul.f32 %v2297, %v2304
        %vm2306 = vcmp.eq.f32.partialorder %v2297, inf
        %v2307 = vsel %vm2306, %v2297, %v2305
        %vm2308 = vcmp.eq.f32.partialorder %v2297, 0.0
        %v2309 = vand.u32 %v2297, 2147483648
        %v2310 = vsel %vm2308, %v2309, %v2307
        %v2311 = vrsqrt.pop %v2298
        %v2312 = vmul.f32 %v2311, %v2298
        %v2313 = vmul.f32 %v2312, %v2311
        %v2314 = vmul.f32 0.5, %v2313
        %v2315 = vsub.f32 1.5, %v2314
        %v2316 = vmul.f32 %v2311, %v2315
        %v2317 = vmul.f32 %v2298, %v2316
        %vm2318 = vcmp.eq.f32.partialorder %v2298, inf
        %v2319 = vsel %vm2318, %v2298, %v2317
        %vm2320 = vcmp.eq.f32.partialorder %v2298, 0.0
        %v2321 = vand.u32 %v2298, 2147483648
        %v2322 = vsel %vm2320, %v2321, %v2319
        %v2323 = vadd.f32 %v2310, 1e-06
        %v2324 = vadd.f32 %v2322, 1e-06
        %v2325 = vrcp.pop %v2323
        %v2326 = vrcp.pop %v2324
        %v2328 = vperm.slane %v2277, 0
        %v2330 = vmul.f32 %v2328, %v2287
        %v2331 = vmul.f32 %v2328, %v2288
        %v2332 = vmul.f32 %v2330, %v2325
        %v2333 = vmul.f32 %v2331, %v2326
        %v2335 = vperm.slane %v2278, 0
        %v2337 = vadd.f32 %v2332, %v2335
        %v2338 = vadd.f32 %v2333, %v2335
        %v2339 = vpack.c.bf16 %v2338, %v2337
        %v2340 = vld [vmem:[%s904] sm:$0xf]
        %v2341 = vld [vmem:[%s904 + $0x4] sm:$0xf]
        %v2342 = vld [vmem:[%s904 + $0x8] sm:$0xf]
        %v2343 = vld [vmem:[%s904 + $0xc] sm:$0xf]
        %v2344 = vld [vmem:[%s904 + $0x10] sm:$0xf]
        %v2345 = vld [vmem:[%s904 + $0x14] sm:$0xf]
        %v2346 = vld [vmem:[%s904 + $0x18] sm:$0xf]
        %v2347 = vld [vmem:[%s904 + $0x1c] sm:$0xf]
        %v2348 = vld [vmem:[%s904 + $0x20] sm:$0xf]
        %v2349 = vld [vmem:[%s904 + $0x24] sm:$0xf]
        %v2350 = vld [vmem:[%s904 + $0x28] sm:$0xf]
        %v2351 = vld [vmem:[%s904 + $0x2c] sm:$0xf]
        %v2352 = vld [vmem:[%s904 + $0x30] sm:$0xf]
        %v2353 = vld [vmem:[%s904 + $0x34] sm:$0xf]
        %v2354 = vld [vmem:[%s904 + $0x38] sm:$0xf]
        %v2355 = vld [vmem:[%s904 + $0x3c] sm:$0xf]
        %v2356 = vld [vmem:[%s904 + $0x40] sm:$0xf]
        %v2357 = vld [vmem:[%s904 + $0x44] sm:$0xf]
        %v2358 = vld [vmem:[%s904 + $0x48] sm:$0xf]
        %v2359 = vld [vmem:[%s904 + $0x4c] sm:$0xf]
        %v2360 = vld [vmem:[%s904 + $0x50] sm:$0xf]
        %v2361 = vld [vmem:[%s904 + $0x54] sm:$0xf]
        %v2362 = vld [vmem:[%s904 + $0x58] sm:$0xf]
        %v2363 = vld [vmem:[%s904 + $0x5c] sm:$0xf]
        %v2364 = vld [vmem:[%s904 + $0x60] sm:$0xf]
        %v2365 = vld [vmem:[%s904 + $0x64] sm:$0xf]
        %v2366 = vld [vmem:[%s904 + $0x68] sm:$0xf]
        %v2367 = vld [vmem:[%s904 + $0x6c] sm:$0xf]
        %v2368 = vld [vmem:[%s904 + $0x70] sm:$0xf]
        %v2369 = vld [vmem:[%s904 + $0x74] sm:$0xf]
        %v2370 = vld [vmem:[%s904 + $0x78] sm:$0xf]
        %v2371 = vld [vmem:[%s904 + $0x7c] sm:$0xf]
        %v2372 = vld [vmem:[%s904 + $0x80] sm:$0xf]
        %v2373 = vld [vmem:[%s904 + $0x84] sm:$0xf]
        %v2374 = vld [vmem:[%s904 + $0x88] sm:$0xf]
        %v2375 = vld [vmem:[%s904 + $0x8c] sm:$0xf]
        %v2376 = vld [vmem:[%s904 + $0x90] sm:$0xf]
        %v2377 = vld [vmem:[%s904 + $0x94] sm:$0xf]
        %v2378 = vld [vmem:[%s904 + $0x98] sm:$0xf]
        %v2379 = vld [vmem:[%s904 + $0x9c] sm:$0xf]
        %v2380 = vld [vmem:[%s904 + $0xa0] sm:$0xf]
        %v2381 = vld [vmem:[%s904 + $0xa4] sm:$0xf]
        %v2382 = vld [vmem:[%s904 + $0xa8] sm:$0xf]
        %v2383 = vld [vmem:[%s904 + $0xac] sm:$0xf]
        %v2384 = vld [vmem:[%s904 + $0xb0] sm:$0xf]
        %v2385 = vld [vmem:[%s904 + $0xb4] sm:$0xf]
        %v2386 = vld [vmem:[%s904 + $0xb8] sm:$0xf]
        %v2387 = vld [vmem:[%s904 + $0xbc] sm:$0xf]
        %v2388 = vld [vmem:[%s904 + $0xc0] sm:$0xf]
        %v2389 = vld [vmem:[%s904 + $0xc4] sm:$0xf]
        %v2390 = vld [vmem:[%s904 + $0xc8] sm:$0xf]
        %v2391 = vld [vmem:[%s904 + $0xcc] sm:$0xf]
        %v2392 = vld [vmem:[%s904 + $0xd0] sm:$0xf]
        %v2393 = vld [vmem:[%s904 + $0xd4] sm:$0xf]
        %v2394 = vld [vmem:[%s904 + $0xd8] sm:$0xf]
        %v2395 = vld [vmem:[%s904 + $0xdc] sm:$0xf]
        %v2396 = vld [vmem:[%s904 + $0xe0] sm:$0xf]
        %v2397 = vld [vmem:[%s904 + $0xe4] sm:$0xf]
        %v2398 = vld [vmem:[%s904 + $0xe8] sm:$0xf]
        %v2399 = vld [vmem:[%s904 + $0xec] sm:$0xf]
        %v2400 = vld [vmem:[%s904 + $0xf0] sm:$0xf]
        %v2401 = vld [vmem:[%s904 + $0xf4] sm:$0xf]
        %v2402 = vld [vmem:[%s904 + $0xf8] sm:$0xf]
        %v2403 = vld [vmem:[%s904 + $0xfc] sm:$0xf]
        %v2404 = vld [vmem:[%s908] sm:$0xf]
        %v2406 = vperm.slane %v2404, 0
        %v2407 = vperm.slane %v2404, 1
        %v2408 = vperm.slane %v2404, 2
        %v2409 = vperm.slane %v2404, 3
        %v2478 = vunpack.c.l.b16 %v2340
        %v2479 = vunpack.c.l.b16 %v2341
        %v2480 = vunpack.c.l.b16 %v2342
        %v2481 = vunpack.c.l.b16 %v2343
        %v2482 = vunpack.c.l.b16 %v2344
        %v2483 = vunpack.c.l.b16 %v2345
        %v2484 = vunpack.c.l.b16 %v2346
        %v2485 = vunpack.c.l.b16 %v2347
        %v2486 = vunpack.c.l.b16 %v2348
        %v2487 = vunpack.c.l.b16 %v2349
        %v2488 = vunpack.c.l.b16 %v2350
        %v2489 = vunpack.c.l.b16 %v2351
        %v2490 = vunpack.c.l.b16 %v2352
        %v2491 = vunpack.c.l.b16 %v2353
        %v2492 = vunpack.c.l.b16 %v2354
        %v2493 = vunpack.c.l.b16 %v2355
        %v2494 = vunpack.c.l.b16 %v2356
        %v2495 = vunpack.c.l.b16 %v2357
        %v2496 = vunpack.c.l.b16 %v2358
        %v2497 = vunpack.c.l.b16 %v2359
        %v2498 = vunpack.c.l.b16 %v2360
        %v2499 = vunpack.c.l.b16 %v2361
        %v2500 = vunpack.c.l.b16 %v2362
        %v2501 = vunpack.c.l.b16 %v2363
        %v2502 = vunpack.c.l.b16 %v2364
        %v2503 = vunpack.c.l.b16 %v2365
        %v2504 = vunpack.c.l.b16 %v2366
        %v2505 = vunpack.c.l.b16 %v2367
        %v2506 = vunpack.c.l.b16 %v2368
        %v2507 = vunpack.c.l.b16 %v2369
        %v2508 = vunpack.c.l.b16 %v2370
        %v2509 = vunpack.c.l.b16 %v2371
        %v2510 = vunpack.c.l.b16 %v2372
        %v2511 = vunpack.c.l.b16 %v2373
        %v2512 = vunpack.c.l.b16 %v2374
        %v2513 = vunpack.c.l.b16 %v2375
        %v2514 = vunpack.c.l.b16 %v2376
        %v2515 = vunpack.c.l.b16 %v2377
        %v2516 = vunpack.c.l.b16 %v2378
        %v2517 = vunpack.c.l.b16 %v2379
        %v2518 = vunpack.c.l.b16 %v2380
        %v2519 = vunpack.c.l.b16 %v2381
        %v2520 = vunpack.c.l.b16 %v2382
        %v2521 = vunpack.c.l.b16 %v2383
        %v2522 = vunpack.c.l.b16 %v2384
        %v2523 = vunpack.c.l.b16 %v2385
        %v2524 = vunpack.c.l.b16 %v2386
        %v2525 = vunpack.c.l.b16 %v2387
        %v2526 = vunpack.c.l.b16 %v2388
        %v2527 = vunpack.c.l.b16 %v2389
        %v2528 = vunpack.c.l.b16 %v2390
        %v2529 = vunpack.c.l.b16 %v2391
        %v2530 = vunpack.c.l.b16 %v2392
        %v2531 = vunpack.c.l.b16 %v2393
        %v2532 = vunpack.c.l.b16 %v2394
        %v2533 = vunpack.c.l.b16 %v2395
        %v2534 = vunpack.c.l.b16 %v2396
        %v2535 = vunpack.c.l.b16 %v2397
        %v2536 = vunpack.c.l.b16 %v2398
        %v2537 = vunpack.c.l.b16 %v2399
        %v2538 = vunpack.c.l.b16 %v2400
        %v2539 = vunpack.c.l.b16 %v2401
        %v2540 = vunpack.c.l.b16 %v2402
        %v2541 = vunpack.c.l.b16 %v2403
        %v2542 = vpack.c.b16 %v2479, %v2478
        %v2543 = vpack.c.b16 %v2481, %v2480
        %v2544 = vpack.c.b16 %v2483, %v2482
        %v2545 = vpack.c.b16 %v2485, %v2484
        %v2546 = vpack.c.b16 %v2487, %v2486
        %v2547 = vpack.c.b16 %v2489, %v2488
        %v2548 = vpack.c.b16 %v2491, %v2490
        %v2549 = vpack.c.b16 %v2493, %v2492
        %v2550 = vpack.c.b16 %v2495, %v2494
        %v2551 = vpack.c.b16 %v2497, %v2496
        %v2552 = vpack.c.b16 %v2499, %v2498
        %v2553 = vpack.c.b16 %v2501, %v2500
        %v2554 = vpack.c.b16 %v2503, %v2502
        %v2555 = vpack.c.b16 %v2505, %v2504
        %v2556 = vpack.c.b16 %v2507, %v2506
        %v2557 = vpack.c.b16 %v2509, %v2508
        %v2558 = vpack.c.b16 %v2511, %v2510
        %v2559 = vpack.c.b16 %v2513, %v2512
        %v2560 = vpack.c.b16 %v2515, %v2514
        %v2561 = vpack.c.b16 %v2517, %v2516
        %v2562 = vpack.c.b16 %v2519, %v2518
        %v2563 = vpack.c.b16 %v2521, %v2520
        %v2564 = vpack.c.b16 %v2523, %v2522
        %v2565 = vpack.c.b16 %v2525, %v2524
        %v2566 = vpack.c.b16 %v2527, %v2526
        %v2567 = vpack.c.b16 %v2529, %v2528
        %v2568 = vpack.c.b16 %v2531, %v2530
        %v2569 = vpack.c.b16 %v2533, %v2532
        %v2570 = vpack.c.b16 %v2535, %v2534
        %v2571 = vpack.c.b16 %v2537, %v2536
        %v2572 = vpack.c.b16 %v2539, %v2538
        %v2573 = vpack.c.b16 %v2541, %v2540
        %v2575 = vsel %vm1024, %v2339, 0
        %v2578 = vsel %vm1024, %v2542, 0
        %v2581 = vsel %vm1024, %v2543, 0
        %v2584 = vsel %vm1024, %v2544, 0
        %v2587 = vsel %vm1024, %v2545, 0
        %v2590 = vsel %vm1024, %v2546, 0
        %v2593 = vsel %vm1024, %v2547, 0
        %v2596 = vsel %vm1024, %v2548, 0
        %v2599 = vsel %vm1024, %v2549, 0
        %v2602 = vsel %vm1024, %v2550, 0
        %v2605 = vsel %vm1024, %v2551, 0
        %v2608 = vsel %vm1024, %v2552, 0
        %v2611 = vsel %vm1024, %v2553, 0
        %v2614 = vsel %vm1024, %v2554, 0
        %v2617 = vsel %vm1024, %v2555, 0
        %v2620 = vsel %vm1024, %v2556, 0
        %v2623 = vsel %vm1024, %v2557, 0
        %v2626 = vsel %vm1024, %v2558, 0
        %v2629 = vsel %vm1024, %v2559, 0
        %v2632 = vsel %vm1024, %v2560, 0
        %v2635 = vsel %vm1024, %v2561, 0
        %v2638 = vsel %vm1024, %v2562, 0
        %v2641 = vsel %vm1024, %v2563, 0
        %v2644 = vsel %vm1024, %v2564, 0
        %v2647 = vsel %vm1024, %v2565, 0
        %v2650 = vsel %vm1024, %v2566, 0
        %v2653 = vsel %vm1024, %v2567, 0
        %v2656 = vsel %vm1024, %v2568, 0
        %v2659 = vsel %vm1024, %v2569, 0
        %v2662 = vsel %vm1024, %v2570, 0
        %v2665 = vsel %vm1024, %v2571, 0
        %v2668 = vsel %vm1024, %v2572, 0
        %v2671 = vsel %vm1024, %v2573, 0
        %2673 = vmatpush.bf16.xpose.msra.mxu0 %v2599
        %2674 = vmatpush.bf16.xpose.msra.mxu0 %v2596
        %2675 = vmatpush.bf16.xpose.msra.mxu0 %v2593
        %2676 = vmatpush.bf16.xpose.msra.mxu0 %v2590
        %2677 = vmatpush.bf16.xpose.msra.mxu0 %v2587
        %2678 = vmatpush.bf16.xpose.msra.mxu0 %v2584
        %2679 = vmatpush.bf16.xpose.msra.mxu0 %v2581
        %2680 = vmatpush.bf16.xpose.msra.mxu0 %v2578
        %2681 = vmatmul.bf16.gmra.mxu0 %v2575
        %v2682 = vpop.f32.mrf.mxu0
        %v2683 = vadd.f32 %v2406, %v2682
        %v2684 = vpop.f32.mrf.mxu0
        %v2685 = vadd.f32 %v2406, %v2684
        %2686 = vdwg.mxu0
        %2687 = vmatpush.bf16.xpose.msra.mxu0 %v2623
        %2688 = vmatpush.bf16.xpose.msra.mxu0 %v2620
        %2689 = vmatpush.bf16.xpose.msra.mxu0 %v2617
        %2690 = vmatpush.bf16.xpose.msra.mxu0 %v2614
        %2691 = vmatpush.bf16.xpose.msra.mxu0 %v2611
        %2692 = vmatpush.bf16.xpose.msra.mxu0 %v2608
        %2693 = vmatpush.bf16.xpose.msra.mxu0 %v2605
        %2694 = vmatpush.bf16.xpose.msra.mxu0 %v2602
        %2695 = vmatmul.bf16.gmra.mxu0 %v2575
        %v2696 = vpop.f32.mrf.mxu0
        %v2697 = vadd.f32 %v2407, %v2696
        %v2698 = vpop.f32.mrf.mxu0
        %v2699 = vadd.f32 %v2407, %v2698
        %2700 = vdwg.mxu0
        %2701 = vmatpush.bf16.xpose.msra.mxu0 %v2647
        %2702 = vmatpush.bf16.xpose.msra.mxu0 %v2644
        %2703 = vmatpush.bf16.xpose.msra.mxu0 %v2641
        %2704 = vmatpush.bf16.xpose.msra.mxu0 %v2638
        %2705 = vmatpush.bf16.xpose.msra.mxu0 %v2635
        %2706 = vmatpush.bf16.xpose.msra.mxu0 %v2632
        %2707 = vmatpush.bf16.xpose.msra.mxu0 %v2629
        %2708 = vmatpush.bf16.xpose.msra.mxu0 %v2626
        %2709 = vmatmul.bf16.gmra.mxu0 %v2575
        %v2710 = vpop.f32.mrf.mxu0
        %v2711 = vadd.f32 %v2408, %v2710
        %v2712 = vpop.f32.mrf.mxu0
        %v2713 = vadd.f32 %v2408, %v2712
        %2714 = vdwg.mxu0
        %2715 = vmatpush.bf16.xpose.msra.mxu0 %v2671
        %2716 = vmatpush.bf16.xpose.msra.mxu0 %v2668
        %2717 = vmatpush.bf16.xpose.msra.mxu0 %v2665
        %2718 = vmatpush.bf16.xpose.msra.mxu0 %v2662
        %2719 = vmatpush.bf16.xpose.msra.mxu0 %v2659
        %2720 = vmatpush.bf16.xpose.msra.mxu0 %v2656
        %2721 = vmatpush.bf16.xpose.msra.mxu0 %v2653
        %2722 = vmatpush.bf16.xpose.msra.mxu0 %v2650
        %2723 = vmatmul.bf16.gmra.mxu0 %v2575
        %v2724 = vpop.f32.mrf.mxu0
        %v2725 = vadd.f32 %v2409, %v2724
        %v2726 = vpop.f32.mrf.mxu0
        %v2727 = vadd.f32 %v2409, %v2726
        %2728 = vdwg.mxu0
        %v2729 = vmax.f32 %v2683, 0.0
        %v2730 = vmax.f32 %v2697, 0.0
        %v2731 = vmax.f32 %v2711, 0.0
        %v2732 = vmax.f32 %v2725, 0.0
        %v2733 = vmax.f32 %v2685, 0.0
        %v2734 = vmax.f32 %v2699, 0.0
        %v2735 = vmax.f32 %v2713, 0.0
        %v2736 = vmax.f32 %v2727, 0.0
        %v2737 = vpack.c.bf16 %v2733, %v2729
        %v2738 = vpack.c.bf16 %v2734, %v2730
        %v2739 = vpack.c.bf16 %v2735, %v2731
        %v2740 = vpack.c.bf16 %v2736, %v2732
        %v2741 = vld [vmem:[%s913] sm:$0xff]
        %v2742 = vld [vmem:[%s913 + $0x8] sm:$0xff]
        %v2743 = vld [vmem:[%s913 + $0x10] sm:$0xff]
        %v2744 = vld [vmem:[%s913 + $0x18] sm:$0xff]
        %v2745 = vld [vmem:[%s913 + $0x20] sm:$0xff]
        %v2746 = vld [vmem:[%s913 + $0x28] sm:$0xff]
        %v2747 = vld [vmem:[%s913 + $0x30] sm:$0xff]
        %v2748 = vld [vmem:[%s913 + $0x38] sm:$0xff]
        %v2757 = vunpack.c.l.b16 %v2741
        %v2758 = vunpack.c.h.b16 %v2741
        %v2759 = vunpack.c.l.b16 %v2742
        %v2760 = vunpack.c.h.b16 %v2742
        %v2761 = vunpack.c.l.b16 %v2743
        %v2762 = vunpack.c.h.b16 %v2743
        %v2763 = vunpack.c.l.b16 %v2744
        %v2764 = vunpack.c.h.b16 %v2744
        %v2765 = vunpack.c.l.b16 %v2745
        %v2766 = vunpack.c.h.b16 %v2745
        %v2767 = vunpack.c.l.b16 %v2746
        %v2768 = vunpack.c.h.b16 %v2746
        %v2769 = vunpack.c.l.b16 %v2747
        %v2770 = vunpack.c.h.b16 %v2747
        %v2771 = vunpack.c.l.b16 %v2748
        %v2772 = vunpack.c.h.b16 %v2748
        %v2773 = vpack.c.b16 %v2761, %v2757
        %v2774 = vpack.c.b16 %v2762, %v2758
        %v2775 = vpack.c.b16 %v2763, %v2759
        %v2776 = vpack.c.b16 %v2764, %v2760
        %v2777 = vpack.c.b16 %v2769, %v2765
        %v2778 = vpack.c.b16 %v2770, %v2766
        %v2779 = vpack.c.b16 %v2771, %v2767
        %v2780 = vpack.c.b16 %v2772, %v2768
        %2789 = vmatpush.bf16.xpose.msra.mxu0 0
        %2790 = vmatpush.bf16.xpose.msra.mxu0 0
        %2791 = vmatpush.bf16.xpose.msra.mxu0 0
        %2792 = vmatpush.bf16.xpose.msra.mxu0 0
        %2793 = vmatpush.bf16.xpose.msra.mxu0 0
        %2794 = vmatpush.bf16.xpose.msra.mxu0 0
        %2795 = vmatpush.bf16.xpose.msra.mxu0 %v2777
        %2796 = vmatpush.bf16.xpose.msra.mxu0 %v2773
        %2797 = vmatmul.bf16.gmra.mxu0 %v2737
        %v2798 = vpop.f32.mrf.mxu0
        %v2799 = vadd.f32 0.0, %v2798
        %v2800 = vpop.f32.mrf.mxu0
        %v2801 = vadd.f32 0.0, %v2800
        %2802 = vdwg.mxu0
        %2803 = vmatpush.bf16.xpose.msra.mxu0 0
        %2804 = vmatpush.bf16.xpose.msra.mxu0 0
        %2805 = vmatpush.bf16.xpose.msra.mxu0 0
        %2806 = vmatpush.bf16.xpose.msra.mxu0 0
        %2807 = vmatpush.bf16.xpose.msra.mxu0 0
        %2808 = vmatpush.bf16.xpose.msra.mxu0 0
        %2809 = vmatpush.bf16.xpose.msra.mxu0 %v2778
        %2810 = vmatpush.bf16.xpose.msra.mxu0 %v2774
        %2811 = vmatmul.bf16.gmra.mxu0 %v2738
        %v2812 = vpop.f32.mrf.mxu0
        %v2813 = vadd.f32 %v2799, %v2812
        %v2814 = vpop.f32.mrf.mxu0
        %v2815 = vadd.f32 %v2801, %v2814
        %2816 = vdwg.mxu0
        %2817 = vmatpush.bf16.xpose.msra.mxu0 0
        %2818 = vmatpush.bf16.xpose.msra.mxu0 0
        %2819 = vmatpush.bf16.xpose.msra.mxu0 0
        %2820 = vmatpush.bf16.xpose.msra.mxu0 0
        %2821 = vmatpush.bf16.xpose.msra.mxu0 0
        %2822 = vmatpush.bf16.xpose.msra.mxu0 0
        %2823 = vmatpush.bf16.xpose.msra.mxu0 %v2779
        %2824 = vmatpush.bf16.xpose.msra.mxu0 %v2775
        %2825 = vmatmul.bf16.gmra.mxu0 %v2739
        %v2826 = vpop.f32.mrf.mxu0
        %v2827 = vadd.f32 %v2813, %v2826
        %v2828 = vpop.f32.mrf.mxu0
        %v2829 = vadd.f32 %v2815, %v2828
        %2830 = vdwg.mxu0
        %2831 = vmatpush.bf16.xpose.msra.mxu0 0
        %2832 = vmatpush.bf16.xpose.msra.mxu0 0
        %2833 = vmatpush.bf16.xpose.msra.mxu0 0
        %2834 = vmatpush.bf16.xpose.msra.mxu0 0
        %2835 = vmatpush.bf16.xpose.msra.mxu0 0
        %2836 = vmatpush.bf16.xpose.msra.mxu0 0
        %2837 = vmatpush.bf16.xpose.msra.mxu0 %v2780
        %2838 = vmatpush.bf16.xpose.msra.mxu0 %v2776
        %2839 = vmatmul.bf16.gmra.mxu0 %v2740
        %v2840 = vpop.f32.mrf.mxu0
        %v2841 = vadd.f32 %v2827, %v2840
        %v2842 = vpop.f32.mrf.mxu0
        %v2843 = vadd.f32 %v2829, %v2842
        %2844 = vdwg.mxu0
        %v2845 = vadd.f32 %v2275, %v2841
        %v2846 = vadd.f32 %v2276, %v2843
        %v2847 = vld [vmem:[%s916] sm:$0x1]
        %v2849 = vperm.slane %v2847, 0
        %v2851 = vadd.f32 %v2845, %v2849
        %v2852 = vadd.f32 %v2846, %v2849
        %2853 = vst.msk [vmem:[#allocation2] sm:$0xff] %vm1024, %v2851
        %2854 = vst.msk [vmem:[#allocation2 + $0x8] sm:$0xff] %vm1024, %v2852
        %p2855 = scmp.eq.s32.totalorder %s40, 1
        // Predicated region
        $region109: #{tpu_custom_call.1} parent=99 // pred_check
          %p2856 = pneg %p2855
        $region110: #{tpu_custom_call.1} parent=99 // pred_check_branch
          %2858 = sbr.rel (%p2856) target = $region112
        $region111: #{tpu_custom_call.1} parent=99 // pred_region
          %v2859 = vld [vmem:[%s18] sm:$0x1]
          %v2860 = vld [vmem:[%s19] sm:$0x1]
          %v2861 = vsel %vm1024, %v2851, 0.0
          %2862 = vadd.xlane.f32.xlu0 %v2861
          %v2863 = vpop.xlane.xlu0 %2862
          %v2864 = vsel %vm1024, %v2852, 0.0
          %2865 = vadd.xlane.f32.xlu0 %v2864
          %v2866 = vpop.xlane.xlu0 %2865
          %v2867 = vmul.f32 %v2863, %v1037
          %v2868 = vmul.f32 %v2866, %v1037
          %v2869 = vsub.f32 %v2851, %v2867
          %v2870 = vsub.f32 %v2852, %v2868
          %v2871 = vmul.f32 %v2869, %v2869
          %v2872 = vmul.f32 %v2870, %v2870
          %v2873 = vsel %vm1024, %v2871, 0.0
          %2874 = vadd.xlane.f32.xlu0 %v2873
          %v2875 = vpop.xlane.xlu0 %2874
          %v2876 = vsel %vm1024, %v2872, 0.0
          %2877 = vadd.xlane.f32.xlu0 %v2876
          %v2878 = vpop.xlane.xlu0 %2877
          %v2879 = vmul.f32 %v2875, %v1056
          %v2880 = vmul.f32 %v2878, %v1056
          %v2881 = vrsqrt.pop %v2879
          %v2882 = vmul.f32 %v2881, %v2879
          %v2883 = vmul.f32 %v2882, %v2881
          %v2884 = vmul.f32 0.5, %v2883
          %v2885 = vsub.f32 1.5, %v2884
          %v2886 = vmul.f32 %v2881, %v2885
          %v2887 = vmul.f32 %v2879, %v2886
          %vm2888 = vcmp.eq.f32.partialorder %v2879, inf
          %v2889 = vsel %vm2888, %v2879, %v2887
          %vm2890 = vcmp.eq.f32.partialorder %v2879, 0.0
          %v2891 = vand.u32 %v2879, 2147483648
          %v2892 = vsel %vm2890, %v2891, %v2889
          %v2893 = vrsqrt.pop %v2880
          %v2894 = vmul.f32 %v2893, %v2880
          %v2895 = vmul.f32 %v2894, %v2893
          %v2896 = vmul.f32 0.5, %v2895
          %v2897 = vsub.f32 1.5, %v2896
          %v2898 = vmul.f32 %v2893, %v2897
          %v2899 = vmul.f32 %v2880, %v2898
          %vm2900 = vcmp.eq.f32.partialorder %v2880, inf
          %v2901 = vsel %vm2900, %v2880, %v2899
          %vm2902 = vcmp.eq.f32.partialorder %v2880, 0.0
          %v2903 = vand.u32 %v2880, 2147483648
          %v2904 = vsel %vm2902, %v2903, %v2901
          %v2905 = vadd.f32 %v2892, 1e-06
          %v2906 = vadd.f32 %v2904, 1e-06
          %v2907 = vrcp.pop %v2905
          %v2908 = vrcp.pop %v2906
          %v2910 = vperm.slane %v2859, 0
          %v2912 = vmul.f32 %v2910, %v2869
          %v2913 = vmul.f32 %v2910, %v2870
          %v2914 = vmul.f32 %v2912, %v2907
          %v2915 = vmul.f32 %v2913, %v2908
          %v2917 = vperm.slane %v2860, 0
          %v2919 = vadd.f32 %v2914, %v2917
          %v2920 = vadd.f32 %v2915, %v2917
          %2921 = vst.msk [vmem:[%s847] sm:$0xff] %vm1024, %v2919
          %2922 = vst.msk [vmem:[%s847 + $0x8] sm:$0xff] %vm1024, %v2920
        $region112: #{tpu_custom_call.1} parent=99 // pred_fallthru
          _
        %s2923 = sand.u32 %s555, 1
        %s2924 = scalar_lea.sflag [#allocation7], %s2923
        %s2925 = sand.u32 %s555, 1
        %s2926 = smul.addr %s2925, 16
        %s2927 = scalar_lea.vmem [#allocation9], %s2926
        // Predicated region
        $region113: #{tpu_custom_call.1} parent=99 // pred_check
          %p2928 = pneg %p565
        $region114: #{tpu_custom_call.1} parent=99 // pred_check_branch
          %2930 = sbr.rel (%p2928) target = $region116
        $region115: #{tpu_custom_call.1} parent=99 // pred_region
          %s2931 = smul.u32 2, %s39
          %2933 = vsyncadd %s2924, 0
          %s2934 = smul.addr %s2931, 8
          %s2935 = scalar_lea.hbm %s20, %s2934
          %s2936 = sshll.u32 %s2927, 4
          %s2937 = int_to_ptr.vmem [resolvable:$true] %s2936
          %s2938 = sshll.u32 %s2935, 4
          %s2939 = int_to_ptr.hbm [resolvable:$true] %s2938
          %2944 = dma.vmem_to_hbm [thread:$0]  %s2937, 256, %s2939, %s2924, 128, 128, 8
        $region116: #{tpu_custom_call.1} parent=99 // pred_fallthru
          _
      $region100: #{tpu_custom_call.1} parent=5 // pred_fallthru
        _
      %p2945 = scmp.le.s32.totalorder 2, %s30
      // Predicated region
      $region117: #{tpu_custom_call.1} parent=5 // pred_check
        %p2946 = pneg %p2945
      $region118: #{tpu_custom_call.1} parent=5 // pred_check_branch
        %2948 = sbr.rel (%p2946) target = $region120
      $region119: #{tpu_custom_call.1} parent=5 // pred_region
        %s2949 = ssub.s32 %s30, 2
        // Predicated region
        $region121: #{tpu_custom_call.1} parent=119 // pred_check
          %p2950 = pneg %p571
        $region122: #{tpu_custom_call.1} parent=119 // pred_check_branch
          %2952 = sbr.rel (%p2950) target = $region124
        $region123: #{tpu_custom_call.1} parent=119 // pred_region
          %s2953 = sand.u32 %s556, 1
          %s2954 = scalar_lea.sflag [#allocation7], %s2953
          %s2955 = sand.u32 %s556, 1
          %s2956 = smul.addr %s2955, 16
          %s2957 = scalar_lea.vmem [#allocation9], %s2956
          %2959 = dma.done %s2954, 256
        $region124: #{tpu_custom_call.1} parent=119 // pred_fallthru
          _
      $region120: #{tpu_custom_call.1} parent=5 // pred_fallthru
        _
    $region6: #{tpu_custom_call.1} parent=1 // loop_footer
      %s34 = sadd.s32 1, %s30
    $region7: #{tpu_custom_call.1} parent=1 // loop_footer_branch
      %29 = sbr.rel target = $region3
    $region8: #{tpu_custom_call.1} parent=1 // loop_exit
      _
    %2960 = vsyncpa [#allocation7], 1
    %s2961 = scalar_lea.sflag [#allocation7], 1
    %2962 = vsyncpa %s2961, 1
    %2963 = vsyncpa [#allocation8], 1
    %s2964 = scalar_lea.sflag [#allocation8], 1
    %2965 = vsyncpa %s2964, 1

</llo_original>
